<compile_context>
chip_gen: v7x
topology: tpu7x:2x2x1
jax: 0.10.0
libtpu: 0.0.40
codegen_flags: <defaults>
</compile_context>

<pallas_src>
import functools
import math

import jax
import jax.numpy as jnp
from jax.experimental import pallas as pl
from jax.experimental.pallas import tpu as pltpu


# ----------------------------- Pallas kernel --------------------------------
def _conv_kernel(x_ref, w_ref, scale_ref, shift_ref, o_ref, lhs_ref, *,
                 kh, kw, stride, toh, ow, c_pad, apply_relu, n_oc):
    """One (batch-element, output-row-tile, OC-tile) grid cell.

    x_ref:     (HP, WP, C_pad)        bf16 padded image, resident across tiles
    w_ref:     (KH*KW*C_pad, TOC)     bf16 im2col-ordered weights
    scale_ref: (1, TOC)               f32  per-channel scale (BN fold; 1 if none)
    shift_ref: (1, TOC)               f32  per-channel shift (bias + BN fold)
    o_ref:     (TOH*OW, TOC)          f32  flat output tile (lane-dense)
    lhs_ref:   (TOH*OW, KH*KW*C_pad)  bf16 VMEM scratch (in-VMEM im2col)
    """
    t = pl.program_id(1)
    row0 = pl.multiple_of(t * (toh * stride), toh * stride)

    def fill_lhs():
        for ki in range(kh):
            for kj in range(kw):
                if stride == 1:
                    win = x_ref[pl.ds(row0 + ki, toh), pl.ds(kj, ow), :]
                else:
                    # TODO(synk): for stride>1 pre-decompose the padded input
                    # into stride**2 phase planes (space-to-depth) in the
                    # wrapper so these become unit-stride reads.
                    win = x_ref[pl.ds(row0 + ki, toh, stride=stride),
                                pl.ds(kj, ow, stride=stride), :]
                idx = ki * kw + kj
                lhs_ref[:, idx * c_pad:(idx + 1) * c_pad] = (
                    win.reshape(toh * ow, c_pad))

    if n_oc == 1:
        fill_lhs()
    else:
        # lhs depends only on (n, t); OC is the innermost grid axis, so only
        # the first OC block needs to (re)build the scratch.
        pl.when(pl.program_id(2) == 0)(fill_lhs)

    # Single large-K matmul (K = KH*KW*C_pad); f32 accumulation on the MXU.
    acc = jnp.dot(lhs_ref[...], w_ref[...], preferred_element_type=jnp.float32)
    y = acc * scale_ref[...] + shift_ref[...]
    if apply_relu:
        y = jnp.maximum(y, 0.0)
    o_ref[...] = y.astype(o_ref.dtype)


def _round_up(x, m):
    return ((x + m - 1) // m) * m


def _vmem_limit_bytes():
    # Generation-aware VMEM budget: ~3/4 of physical, capped at 96 MiB
    # (v5e/v6e: 128 MiB -> 96 MiB; v7x: 64 MiB -> 48 MiB).
    try:
        cap = int(pltpu.get_tpu_info().vmem_capacity_bytes)
    except Exception:
        cap = 64 * 1024 * 1024
    return min(cap * 3 // 4, 96 * 1024 * 1024)


@functools.partial(jax.jit, static_argnames=("stride", "padding", "apply_relu"))
def conv2d_pallas(x, weight, scale, shift, *, stride, padding, apply_relu):
    """x: (N, C, H, W) f32; weight: (OC, C, KH, KW); scale/shift: (OC,) f32."""
    N, C, H, W = x.shape
    OC, _, KH, KW = weight.shape
    OH = (H + 2 * padding - KH) // stride + 1
    OW = (W + 2 * padding - KW) // stride + 1

    OC_pad = _round_up(OC, 128)   # lane-dense stores / full MXU N dimension
    C_pad = _round_up(C, 8)       # tidy contraction/sublane size (zeros exact)

    # OC tile = one MXU N-tile (256 on v6e/v7x when it divides, else 128).
    TOC = 256 if OC_pad % 256 == 0 else 128
    n_oc = OC_pad // TOC

    # Output-row tile: target ~512 matmul rows, with TOH*OW a multiple of 8
    # (block-shape sublane constraint; avoids padded matmul rows).
    m = 8 // math.gcd(OW, 8)
    TOH = _round_up(max(1, min(OH, 512 // max(OW, 1))), m)
    n_t = -(-OH // TOH)
    OH_pad = n_t * TOH

    # NCHW -> NHWC once, spatial zero-padding, channel pad, single bf16 cast.
    # Bottom pad extended so every in-kernel window read for the tile-aligned
    # OH_pad output rows stays in bounds; extra rows are sliced off afterwards.
    rows_needed = (OH_pad - 1) * stride + KH
    pad_bot = max(0, rows_needed - (H + padding))
    x_nhwc = jnp.transpose(x, (0, 2, 3, 1))
    x_p = jnp.pad(x_nhwc, ((0, 0), (padding, pad_bot), (padding, padding),
                           (0, C_pad - C))).astype(jnp.bfloat16)
    HP = H + padding + pad_bot
    WP = W + 2 * padding

    # Weight: (OC, C, KH, KW) -> (KH*KW*C_pad, OC_pad) bf16; K ordering matches
    # the in-kernel lhs column ordering (tap-major, channel-minor).
    w = jnp.transpose(weight, (2, 3, 1, 0)).reshape(KH * KW, C, OC)
    w = jnp.pad(w, ((0, 0), (0, C_pad - C), (0, OC_pad - OC)))
    w = w.reshape(KH * KW * C_pad, OC_pad).astype(jnp.bfloat16)

    scale_p = jnp.pad(scale.astype(jnp.float32), (0, OC_pad - OC)).reshape(1, OC_pad)
    shift_p = jnp.pad(shift.astype(jnp.float32), (0, OC_pad - OC)).reshape(1, OC_pad)

    kernel = functools.partial(
        _conv_kernel, kh=KH, kw=KW, stride=stride, toh=TOH, ow=OW,
        c_pad=C_pad, apply_relu=apply_relu, n_oc=n_oc)

    # v7x: shard the batch axis across the two TensorCores (distinct images per
    # core); only fall back to sharding the row-tile axis when N == 1.
    if N >= 2:
        dim_sem = ("parallel", "arbitrary", "arbitrary")
    else:
        dim_sem = ("parallel", "parallel", "arbitrary")

    out = pl.pallas_call(
        kernel,
        out_shape=jax.ShapeDtypeStruct((N, OH_pad * OW, OC_pad), jnp.float32),
        grid_spec=pltpu.PrefetchScalarGridSpec(
            num_scalar_prefetch=0,
            grid=(N, n_t, n_oc),
            in_specs=[
                # Whole padded image of batch element n; the block index does
                # not depend on (t, oc), so it is fetched once and stays in
                # VMEM across all tiles of that element.
                # TODO(synk): H-tile with overlapping-row manual DMA when the
                # resident image exceeds the VMEM budget (large images on v7x).
                pl.BlockSpec((None, HP, WP, C_pad), lambda n, t, oc: (n, 0, 0, 0)),
                pl.BlockSpec((KH * KW * C_pad, TOC), lambda n, t, oc: (0, oc)),
                pl.BlockSpec((1, TOC), lambda n, t, oc: (0, oc)),
                pl.BlockSpec((1, TOC), lambda n, t, oc: (0, oc)),
            ],
            # Flat spatial output slab: lane-dense, no in-kernel (TOH, OW)
            # relayout; host reshapes to 4-D (metadata only).
            out_specs=pl.BlockSpec((None, TOH * OW, TOC),
                                   lambda n, t, oc: (n, t, oc)),
            scratch_shapes=[pltpu.VMEM((TOH * OW, KH * KW * C_pad), jnp.bfloat16)],
        ),
        compiler_params=pltpu.CompilerParams(
            dimension_semantics=dim_sem,
            vmem_limit_bytes=_vmem_limit_bytes()),
    )(x_p, w, scale_p, shift_p)

    # (N, OH_pad*OW, OC_pad) -> (N, OC, OH, OW); padded rows/channels dropped.
    out = out.reshape(N, OH_pad, OW, OC_pad)
    return jnp.transpose(out[:, :OH, :, :OC], (0, 3, 1, 2))


# ------------------------------ Module wrapper --------------------------------
class Conv2dPallas:
    """Mirrors models/pet.py:Conv2d (conv -> [BatchNorm2d eval] -> [ReLU])."""

    def __init__(self, in_channels, out_channels, kernel_size, padding,
                 stride=1, relu=True, bn=False, key=None):
        if key is None:
            key = jax.random.PRNGKey(0)
        self.ic, self.oc = in_channels, out_channels
        self.kh = self.kw = kernel_size
        self.padding, self.stride = padding, stride
        self.relu, self.use_bn = relu, bn

        # Deterministic init matching PyTorch nn.Conv2d defaults
        # (kaiming_uniform a=sqrt(5) => U(-b, b) with b = 1/sqrt(fan_in)).
        k_w, k_b = jax.random.split(key)
        fan_in = in_channels * self.kh * self.kw
        bound = 1.0 / math.sqrt(fan_in)
        self.weight = jax.random.uniform(
            k_w, (out_channels, in_channels, self.kh, self.kw),
            minval=-bound, maxval=bound, dtype=jnp.float32)
        self.bias = jax.random.uniform(
            k_b, (out_channels,), minval=-bound, maxval=bound, dtype=jnp.float32)

        if bn:
            # Freshly-initialized BatchNorm2d(eps=1e-3, affine=True), eval mode
            # (running stats): gamma=1, beta=0, mean=0, var=1.
            # TODO(synk): training-mode batch statistics are not implemented.
            self.bn_gamma = jnp.ones((out_channels,), jnp.float32)
            self.bn_beta = jnp.zeros((out_channels,), jnp.float32)
            self.bn_mean = jnp.zeros((out_channels,), jnp.float32)
            self.bn_var = jnp.ones((out_channels,), jnp.float32)
            self.bn_eps = 1e-3

    def __call__(self, x):
        if self.use_bn:
            s = self.bn_gamma / jnp.sqrt(self.bn_var + self.bn_eps)
            scale = s
            shift = (self.bias - self.bn_mean) * s + self.bn_beta
        else:
            scale = jnp.ones((self.oc,), jnp.float32)
            shift = self.bias
        return conv2d_pallas(x, self.weight, scale, shift,
                             stride=self.stride, padding=self.padding,
                             apply_relu=self.relu)


# --------------------------------- main ---------------------------------------
if __name__ == "__main__":
    key = jax.random.PRNGKey(0)
    k_in, k_param = jax.random.split(key)

    N, C, H, W = 2, 4, 16, 16
    OC, KSZ, PAD = 8, 3, 1

    x = jax.random.normal(k_in, (N, C, H, W), dtype=jnp.float32)

    # conv + bias + ReLU
    mod = Conv2dPallas(C, OC, KSZ, PAD, stride=1, relu=True, bn=False, key=k_param)
    y = jax.block_until_ready(mod(x))
    assert y.shape == (N, OC, H, W)

    # Matched-precision reference: the kernel feeds the MXU bf16 operands with
    # f32 accumulation, so compare against a conv on bf16-rounded operands.
    xq = x.astype(jnp.bfloat16).astype(jnp.float32)
    wq = mod.weight.astype(jnp.bfloat16).astype(jnp.float32)
    conv = jax.lax.conv_general_dilated(
        xq, wq, window_strides=(1, 1), padding=[(PAD, PAD), (PAD, PAD)],
        dimension_numbers=("NCHW", "OIHW", "NCHW"))
    ref = jnp.maximum(conv + mod.bias.reshape(1, OC, 1, 1), 0.0)
    err = float(jnp.max(jnp.abs(y - ref)))
    assert err < 5e-3, f"conv+relu mismatch: {err}"

    # conv + bias + BatchNorm(eval) without ReLU
    mod_bn = Conv2dPallas(C, OC, KSZ, PAD, stride=1, relu=False, bn=True, key=k_param)
    y_bn = jax.block_until_ready(mod_bn(x))
    s = (mod_bn.bn_gamma / jnp.sqrt(mod_bn.bn_var + mod_bn.bn_eps)).reshape(1, OC, 1, 1)
    ref_bn = (conv + mod_bn.bias.reshape(1, OC, 1, 1)
              - mod_bn.bn_mean.reshape(1, OC, 1, 1)) * s \
             + mod_bn.bn_beta.reshape(1, OC, 1, 1)
    err_bn = float(jnp.max(jnp.abs(y_bn - ref_bn)))
    assert err_bn < 5e-3, f"conv+bn mismatch: {err_bn}"

    print("KERNEL_OK")
</pallas_src>

<mosaic_0001>
module attributes {stable_mosaic.version = 11 : i64} {
  func.func @_conv_kernel(%arg0: i32, %arg1: i32, %arg2: i32, %arg3: memref<1x18x18x8xbf16, #tpu.memory_space<vmem>>, %arg4: memref<72x128xbf16, #tpu.memory_space<vmem>>, %arg5: memref<1x128xf32, #tpu.memory_space<vmem>>, %arg6: memref<1x128xf32, #tpu.memory_space<vmem>>, %arg7: memref<1x256x128xf32, #tpu.memory_space<vmem>>, %arg8: memref<256x72xbf16, #tpu.memory_space<vmem>>) attributes {dimension_semantics = [#tpu.dimension_semantics<parallel>, #tpu.dimension_semantics<arbitrary>, #tpu.dimension_semantics<arbitrary>], iteration_bounds = array<i64: 2, 1, 1>, scalar_prefetch = 0 : i64, scratch_operands = 1 : i64, tpu.core_type = #tpu.core_type<tc>, window_params = [{transform_indices = @transform_0, window_bounds = array<i64: 1, 18, 18, 8>}, {transform_indices = @transform_1, window_bounds = array<i64: 72, 128>}, {transform_indices = @transform_2, window_bounds = array<i64: 1, 128>}, {transform_indices = @transform_3, window_bounds = array<i64: 1, 128>}, {transform_indices = @transform_4, window_bounds = array<i64: 1, 256, 128>}]} {
    %c16_i32 = arith.constant 16 : i32
    %0 = arith.muli %arg1, %c16_i32 : i32
    %1 = tpu.assume_multiple %0, 16 : i32
    %c0_i32 = arith.constant 0 : i32
    %2 = arith.addi %1, %c0_i32 : i32
    %c0 = arith.constant 0 : index
    %3 = arith.index_cast %2 : i32 to index
    %c0_0 = arith.constant 0 : index
    %c0_1 = arith.constant 0 : index
    %4 = vector.load %arg3[%c0, %3, %c0_0, %c0_1] : memref<1x18x18x8xbf16, #tpu.memory_space<vmem>>, vector<1x16x16x8xbf16>
    %5 = vector.shape_cast %4 : vector<1x16x16x8xbf16> to vector<16x16x8xbf16>
    %6 = vector.shape_cast %5 : vector<16x16x8xbf16> to vector<256x8xbf16>
    %c0_2 = arith.constant 0 : index
    %c0_3 = arith.constant 0 : index
    %7 = vector.load %arg8[%c0_2, %c0_3] : memref<256x72xbf16, #tpu.memory_space<vmem>>, vector<256x8xbf16>
    tpu.vector_store %arg8[%c0_2, %c0_3], %6 {strides = array<i32>} : memref<256x72xbf16, #tpu.memory_space<vmem>>, vector<256x8xbf16>,
    %c0_i32_4 = arith.constant 0 : i32
    %8 = arith.addi %1, %c0_i32_4 : i32
    %c0_5 = arith.constant 0 : index
    %9 = arith.index_cast %8 : i32 to index
    %c1 = arith.constant 1 : index
    %c0_6 = arith.constant 0 : index
    %10 = vector.load %arg3[%c0_5, %9, %c1, %c0_6] : memref<1x18x18x8xbf16, #tpu.memory_space<vmem>>, vector<1x16x16x8xbf16>
    %11 = vector.shape_cast %10 : vector<1x16x16x8xbf16> to vector<16x16x8xbf16>
    %12 = vector.shape_cast %11 : vector<16x16x8xbf16> to vector<256x8xbf16>
    %c0_7 = arith.constant 0 : index
    %c8 = arith.constant 8 : index
    %13 = vector.load %arg8[%c0_7, %c8] : memref<256x72xbf16, #tpu.memory_space<vmem>>, vector<256x8xbf16>
    tpu.vector_store %arg8[%c0_7, %c8], %12 {strides = array<i32>} : memref<256x72xbf16, #tpu.memory_space<vmem>>, vector<256x8xbf16>,
    %c0_i32_8 = arith.constant 0 : i32
    %14 = arith.addi %1, %c0_i32_8 : i32
    %c0_9 = arith.constant 0 : index
    %15 = arith.index_cast %14 : i32 to index
    %c2 = arith.constant 2 : index
    %c0_10 = arith.constant 0 : index
    %16 = vector.load %arg3[%c0_9, %15, %c2, %c0_10] : memref<1x18x18x8xbf16, #tpu.memory_space<vmem>>, vector<1x16x16x8xbf16>
    %17 = vector.shape_cast %16 : vector<1x16x16x8xbf16> to vector<16x16x8xbf16>
    %18 = vector.shape_cast %17 : vector<16x16x8xbf16> to vector<256x8xbf16>
    %c0_11 = arith.constant 0 : index
    %c16 = arith.constant 16 : index
    %19 = vector.load %arg8[%c0_11, %c16] : memref<256x72xbf16, #tpu.memory_space<vmem>>, vector<256x8xbf16>
    tpu.vector_store %arg8[%c0_11, %c16], %18 {strides = array<i32>} : memref<256x72xbf16, #tpu.memory_space<vmem>>, vector<256x8xbf16>,
    %c1_i32 = arith.constant 1 : i32
    %20 = arith.addi %1, %c1_i32 : i32
    %c0_12 = arith.constant 0 : index
    %21 = arith.index_cast %20 : i32 to index
    %c0_13 = arith.constant 0 : index
    %c0_14 = arith.constant 0 : index
    %22 = vector.load %arg3[%c0_12, %21, %c0_13, %c0_14] : memref<1x18x18x8xbf16, #tpu.memory_space<vmem>>, vector<1x16x16x8xbf16>
    %23 = vector.shape_cast %22 : vector<1x16x16x8xbf16> to vector<16x16x8xbf16>
    %24 = vector.shape_cast %23 : vector<16x16x8xbf16> to vector<256x8xbf16>
    %c0_15 = arith.constant 0 : index
    %c24 = arith.constant 24 : index
    %25 = vector.load %arg8[%c0_15, %c24] : memref<256x72xbf16, #tpu.memory_space<vmem>>, vector<256x8xbf16>
    tpu.vector_store %arg8[%c0_15, %c24], %24 {strides = array<i32>} : memref<256x72xbf16, #tpu.memory_space<vmem>>, vector<256x8xbf16>,
    %c1_i32_16 = arith.constant 1 : i32
    %26 = arith.addi %1, %c1_i32_16 : i32
    %c0_17 = arith.constant 0 : index
    %27 = arith.index_cast %26 : i32 to index
    %c1_18 = arith.constant 1 : index
    %c0_19 = arith.constant 0 : index
    %28 = vector.load %arg3[%c0_17, %27, %c1_18, %c0_19] : memref<1x18x18x8xbf16, #tpu.memory_space<vmem>>, vector<1x16x16x8xbf16>
    %29 = vector.shape_cast %28 : vector<1x16x16x8xbf16> to vector<16x16x8xbf16>
    %30 = vector.shape_cast %29 : vector<16x16x8xbf16> to vector<256x8xbf16>
    %c0_20 = arith.constant 0 : index
    %c32 = arith.constant 32 : index
    %31 = vector.load %arg8[%c0_20, %c32] : memref<256x72xbf16, #tpu.memory_space<vmem>>, vector<256x8xbf16>
    tpu.vector_store %arg8[%c0_20, %c32], %30 {strides = array<i32>} : memref<256x72xbf16, #tpu.memory_space<vmem>>, vector<256x8xbf16>,
    %c1_i32_21 = arith.constant 1 : i32
    %32 = arith.addi %1, %c1_i32_21 : i32
    %c0_22 = arith.constant 0 : index
    %33 = arith.index_cast %32 : i32 to index
    %c2_23 = arith.constant 2 : index
    %c0_24 = arith.constant 0 : index
    %34 = vector.load %arg3[%c0_22, %33, %c2_23, %c0_24] : memref<1x18x18x8xbf16, #tpu.memory_space<vmem>>, vector<1x16x16x8xbf16>
    %35 = vector.shape_cast %34 : vector<1x16x16x8xbf16> to vector<16x16x8xbf16>
    %36 = vector.shape_cast %35 : vector<16x16x8xbf16> to vector<256x8xbf16>
    %c0_25 = arith.constant 0 : index
    %c40 = arith.constant 40 : index
    %37 = vector.load %arg8[%c0_25, %c40] : memref<256x72xbf16, #tpu.memory_space<vmem>>, vector<256x8xbf16>
    tpu.vector_store %arg8[%c0_25, %c40], %36 {strides = array<i32>} : memref<256x72xbf16, #tpu.memory_space<vmem>>, vector<256x8xbf16>,
    %c2_i32 = arith.constant 2 : i32
    %38 = arith.addi %1, %c2_i32 : i32
    %c0_26 = arith.constant 0 : index
    %39 = arith.index_cast %38 : i32 to index
    %c0_27 = arith.constant 0 : index
    %c0_28 = arith.constant 0 : index
    %40 = vector.load %arg3[%c0_26, %39, %c0_27, %c0_28] : memref<1x18x18x8xbf16, #tpu.memory_space<vmem>>, vector<1x16x16x8xbf16>
    %41 = vector.shape_cast %40 : vector<1x16x16x8xbf16> to vector<16x16x8xbf16>
    %42 = vector.shape_cast %41 : vector<16x16x8xbf16> to vector<256x8xbf16>
    %c0_29 = arith.constant 0 : index
    %c48 = arith.constant 48 : index
    %43 = vector.load %arg8[%c0_29, %c48] : memref<256x72xbf16, #tpu.memory_space<vmem>>, vector<256x8xbf16>
    tpu.vector_store %arg8[%c0_29, %c48], %42 {strides = array<i32>} : memref<256x72xbf16, #tpu.memory_space<vmem>>, vector<256x8xbf16>,
    %c2_i32_30 = arith.constant 2 : i32
    %44 = arith.addi %1, %c2_i32_30 : i32
    %c0_31 = arith.constant 0 : index
    %45 = arith.index_cast %44 : i32 to index
    %c1_32 = arith.constant 1 : index
    %c0_33 = arith.constant 0 : index
    %46 = vector.load %arg3[%c0_31, %45, %c1_32, %c0_33] : memref<1x18x18x8xbf16, #tpu.memory_space<vmem>>, vector<1x16x16x8xbf16>
    %47 = vector.shape_cast %46 : vector<1x16x16x8xbf16> to vector<16x16x8xbf16>
    %48 = vector.shape_cast %47 : vector<16x16x8xbf16> to vector<256x8xbf16>
    %c0_34 = arith.constant 0 : index
    %c56 = arith.constant 56 : index
    %49 = vector.load %arg8[%c0_34, %c56] : memref<256x72xbf16, #tpu.memory_space<vmem>>, vector<256x8xbf16>
    tpu.vector_store %arg8[%c0_34, %c56], %48 {strides = array<i32>} : memref<256x72xbf16, #tpu.memory_space<vmem>>, vector<256x8xbf16>,
    %c2_i32_35 = arith.constant 2 : i32
    %50 = arith.addi %1, %c2_i32_35 : i32
    %c0_36 = arith.constant 0 : index
    %51 = arith.index_cast %50 : i32 to index
    %c2_37 = arith.constant 2 : index
    %c0_38 = arith.constant 0 : index
    %52 = vector.load %arg3[%c0_36, %51, %c2_37, %c0_38] : memref<1x18x18x8xbf16, #tpu.memory_space<vmem>>, vector<1x16x16x8xbf16>
    %53 = vector.shape_cast %52 : vector<1x16x16x8xbf16> to vector<16x16x8xbf16>
    %54 = vector.shape_cast %53 : vector<16x16x8xbf16> to vector<256x8xbf16>
    %c0_39 = arith.constant 0 : index
    %c64 = arith.constant 64 : index
    %55 = vector.load %arg8[%c0_39, %c64] : memref<256x72xbf16, #tpu.memory_space<vmem>>, vector<256x8xbf16>
    tpu.vector_store %arg8[%c0_39, %c64], %54 {strides = array<i32>} : memref<256x72xbf16, #tpu.memory_space<vmem>>, vector<256x8xbf16>,
    %c0_40 = arith.constant 0 : index
    %c0_41 = arith.constant 0 : index
    %56 = vector.load %arg8[%c0_40, %c0_41] : memref<256x72xbf16, #tpu.memory_space<vmem>>, vector<256x72xbf16>
    %c0_42 = arith.constant 0 : index
    %c0_43 = arith.constant 0 : index
    %57 = vector.load %arg4[%c0_42, %c0_43] : memref<72x128xbf16, #tpu.memory_space<vmem>>, vector<72x128xbf16>
    %cst = arith.constant dense<0.000000e+00> : vector<256x128xf32>
    %58 = tpu.matmul %56, %57, %cst {dimension_numbers = #tpu.dot_dimension_numbers<[1], [0], [0], [1], [0, 0, 1, 1], [], []>} : vector<256x72xbf16>, vector<72x128xbf16>, vector<256x128xf32> -> vector<256x128xf32>
    %c0_44 = arith.constant 0 : index
    %c0_45 = arith.constant 0 : index
    %59 = vector.load %arg5[%c0_44, %c0_45] : memref<1x128xf32, #tpu.memory_space<vmem>>, vector<1x128xf32>
    %60 = vector.broadcast %59 : vector<1x128xf32> to vector<256x128xf32>
    %61 = arith.mulf %58, %60 : vector<256x128xf32>
    %c0_46 = arith.constant 0 : index
    %c0_47 = arith.constant 0 : index
    %62 = vector.load %arg6[%c0_46, %c0_47] : memref<1x128xf32, #tpu.memory_space<vmem>>, vector<1x128xf32>
    %63 = vector.broadcast %62 : vector<1x128xf32> to vector<256x128xf32>
    %64 = arith.addf %61, %63 : vector<256x128xf32>
    %cst_48 = arith.constant 0.000000e+00 : f32
    %65 = vector.broadcast %cst_48 : f32 to vector<256x128xf32>
    %66 = arith.maximumf %64, %65 : vector<256x128xf32>
    %c0_49 = arith.constant 0 : index
    %c0_50 = arith.constant 0 : index
    %c0_51 = arith.constant 0 : index
    %67 = vector.load %arg7[%c0_49, %c0_50, %c0_51] : memref<1x256x128xf32, #tpu.memory_space<vmem>>, vector<1x256x128xf32>
    %68 = vector.shape_cast %67 : vector<1x256x128xf32> to vector<256x128xf32>
    %69 = vector.shape_cast %66 : vector<256x128xf32> to vector<1x256x128xf32>
    tpu.vector_store %arg7[%c0_49, %c0_50, %c0_51], %69 {strides = array<i32>} : memref<1x256x128xf32, #tpu.memory_space<vmem>>, vector<1x256x128xf32>,
    return
  }
  func.func @transform_0(%arg0: i32, %arg1: i32, %arg2: i32) -> (i32, i32, i32, i32) {
    %c0_i32 = arith.constant 0 : i32
    %c0_i32_0 = arith.constant 0 : i32
    %c0_i32_1 = arith.constant 0 : i32
    %c0_i32_2 = arith.constant 0 : i32
    return %arg0, %c0_i32, %c0_i32_0, %c0_i32_1 : i32, i32, i32, i32
  }
  func.func @transform_1(%arg0: i32, %arg1: i32, %arg2: i32) -> (i32, i32) {
    %c0_i32 = arith.constant 0 : i32
    %c0_i32_0 = arith.constant 0 : i32
    return %c0_i32, %arg2 : i32, i32
  }
  func.func @transform_2(%arg0: i32, %arg1: i32, %arg2: i32) -> (i32, i32) {
    %c0_i32 = arith.constant 0 : i32
    %c0_i32_0 = arith.constant 0 : i32
    return %c0_i32, %arg2 : i32, i32
  }
  func.func @transform_3(%arg0: i32, %arg1: i32, %arg2: i32) -> (i32, i32) {
    %c0_i32 = arith.constant 0 : i32
    %c0_i32_0 = arith.constant 0 : i32
    return %c0_i32, %arg2 : i32, i32
  }
  func.func @transform_4(%arg0: i32, %arg1: i32, %arg2: i32) -> (i32, i32, i32) {
    %c0_i32 = arith.constant 0 : i32
    return %arg0, %arg1, %arg2 : i32, i32, i32
  }
}

</mosaic_0001>

<llo_original>
// kernel: conv2d_pallas.1
$region0: #{conv2d_pallas.1}
  #allocation0 [shape = 'u32[]', space=smem, size = 0x4, offset = 0x4, fixed_abs, tag = 'smem constant byte address 0x4 - core index']
  #allocation1 [shape = 'u32[144,128]{1,0:T(1,128)}', space=vmem, size = 0x12000, scoped, tag = 'internal scratch']
  #allocation2 [shape = 'bf16[256,72]{1,0:T(16,128)(2,1)}', space=vmem, size = 0x10000, scoped, tag = 'scratch operand']
  %s0 = inlined_call_operand.vmem [shape: bf16[2,18,18,8], index: 0, kind: input, shape index: {}]
  %s1 = inlined_call_operand.vmem [shape: bf16[72,128], index: 1, kind: input, shape index: {}]
  %s2 = inlined_call_operand.vmem [shape: f32[1,128], index: 2, kind: input, shape index: {}]
  %s3 = inlined_call_operand.vmem [shape: f32[1,128], index: 3, kind: input, shape index: {}]
  %s4 = inlined_call_operand.vmem [shape: f32[2,256,128], index: 4, kind: output, shape index: {}]
  %s5 = sld [smem:[#allocation0]]
  $region49: #{conv2d_pallas.1} parent=0
    _
  %s7 = ssub.s32 1, %s5
  %s8 = scalar_select 0, %s7, %s5
  loop: start=0, step=1, limit=4
  $region2: #{conv2d_pallas.1} parent=0 // loop_pre_header
    _
  $region3: #{conv2d_pallas.1} parent=0 // loop_header
    %s10 = sphi 0, %s14
    %p11 = scmp.ge.s32.totalorder %s10, 4
    %s17 = sphi 0, %s36
    %s18 = sphi 0, %s32
    %s19 = sphi 0, %s28
    %s20 = sphi 0, %s17
    %s21 = sphi 0, %s18
    %s22 = sphi 0, %s19
    %s23 = sphi 0, %s20
    %s24 = sphi 0, %s21
    %s25 = sphi 0, %s22
    %s39 = sphi 0, %s41
    %s42 = sphi 0, %s39
    %s43 = sphi 0, %s42
    %s59 = sphi 0, %s43
    %s65 = sphi 0, %s67
    %s68 = sphi 0, %s65
    %s69 = sphi 0, %s68
    %s85 = sphi 0, %s69
    %s91 = sphi 0, %s93
    %s94 = sphi 0, %s91
    %s95 = sphi 0, %s94
    %s111 = sphi 0, %s95
    %s117 = sphi 0, %s119
    %s120 = sphi 0, %s117
    %s121 = sphi 0, %s120
    %s137 = sphi 0, %s121
    %s147 = sphi 0, %s149
    %s150 = sphi 0, %s147
    %s151 = sphi 0, %s150
    %s167 = sphi 0, %s151
  $region4: #{conv2d_pallas.1} parent=0 // loop_header_branch
    %13 = sbr.rel (%p11) target = $region8
  $region5: #{conv2d_pallas.1} parent=0 // loop_body
    %s15 = ssub.s32 %s10, 1
    %s16 = ssub.s32 %s10, 2
    %s26 = sadd.s32 1, %s19
    %p27 = scmp.ge.s32.totalorder %s26, 1
    %s28 = scalar_select %p27, 0, %s26
    %s29 = sadd.s32 1, %s18
    %s30 = scalar_select %p27, %s29, %s18
    %p31 = scmp.ge.s32.totalorder %s30, 1
    %s32 = scalar_select %p31, 0, %s30
    %s33 = sadd.s32 1, %s17
    %s34 = scalar_select %p31, %s33, %s17
    %p35 = scmp.ge.s32.totalorder %s34, 2
    %s36 = scalar_select %p35, 0, %s34
    %s37 = ssub.s32 %s17, %s36
    %p38 = scmp.eq.s32.totalorder %s37, 0
    %s40 = sadd.s32 %s39, 1
    %s41 = scalar_select %p38, %s39, %s40
    %p44 = pneg %p38
    %p45 = scmp.eq.s32.totalorder %s10, 1
    %p46 = por %p44, %p45
    %p47 = scmp.ne.s32.totalorder %s39, %s42
    %p48 = scmp.eq.s32.totalorder %s10, 0
    %p49 = por %p47, %p48
    %p50 = scmp.ne.s32.totalorder %s39, %s42
    %p51 = scmp.eq.s32.totalorder %s15, 1
    %p52 = por %p50, %p51
    %p53 = scmp.ne.s32.totalorder %s42, %s43
    %p54 = scmp.eq.s32.totalorder %s15, 0
    %p55 = por %p53, %p54
    %p56 = scmp.ne.s32.totalorder %s42, %s43
    %p57 = scmp.eq.s32.totalorder %s16, 1
    %p58 = por %p56, %p57
    %p60 = scmp.ne.s32.totalorder %s43, %s59
    %p61 = scmp.eq.s32.totalorder %s16, 0
    %p62 = por %p60, %p61
    %s63 = ssub.s32 %s19, %s28
    %p64 = scmp.eq.s32.totalorder %s63, 0
    %s66 = sadd.s32 %s65, 1
    %s67 = scalar_select %p64, %s65, %s66
    %p70 = pneg %p64
    %p71 = scmp.eq.s32.totalorder %s10, 1
    %p72 = por %p70, %p71
    %p73 = scmp.ne.s32.totalorder %s65, %s68
    %p74 = scmp.eq.s32.totalorder %s10, 0
    %p75 = por %p73, %p74
    %p76 = scmp.ne.s32.totalorder %s65, %s68
    %p77 = scmp.eq.s32.totalorder %s15, 1
    %p78 = por %p76, %p77
    %p79 = scmp.ne.s32.totalorder %s68, %s69
    %p80 = scmp.eq.s32.totalorder %s15, 0
    %p81 = por %p79, %p80
    %p82 = scmp.ne.s32.totalorder %s68, %s69
    %p83 = scmp.eq.s32.totalorder %s16, 1
    %p84 = por %p82, %p83
    %p86 = scmp.ne.s32.totalorder %s69, %s85
    %p87 = scmp.eq.s32.totalorder %s16, 0
    %p88 = por %p86, %p87
    %s89 = ssub.s32 %s19, %s28
    %p90 = scmp.eq.s32.totalorder %s89, 0
    %s92 = sadd.s32 %s91, 1
    %s93 = scalar_select %p90, %s91, %s92
    %p96 = pneg %p90
    %p97 = scmp.eq.s32.totalorder %s10, 1
    %p98 = por %p96, %p97
    %p99 = scmp.ne.s32.totalorder %s91, %s94
    %p100 = scmp.eq.s32.totalorder %s10, 0
    %p101 = por %p99, %p100
    %p102 = scmp.ne.s32.totalorder %s91, %s94
    %p103 = scmp.eq.s32.totalorder %s15, 1
    %p104 = por %p102, %p103
    %p105 = scmp.ne.s32.totalorder %s94, %s95
    %p106 = scmp.eq.s32.totalorder %s15, 0
    %p107 = por %p105, %p106
    %p108 = scmp.ne.s32.totalorder %s94, %s95
    %p109 = scmp.eq.s32.totalorder %s16, 1
    %p110 = por %p108, %p109
    %p112 = scmp.ne.s32.totalorder %s95, %s111
    %p113 = scmp.eq.s32.totalorder %s16, 0
    %p114 = por %p112, %p113
    %s115 = ssub.s32 %s19, %s28
    %p116 = scmp.eq.s32.totalorder %s115, 0
    %s118 = sadd.s32 %s117, 1
    %s119 = scalar_select %p116, %s117, %s118
    %p122 = pneg %p116
    %p123 = scmp.eq.s32.totalorder %s10, 1
    %p124 = por %p122, %p123
    %p125 = scmp.ne.s32.totalorder %s117, %s120
    %p126 = scmp.eq.s32.totalorder %s10, 0
    %p127 = por %p125, %p126
    %p128 = scmp.ne.s32.totalorder %s117, %s120
    %p129 = scmp.eq.s32.totalorder %s15, 1
    %p130 = por %p128, %p129
    %p131 = scmp.ne.s32.totalorder %s120, %s121
    %p132 = scmp.eq.s32.totalorder %s15, 0
    %p133 = por %p131, %p132
    %p134 = scmp.ne.s32.totalorder %s120, %s121
    %p135 = scmp.eq.s32.totalorder %s16, 1
    %p136 = por %p134, %p135
    %p138 = scmp.ne.s32.totalorder %s121, %s137
    %p139 = scmp.eq.s32.totalorder %s16, 0
    %p140 = por %p138, %p139
    %s141 = ssub.s32 %s17, %s36
    %s142 = ssub.s32 %s18, %s32
    %s143 = sor.u32 %s141, %s142
    %s144 = ssub.s32 %s19, %s28
    %s145 = sor.u32 %s143, %s144
    %p146 = scmp.eq.s32.totalorder %s145, 0
    %s148 = sadd.s32 %s147, 1
    %s149 = scalar_select %p146, %s147, %s148
    %p152 = pneg %p146
    %p153 = scmp.eq.s32.totalorder %s10, 1
    %p154 = por %p152, %p153
    %p155 = scmp.ne.s32.totalorder %s147, %s150
    %p156 = scmp.eq.s32.totalorder %s10, 0
    %p157 = por %p155, %p156
    %p158 = scmp.ne.s32.totalorder %s147, %s150
    %p159 = scmp.eq.s32.totalorder %s15, 1
    %p160 = por %p158, %p159
    %p161 = scmp.ne.s32.totalorder %s150, %s151
    %p162 = scmp.eq.s32.totalorder %s15, 0
    %p163 = por %p161, %p162
    %p164 = scmp.ne.s32.totalorder %s150, %s151
    %p165 = scmp.eq.s32.totalorder %s16, 1
    %p166 = por %p164, %p165
    %p168 = scmp.ne.s32.totalorder %s151, %s167
    %p169 = scmp.eq.s32.totalorder %s16, 0
    %p170 = por %p168, %p169
    %p171 = scmp.le.s32.totalorder 1, %s10
    %p172 = scmp.lt.s32.totalorder %s10, 3
    %p173 = pnand %p171, %p172
    %p174 = pneg %p173
    // Predicated region
    $region9: #{conv2d_pallas.1} parent=5 // pred_check
      _
    $region10: #{conv2d_pallas.1} parent=5 // pred_check_branch
      %176 = sbr.rel (%p173) target = $region12
    $region11: #{conv2d_pallas.1} parent=5 // pred_region
      %s177 = ssub.s32 %s10, 1
      // Predicated region
      $region13: #{conv2d_pallas.1} parent=11 // pred_check
        %p178 = pneg %p81
      $region14: #{conv2d_pallas.1} parent=11 // pred_check_branch
        %180 = sbr.rel (%p178) target = $region16
      $region15: #{conv2d_pallas.1} parent=11 // pred_region
        %p181 = scmp.lt.s32.totalorder %s22, 0
        %s182 = scalar_select %p181, %s22, 0
        %s183 = smul.addr %s182, 4
        %s184 = scalar_lea.vmem %s1, %s183
      $region16: #{conv2d_pallas.1} parent=11 // pred_fallthru
        _
      // Predicated region
      $region17: #{conv2d_pallas.1} parent=11 // pred_check
        %p185 = pneg %p107
      $region18: #{conv2d_pallas.1} parent=11 // pred_check_branch
        %187 = sbr.rel (%p185) target = $region20
      $region19: #{conv2d_pallas.1} parent=11 // pred_region
        %p188 = scmp.lt.s32.totalorder %s22, 0
        %s189 = scalar_select %p188, %s22, 0
        %s190 = scalar_lea.vmem %s2, %s189
      $region20: #{conv2d_pallas.1} parent=11 // pred_fallthru
        _
      // Predicated region
      $region21: #{conv2d_pallas.1} parent=11 // pred_check
        %p191 = pneg %p133
      $region22: #{conv2d_pallas.1} parent=11 // pred_check_branch
        %193 = sbr.rel (%p191) target = $region24
      $region23: #{conv2d_pallas.1} parent=11 // pred_region
        %p194 = scmp.lt.s32.totalorder %s22, 0
        %s195 = scalar_select %p194, %s22, 0
        %s196 = scalar_lea.vmem %s3, %s195
      $region24: #{conv2d_pallas.1} parent=11 // pred_fallthru
        _
    $region12: #{conv2d_pallas.1} parent=5 // pred_fallthru
      _
    %p197 = scmp.lt.s32.totalorder %s10, 2
    // Predicated region
    $region25: #{conv2d_pallas.1} parent=5 // pred_check
      %p198 = pneg %p197
    $region26: #{conv2d_pallas.1} parent=5 // pred_check_branch
      %200 = sbr.rel (%p198) target = $region28
    $region27: #{conv2d_pallas.1} parent=5 // pred_region
      // Predicated region
      $region29: #{conv2d_pallas.1} parent=27 // pred_check
        %p201 = pneg %p49
      $region30: #{conv2d_pallas.1} parent=27 // pred_check_branch
        %203 = sbr.rel (%p201) target = $region32
      $region31: #{conv2d_pallas.1} parent=27 // pred_region
        %p204 = scmp.lt.s32.totalorder %s17, 1
        %s205 = scalar_select %p204, %s17, 1
        %s206 = smul.addr %s205, 54
        %s207 = smul.addr %s206, 4
        %s208 = scalar_lea.vmem %s0, %s207
      $region32: #{conv2d_pallas.1} parent=27 // pred_fallthru
        _
    $region28: #{conv2d_pallas.1} parent=5 // pred_fallthru
      _
    %p209 = scmp.le.s32.totalorder 1, %s10
    %p210 = scmp.lt.s32.totalorder %s10, 3
    %p211 = pnand %p209, %p210
    %p212 = pneg %p211
    // Predicated region
    $region33: #{conv2d_pallas.1} parent=5 // pred_check
      _
    $region34: #{conv2d_pallas.1} parent=5 // pred_check_branch
      %214 = sbr.rel (%p211) target = $region36
    $region35: #{conv2d_pallas.1} parent=5 // pred_region
      %s215 = ssub.s32 %s10, 1
      %p216 = scmp.lt.s32.totalorder %s20, 1
      %s217 = scalar_select %p216, %s20, 1
      %s218 = smul.addr %s217, 54
      %s219 = smul.addr %s218, 4
      %s220 = scalar_lea.vmem %s0, %s219
      %p221 = pneg %p55
      %p222 = pneg %p52
      %p223 = scmp.lt.s32.totalorder %s22, 0
      %s224 = scalar_select %p223, %s22, 0
      %s225 = smul.addr %s224, 4
      %s226 = scalar_lea.vmem %s1, %s225
      %p227 = pneg %p81
      %p228 = pneg %p78
      %p229 = scmp.lt.s32.totalorder %s22, 0
      %s230 = scalar_select %p229, %s22, 0
      %s231 = scalar_lea.vmem %s2, %s230
      %p232 = pneg %p107
      %p233 = pneg %p104
      %p234 = scmp.lt.s32.totalorder %s22, 0
      %s235 = scalar_select %p234, %s22, 0
      %s236 = scalar_lea.vmem %s3, %s235
      %p237 = pneg %p133
      %p238 = pneg %p130
      %p239 = pneg %p163
      %p240 = pneg %p160
      %s241 = smul.u32 32, %s21
      %p242 = scmp.lt.s32.totalorder %s20, 1
      %s243 = scalar_select %p242, %s20, 1
      %p244 = scmp.lt.s32.totalorder %s241, 31
      %s245 = scalar_select %p244, %s241, 31
      %p246 = scmp.lt.s32.totalorder %s22, 0
      %s247 = scalar_select %p246, %s22, 0
      %s248 = sadd.s32 %s247, %s245
      %s249 = smul.addr %s243, 32
      %s250 = sadd.s32 %s248, %s249
      %s251 = smul.addr %s250, 8
      %s252 = scalar_lea.vmem %s4, %s251
      %p253 = scmp.lt.s32.totalorder %s20, 1
      %s254 = scalar_select %p253, %s20, 1
      %s255 = smul.addr %s254, 54
      %s256 = smul.addr %s255, 4
      %s257 = scalar_lea.vmem %s0, %s256
      %p258 = scmp.lt.s32.totalorder %s22, 0
      %s259 = scalar_select %p258, %s22, 0
      %s260 = smul.addr %s259, 4
      %s261 = scalar_lea.vmem %s1, %s260
      %p262 = scmp.lt.s32.totalorder %s22, 0
      %s263 = scalar_select %p262, %s22, 0
      %s264 = scalar_lea.vmem %s2, %s263
      %p265 = scmp.lt.s32.totalorder %s22, 0
      %s266 = scalar_select %p265, %s22, 0
      %s267 = scalar_lea.vmem %s3, %s266
      %s268 = smul.u32 32, %s21
      %p269 = scmp.lt.s32.totalorder %s20, 1
      %s270 = scalar_select %p269, %s20, 1
      %p271 = scmp.lt.s32.totalorder %s268, 31
      %s272 = scalar_select %p271, %s268, 31
      %p273 = scmp.lt.s32.totalorder %s22, 0
      %s274 = scalar_select %p273, %s22, 0
      %s275 = sadd.s32 %s274, %s272
      %s276 = smul.addr %s270, 32
      %s277 = sadd.s32 %s275, %s276
      %s278 = smul.addr %s277, 8
      %s279 = scalar_lea.vmem %s4, %s278
      %s280 = smul.u32 32, %s21
      %s282 = smul.u32 %s21, 16
      %s283 = smul.u32 %s282, 3
      %s284 = smul.addr %s283, 4
      %s285 = scalar_lea.vmem %s257, %s284
      %v286 = vld [vmem:[%s285] sm:$0xf]
      %v287 = vld [vmem:[%s285 + $0x4] sm:$0xf]
      %v288 = vld [vmem:[%s285 + $0xc] sm:$0xf]
      %v289 = vld [vmem:[%s285 + $0x10] sm:$0xf]
      %v290 = vld [vmem:[%s285 + $0x18] sm:$0xf]
      %v291 = vld [vmem:[%s285 + $0x1c] sm:$0xf]
      %v292 = vld [vmem:[%s285 + $0x24] sm:$0xf]
      %v293 = vld [vmem:[%s285 + $0x28] sm:$0xf]
      %v294 = vld [vmem:[%s285 + $0x30] sm:$0xf]
      %v295 = vld [vmem:[%s285 + $0x34] sm:$0xf]
      %v296 = vld [vmem:[%s285 + $0x3c] sm:$0xf]
      %v297 = vld [vmem:[%s285 + $0x40] sm:$0xf]
      %v298 = vld [vmem:[%s285 + $0x48] sm:$0xf]
      %v299 = vld [vmem:[%s285 + $0x4c] sm:$0xf]
      %v300 = vld [vmem:[%s285 + $0x54] sm:$0xf]
      %v301 = vld [vmem:[%s285 + $0x58] sm:$0xf]
      %v302 = vld [vmem:[%s285 + $0x60] sm:$0xf]
      %v303 = vld [vmem:[%s285 + $0x64] sm:$0xf]
      %v304 = vld [vmem:[%s285 + $0x6c] sm:$0xf]
      %v305 = vld [vmem:[%s285 + $0x70] sm:$0xf]
      %v306 = vld [vmem:[%s285 + $0x78] sm:$0xf]
      %v307 = vld [vmem:[%s285 + $0x7c] sm:$0xf]
      %v308 = vld [vmem:[%s285 + $0x84] sm:$0xf]
      %v309 = vld [vmem:[%s285 + $0x88] sm:$0xf]
      %v310 = vld [vmem:[%s285 + $0x90] sm:$0xf]
      %v311 = vld [vmem:[%s285 + $0x94] sm:$0xf]
      %v312 = vld [vmem:[%s285 + $0x9c] sm:$0xf]
      %v313 = vld [vmem:[%s285 + $0xa0] sm:$0xf]
      %v314 = vld [vmem:[%s285 + $0xa8] sm:$0xf]
      %v315 = vld [vmem:[%s285 + $0xac] sm:$0xf]
      %v316 = vld [vmem:[%s285 + $0xb4] sm:$0xf]
      %v317 = vld [vmem:[%s285 + $0xb8] sm:$0xf]
      %v350 = vunpack.c.l.b16 %v286
      %v351 = vunpack.c.l.b16 %v287
      %v352 = vunpack.c.l.b16 %v288
      %v353 = vunpack.c.l.b16 %v289
      %v354 = vunpack.c.l.b16 %v290
      %v355 = vunpack.c.l.b16 %v291
      %v356 = vunpack.c.l.b16 %v292
      %v357 = vunpack.c.l.b16 %v293
      %v358 = vunpack.c.l.b16 %v294
      %v359 = vunpack.c.l.b16 %v295
      %v360 = vunpack.c.l.b16 %v296
      %v361 = vunpack.c.l.b16 %v297
      %v362 = vunpack.c.l.b16 %v298
      %v363 = vunpack.c.l.b16 %v299
      %v364 = vunpack.c.l.b16 %v300
      %v365 = vunpack.c.l.b16 %v301
      %v366 = vunpack.c.l.b16 %v302
      %v367 = vunpack.c.l.b16 %v303
      %v368 = vunpack.c.l.b16 %v304
      %v369 = vunpack.c.l.b16 %v305
      %v370 = vunpack.c.l.b16 %v306
      %v371 = vunpack.c.l.b16 %v307
      %v372 = vunpack.c.l.b16 %v308
      %v373 = vunpack.c.l.b16 %v309
      %v374 = vunpack.c.l.b16 %v310
      %v375 = vunpack.c.l.b16 %v311
      %v376 = vunpack.c.l.b16 %v312
      %v377 = vunpack.c.l.b16 %v313
      %v378 = vunpack.c.l.b16 %v314
      %v379 = vunpack.c.l.b16 %v315
      %v380 = vunpack.c.l.b16 %v316
      %v381 = vunpack.c.l.b16 %v317
      %v382 = vpack.c.b16 %v351, %v350
      %v383 = vpack.c.b16 %v353, %v352
      %v384 = vpack.c.b16 %v355, %v354
      %v385 = vpack.c.b16 %v357, %v356
      %v386 = vpack.c.b16 %v359, %v358
      %v387 = vpack.c.b16 %v361, %v360
      %v388 = vpack.c.b16 %v363, %v362
      %v389 = vpack.c.b16 %v365, %v364
      %v390 = vpack.c.b16 %v367, %v366
      %v391 = vpack.c.b16 %v369, %v368
      %v392 = vpack.c.b16 %v371, %v370
      %v393 = vpack.c.b16 %v373, %v372
      %v394 = vpack.c.b16 %v375, %v374
      %v395 = vpack.c.b16 %v377, %v376
      %v396 = vpack.c.b16 %v379, %v378
      %v397 = vpack.c.b16 %v381, %v380
      %vm414 = vcmask 64512
      %415 = vst.msk [vmem:[#allocation2] sm:$0xff] %vm414, %v382
      %416 = vst.msk [vmem:[#allocation2 + $0x8] sm:$0xff] %vm414, %v383
      %417 = vst.msk [vmem:[#allocation2 + $0x10] sm:$0xff] %vm414, %v384
      %418 = vst.msk [vmem:[#allocation2 + $0x18] sm:$0xff] %vm414, %v385
      %419 = vst.msk [vmem:[#allocation2 + $0x20] sm:$0xff] %vm414, %v386
      %420 = vst.msk [vmem:[#allocation2 + $0x28] sm:$0xff] %vm414, %v387
      %421 = vst.msk [vmem:[#allocation2 + $0x30] sm:$0xff] %vm414, %v388
      %422 = vst.msk [vmem:[#allocation2 + $0x38] sm:$0xff] %vm414, %v389
      %423 = vst.msk [vmem:[#allocation2 + $0x40] sm:$0xff] %vm414, %v390
      %424 = vst.msk [vmem:[#allocation2 + $0x48] sm:$0xff] %vm414, %v391
      %425 = vst.msk [vmem:[#allocation2 + $0x50] sm:$0xff] %vm414, %v392
      %426 = vst.msk [vmem:[#allocation2 + $0x58] sm:$0xff] %vm414, %v393
      %427 = vst.msk [vmem:[#allocation2 + $0x60] sm:$0xff] %vm414, %v394
      %428 = vst.msk [vmem:[#allocation2 + $0x68] sm:$0xff] %vm414, %v395
      %429 = vst.msk [vmem:[#allocation2 + $0x70] sm:$0xff] %vm414, %v396
      %430 = vst.msk [vmem:[#allocation2 + $0x78] sm:$0xff] %vm414, %v397
      %v431 = vld [vmem:[%s285] sm:$0xf]
      %v432 = vld [vmem:[%s285 + $0x4] sm:$0xf]
      %v433 = vld [vmem:[%s285 + $0x8] sm:$0x1]
      %v434 = vld [vmem:[%s285 + $0xc] sm:$0xf]
      %v435 = vld [vmem:[%s285 + $0x10] sm:$0xf]
      %v436 = vld [vmem:[%s285 + $0x14] sm:$0x1]
      %v437 = vld [vmem:[%s285 + $0x18] sm:$0xf]
      %v438 = vld [vmem:[%s285 + $0x1c] sm:$0xf]
      %v439 = vld [vmem:[%s285 + $0x20] sm:$0x1]
      %v440 = vld [vmem:[%s285 + $0x24] sm:$0xf]
      %v441 = vld [vmem:[%s285 + $0x28] sm:$0xf]
      %v442 = vld [vmem:[%s285 + $0x2c] sm:$0x1]
      %v443 = vld [vmem:[%s285 + $0x30] sm:$0xf]
      %v444 = vld [vmem:[%s285 + $0x34] sm:$0xf]
      %v445 = vld [vmem:[%s285 + $0x38] sm:$0x1]
      %v446 = vld [vmem:[%s285 + $0x3c] sm:$0xf]
      %v447 = vld [vmem:[%s285 + $0x40] sm:$0xf]
      %v448 = vld [vmem:[%s285 + $0x44] sm:$0x1]
      %v449 = vld [vmem:[%s285 + $0x48] sm:$0xf]
      %v450 = vld [vmem:[%s285 + $0x4c] sm:$0xf]
      %v451 = vld [vmem:[%s285 + $0x50] sm:$0x1]
      %v452 = vld [vmem:[%s285 + $0x54] sm:$0xf]
      %v453 = vld [vmem:[%s285 + $0x58] sm:$0xf]
      %v454 = vld [vmem:[%s285 + $0x5c] sm:$0x1]
      %v455 = vld [vmem:[%s285 + $0x60] sm:$0xf]
      %v456 = vld [vmem:[%s285 + $0x64] sm:$0xf]
      %v457 = vld [vmem:[%s285 + $0x68] sm:$0x1]
      %v458 = vld [vmem:[%s285 + $0x6c] sm:$0xf]
      %v459 = vld [vmem:[%s285 + $0x70] sm:$0xf]
      %v460 = vld [vmem:[%s285 + $0x74] sm:$0x1]
      %v461 = vld [vmem:[%s285 + $0x78] sm:$0xf]
      %v462 = vld [vmem:[%s285 + $0x7c] sm:$0xf]
      %v463 = vld [vmem:[%s285 + $0x80] sm:$0x1]
      %v464 = vld [vmem:[%s285 + $0x84] sm:$0xf]
      %v465 = vld [vmem:[%s285 + $0x88] sm:$0xf]
      %v466 = vld [vmem:[%s285 + $0x8c] sm:$0x1]
      %v467 = vld [vmem:[%s285 + $0x90] sm:$0xf]
      %v468 = vld [vmem:[%s285 + $0x94] sm:$0xf]
      %v469 = vld [vmem:[%s285 + $0x98] sm:$0x1]
      %v470 = vld [vmem:[%s285 + $0x9c] sm:$0xf]
      %v471 = vld [vmem:[%s285 + $0xa0] sm:$0xf]
      %v472 = vld [vmem:[%s285 + $0xa4] sm:$0x1]
      %v473 = vld [vmem:[%s285 + $0xa8] sm:$0xf]
      %v474 = vld [vmem:[%s285 + $0xac] sm:$0xf]
      %v475 = vld [vmem:[%s285 + $0xb0] sm:$0x1]
      %v476 = vld [vmem:[%s285 + $0xb4] sm:$0xf]
      %v477 = vld [vmem:[%s285 + $0xb8] sm:$0xf]
      %v478 = vld [vmem:[%s285 + $0xbc] sm:$0x1]
      %vm479 = vsmask.f32 3328
      %vm480 = vsmask.f32 7440
      %vm481 = vmor %vm479, %vm480
      %v483 = vshrl.u32 %v431, 16
      %v485 = vrot.slane %v483, 4
      %v486 = vshll.u32 %v431, 16
      %v488 = vrot.slane %v486, 5
      %v489 = vor.u32 %v485, %v488
      %v490 = vrot.slane %v489, 4
      %v492 = vshll.u32 %v432, 16
      %v494 = vrot.slane %v492, 5
      %v495 = vsel %vm481, %v490, %v494
      %v496 = vshrl.u32 %v432, 16
      %v498 = vrot.slane %v496, 4
      %v499 = vor.u32 %v498, %v494
      %v500 = vrot.slane %v499, 4
      %v502 = vshll.u32 %v433, 16
      %v504 = vrot.slane %v502, 5
      %v505 = vsel %vm481, %v500, %v504
      %v507 = vshrl.u32 %v434, 16
      %v509 = vrot.slane %v507, 4
      %v510 = vshll.u32 %v434, 16
      %v512 = vrot.slane %v510, 5
      %v513 = vor.u32 %v509, %v512
      %v514 = vrot.slane %v513, 4
      %v516 = vshll.u32 %v435, 16
      %v518 = vrot.slane %v516, 5
      %v519 = vsel %vm481, %v514, %v518
      %v520 = vshrl.u32 %v435, 16
      %v522 = vrot.slane %v520, 4
      %v523 = vor.u32 %v522, %v518
      %v524 = vrot.slane %v523, 4
      %v526 = vshll.u32 %v436, 16
      %v528 = vrot.slane %v526, 5
      %v529 = vsel %vm481, %v524, %v528
      %v531 = vshrl.u32 %v437, 16
      %v533 = vrot.slane %v531, 4
      %v534 = vshll.u32 %v437, 16
      %v536 = vrot.slane %v534, 5
      %v537 = vor.u32 %v533, %v536
      %v538 = vrot.slane %v537, 4
      %v540 = vshll.u32 %v438, 16
      %v542 = vrot.slane %v540, 5
      %v543 = vsel %vm481, %v538, %v542
      %v544 = vshrl.u32 %v438, 16
      %v546 = vrot.slane %v544, 4
      %v547 = vor.u32 %v546, %v542
      %v548 = vrot.slane %v547, 4
      %v550 = vshll.u32 %v439, 16
      %v552 = vrot.slane %v550, 5
      %v553 = vsel %vm481, %v548, %v552
      %v555 = vshrl.u32 %v440, 16
      %v557 = vrot.slane %v555, 4
      %v558 = vshll.u32 %v440, 16
      %v560 = vrot.slane %v558, 5
      %v561 = vor.u32 %v557, %v560
      %v562 = vrot.slane %v561, 4
      %v564 = vshll.u32 %v441, 16
      %v566 = vrot.slane %v564, 5
      %v567 = vsel %vm481, %v562, %v566
      %v568 = vshrl.u32 %v441, 16
      %v570 = vrot.slane %v568, 4
      %v571 = vor.u32 %v570, %v566
      %v572 = vrot.slane %v571, 4
      %v574 = vshll.u32 %v442, 16
      %v576 = vrot.slane %v574, 5
      %v577 = vsel %vm481, %v572, %v576
      %v579 = vshrl.u32 %v443, 16
      %v581 = vrot.slane %v579, 4
      %v582 = vshll.u32 %v443, 16
      %v584 = vrot.slane %v582, 5
      %v585 = vor.u32 %v581, %v584
      %v586 = vrot.slane %v585, 4
      %v588 = vshll.u32 %v444, 16
      %v590 = vrot.slane %v588, 5
      %v591 = vsel %vm481, %v586, %v590
      %v592 = vshrl.u32 %v444, 16
      %v594 = vrot.slane %v592, 4
      %v595 = vor.u32 %v594, %v590
      %v596 = vrot.slane %v595, 4
      %v598 = vshll.u32 %v445, 16
      %v600 = vrot.slane %v598, 5
      %v601 = vsel %vm481, %v596, %v600
      %v603 = vshrl.u32 %v446, 16
      %v605 = vrot.slane %v603, 4
      %v606 = vshll.u32 %v446, 16
      %v608 = vrot.slane %v606, 5
      %v609 = vor.u32 %v605, %v608
      %v610 = vrot.slane %v609, 4
      %v612 = vshll.u32 %v447, 16
      %v614 = vrot.slane %v612, 5
      %v615 = vsel %vm481, %v610, %v614
      %v616 = vshrl.u32 %v447, 16
      %v618 = vrot.slane %v616, 4
      %v619 = vor.u32 %v618, %v614
      %v620 = vrot.slane %v619, 4
      %v622 = vshll.u32 %v448, 16
      %v624 = vrot.slane %v622, 5
      %v625 = vsel %vm481, %v620, %v624
      %v627 = vshrl.u32 %v449, 16
      %v629 = vrot.slane %v627, 4
      %v630 = vshll.u32 %v449, 16
      %v632 = vrot.slane %v630, 5
      %v633 = vor.u32 %v629, %v632
      %v634 = vrot.slane %v633, 4
      %v636 = vshll.u32 %v450, 16
      %v638 = vrot.slane %v636, 5
      %v639 = vsel %vm481, %v634, %v638
      %v640 = vshrl.u32 %v450, 16
      %v642 = vrot.slane %v640, 4
      %v643 = vor.u32 %v642, %v638
      %v644 = vrot.slane %v643, 4
      %v646 = vshll.u32 %v451, 16
      %v648 = vrot.slane %v646, 5
      %v649 = vsel %vm481, %v644, %v648
      %v651 = vshrl.u32 %v452, 16
      %v653 = vrot.slane %v651, 4
      %v654 = vshll.u32 %v452, 16
      %v656 = vrot.slane %v654, 5
      %v657 = vor.u32 %v653, %v656
      %v658 = vrot.slane %v657, 4
      %v660 = vshll.u32 %v453, 16
      %v662 = vrot.slane %v660, 5
      %v663 = vsel %vm481, %v658, %v662
      %v664 = vshrl.u32 %v453, 16
      %v666 = vrot.slane %v664, 4
      %v667 = vor.u32 %v666, %v662
      %v668 = vrot.slane %v667, 4
      %v670 = vshll.u32 %v454, 16
      %v672 = vrot.slane %v670, 5
      %v673 = vsel %vm481, %v668, %v672
      %v675 = vshrl.u32 %v455, 16
      %v677 = vrot.slane %v675, 4
      %v678 = vshll.u32 %v455, 16
      %v680 = vrot.slane %v678, 5
      %v681 = vor.u32 %v677, %v680
      %v682 = vrot.slane %v681, 4
      %v684 = vshll.u32 %v456, 16
      %v686 = vrot.slane %v684, 5
      %v687 = vsel %vm481, %v682, %v686
      %v688 = vshrl.u32 %v456, 16
      %v690 = vrot.slane %v688, 4
      %v691 = vor.u32 %v690, %v686
      %v692 = vrot.slane %v691, 4
      %v694 = vshll.u32 %v457, 16
      %v696 = vrot.slane %v694, 5
      %v697 = vsel %vm481, %v692, %v696
      %v699 = vshrl.u32 %v458, 16
      %v701 = vrot.slane %v699, 4
      %v702 = vshll.u32 %v458, 16
      %v704 = vrot.slane %v702, 5
      %v705 = vor.u32 %v701, %v704
      %v706 = vrot.slane %v705, 4
      %v708 = vshll.u32 %v459, 16
      %v710 = vrot.slane %v708, 5
      %v711 = vsel %vm481, %v706, %v710
      %v712 = vshrl.u32 %v459, 16
      %v714 = vrot.slane %v712, 4
      %v715 = vor.u32 %v714, %v710
      %v716 = vrot.slane %v715, 4
      %v718 = vshll.u32 %v460, 16
      %v720 = vrot.slane %v718, 5
      %v721 = vsel %vm481, %v716, %v720
      %v723 = vshrl.u32 %v461, 16
      %v725 = vrot.slane %v723, 4
      %v726 = vshll.u32 %v461, 16
      %v728 = vrot.slane %v726, 5
      %v729 = vor.u32 %v725, %v728
      %v730 = vrot.slane %v729, 4
      %v732 = vshll.u32 %v462, 16
      %v734 = vrot.slane %v732, 5
      %v735 = vsel %vm481, %v730, %v734
      %v736 = vshrl.u32 %v462, 16
      %v738 = vrot.slane %v736, 4
      %v739 = vor.u32 %v738, %v734
      %v740 = vrot.slane %v739, 4
      %v742 = vshll.u32 %v463, 16
      %v744 = vrot.slane %v742, 5
      %v745 = vsel %vm481, %v740, %v744
      %v747 = vshrl.u32 %v464, 16
      %v749 = vrot.slane %v747, 4
      %v750 = vshll.u32 %v464, 16
      %v752 = vrot.slane %v750, 5
      %v753 = vor.u32 %v749, %v752
      %v754 = vrot.slane %v753, 4
      %v756 = vshll.u32 %v465, 16
      %v758 = vrot.slane %v756, 5
      %v759 = vsel %vm481, %v754, %v758
      %v760 = vshrl.u32 %v465, 16
      %v762 = vrot.slane %v760, 4
      %v763 = vor.u32 %v762, %v758
      %v764 = vrot.slane %v763, 4
      %v766 = vshll.u32 %v466, 16
      %v768 = vrot.slane %v766, 5
      %v769 = vsel %vm481, %v764, %v768
      %v771 = vshrl.u32 %v467, 16
      %v773 = vrot.slane %v771, 4
      %v774 = vshll.u32 %v467, 16
      %v776 = vrot.slane %v774, 5
      %v777 = vor.u32 %v773, %v776
      %v778 = vrot.slane %v777, 4
      %v780 = vshll.u32 %v468, 16
      %v782 = vrot.slane %v780, 5
      %v783 = vsel %vm481, %v778, %v782
      %v784 = vshrl.u32 %v468, 16
      %v786 = vrot.slane %v784, 4
      %v787 = vor.u32 %v786, %v782
      %v788 = vrot.slane %v787, 4
      %v790 = vshll.u32 %v469, 16
      %v792 = vrot.slane %v790, 5
      %v793 = vsel %vm481, %v788, %v792
      %v795 = vshrl.u32 %v470, 16
      %v797 = vrot.slane %v795, 4
      %v798 = vshll.u32 %v470, 16
      %v800 = vrot.slane %v798, 5
      %v801 = vor.u32 %v797, %v800
      %v802 = vrot.slane %v801, 4
      %v804 = vshll.u32 %v471, 16
      %v806 = vrot.slane %v804, 5
      %v807 = vsel %vm481, %v802, %v806
      %v808 = vshrl.u32 %v471, 16
      %v810 = vrot.slane %v808, 4
      %v811 = vor.u32 %v810, %v806
      %v812 = vrot.slane %v811, 4
      %v814 = vshll.u32 %v472, 16
      %v816 = vrot.slane %v814, 5
      %v817 = vsel %vm481, %v812, %v816
      %v819 = vshrl.u32 %v473, 16
      %v821 = vrot.slane %v819, 4
      %v822 = vshll.u32 %v473, 16
      %v824 = vrot.slane %v822, 5
      %v825 = vor.u32 %v821, %v824
      %v826 = vrot.slane %v825, 4
      %v828 = vshll.u32 %v474, 16
      %v830 = vrot.slane %v828, 5
      %v831 = vsel %vm481, %v826, %v830
      %v832 = vshrl.u32 %v474, 16
      %v834 = vrot.slane %v832, 4
      %v835 = vor.u32 %v834, %v830
      %v836 = vrot.slane %v835, 4
      %v838 = vshll.u32 %v475, 16
      %v840 = vrot.slane %v838, 5
      %v841 = vsel %vm481, %v836, %v840
      %v843 = vshrl.u32 %v476, 16
      %v845 = vrot.slane %v843, 4
      %v846 = vshll.u32 %v476, 16
      %v848 = vrot.slane %v846, 5
      %v849 = vor.u32 %v845, %v848
      %v850 = vrot.slane %v849, 4
      %v852 = vshll.u32 %v477, 16
      %v854 = vrot.slane %v852, 5
      %v855 = vsel %vm481, %v850, %v854
      %v856 = vshrl.u32 %v477, 16
      %v858 = vrot.slane %v856, 4
      %v859 = vor.u32 %v858, %v854
      %v860 = vrot.slane %v859, 4
      %v862 = vshll.u32 %v478, 16
      %v864 = vrot.slane %v862, 5
      %v865 = vsel %vm481, %v860, %v864
      %v866 = vunpack.c.l.b16 %v495
      %v867 = vunpack.c.l.b16 %v505
      %v868 = vunpack.c.l.b16 %v519
      %v869 = vunpack.c.l.b16 %v529
      %v870 = vunpack.c.l.b16 %v543
      %v871 = vunpack.c.l.b16 %v553
      %v872 = vunpack.c.l.b16 %v567
      %v873 = vunpack.c.l.b16 %v577
      %v874 = vunpack.c.l.b16 %v591
      %v875 = vunpack.c.l.b16 %v601
      %v876 = vunpack.c.l.b16 %v615
      %v877 = vunpack.c.l.b16 %v625
      %v878 = vunpack.c.l.b16 %v639
      %v879 = vunpack.c.l.b16 %v649
      %v880 = vunpack.c.l.b16 %v663
      %v881 = vunpack.c.l.b16 %v673
      %v882 = vunpack.c.l.b16 %v687
      %v883 = vunpack.c.l.b16 %v697
      %v884 = vunpack.c.l.b16 %v711
      %v885 = vunpack.c.l.b16 %v721
      %v886 = vunpack.c.l.b16 %v735
      %v887 = vunpack.c.l.b16 %v745
      %v888 = vunpack.c.l.b16 %v759
      %v889 = vunpack.c.l.b16 %v769
      %v890 = vunpack.c.l.b16 %v783
      %v891 = vunpack.c.l.b16 %v793
      %v892 = vunpack.c.l.b16 %v807
      %v893 = vunpack.c.l.b16 %v817
      %v894 = vunpack.c.l.b16 %v831
      %v895 = vunpack.c.l.b16 %v841
      %v896 = vunpack.c.l.b16 %v855
      %v897 = vunpack.c.l.b16 %v865
      %v898 = vpack.c.b16 %v867, %v866
      %v899 = vpack.c.b16 %v869, %v868
      %v900 = vpack.c.b16 %v871, %v870
      %v901 = vpack.c.b16 %v873, %v872
      %v902 = vpack.c.b16 %v875, %v874
      %v903 = vpack.c.b16 %v877, %v876
      %v904 = vpack.c.b16 %v879, %v878
      %v905 = vpack.c.b16 %v881, %v880
      %v906 = vpack.c.b16 %v883, %v882
      %v907 = vpack.c.b16 %v885, %v884
      %v908 = vpack.c.b16 %v887, %v886
      %v909 = vpack.c.b16 %v889, %v888
      %v910 = vpack.c.b16 %v891, %v890
      %v911 = vpack.c.b16 %v893, %v892
      %v912 = vpack.c.b16 %v895, %v894
      %v913 = vpack.c.b16 %v897, %v896
      %914 = vrot.lane.b32.xlu0 %v898, 8
      %v915 = vpop.permute.xlu0 %914
      %916 = vrot.lane.b32.xlu0 %v899, 8
      %v917 = vpop.permute.xlu0 %916
      %918 = vrot.lane.b32.xlu0 %v900, 8
      %v919 = vpop.permute.xlu0 %918
      %920 = vrot.lane.b32.xlu0 %v901, 8
      %v921 = vpop.permute.xlu0 %920
      %922 = vrot.lane.b32.xlu0 %v902, 8
      %v923 = vpop.permute.xlu0 %922
      %924 = vrot.lane.b32.xlu0 %v903, 8
      %v925 = vpop.permute.xlu0 %924
      %926 = vrot.lane.b32.xlu0 %v904, 8
      %v927 = vpop.permute.xlu0 %926
      %928 = vrot.lane.b32.xlu0 %v905, 8
      %v929 = vpop.permute.xlu0 %928
      %930 = vrot.lane.b32.xlu0 %v906, 8
      %v931 = vpop.permute.xlu0 %930
      %932 = vrot.lane.b32.xlu0 %v907, 8
      %v933 = vpop.permute.xlu0 %932
      %934 = vrot.lane.b32.xlu0 %v908, 8
      %v935 = vpop.permute.xlu0 %934
      %936 = vrot.lane.b32.xlu0 %v909, 8
      %v937 = vpop.permute.xlu0 %936
      %938 = vrot.lane.b32.xlu0 %v910, 8
      %v939 = vpop.permute.xlu0 %938
      %940 = vrot.lane.b32.xlu0 %v911, 8
      %v941 = vpop.permute.xlu0 %940
      %942 = vrot.lane.b32.xlu0 %v912, 8
      %v943 = vpop.permute.xlu0 %942
      %944 = vrot.lane.b32.xlu0 %v913, 8
      %v945 = vpop.permute.xlu0 %944
      %vm962 = vcmask 130112
      %963 = vst.msk [vmem:[#allocation2] sm:$0xff] %vm962, %v915
      %964 = vst.msk [vmem:[#allocation2 + $0x8] sm:$0xff] %vm962, %v917
      %965 = vst.msk [vmem:[#allocation2 + $0x10] sm:$0xff] %vm962, %v919
      %966 = vst.msk [vmem:[#allocation2 + $0x18] sm:$0xff] %vm962, %v921
      %967 = vst.msk [vmem:[#allocation2 + $0x20] sm:$0xff] %vm962, %v923
      %968 = vst.msk [vmem:[#allocation2 + $0x28] sm:$0xff] %vm962, %v925
      %969 = vst.msk [vmem:[#allocation2 + $0x30] sm:$0xff] %vm962, %v927
      %970 = vst.msk [vmem:[#allocation2 + $0x38] sm:$0xff] %vm962, %v929
      %971 = vst.msk [vmem:[#allocation2 + $0x40] sm:$0xff] %vm962, %v931
      %972 = vst.msk [vmem:[#allocation2 + $0x48] sm:$0xff] %vm962, %v933
      %973 = vst.msk [vmem:[#allocation2 + $0x50] sm:$0xff] %vm962, %v935
      %974 = vst.msk [vmem:[#allocation2 + $0x58] sm:$0xff] %vm962, %v937
      %975 = vst.msk [vmem:[#allocation2 + $0x60] sm:$0xff] %vm962, %v939
      %976 = vst.msk [vmem:[#allocation2 + $0x68] sm:$0xff] %vm962, %v941
      %977 = vst.msk [vmem:[#allocation2 + $0x70] sm:$0xff] %vm962, %v943
      %978 = vst.msk [vmem:[#allocation2 + $0x78] sm:$0xff] %vm962, %v945
      %v979 = vld [vmem:[%s285] sm:$0xe]
      %v980 = vld [vmem:[%s285 + $0x4] sm:$0xf]
      %v981 = vld [vmem:[%s285 + $0x8] sm:$0x1]
      %v982 = vld [vmem:[%s285 + $0xc] sm:$0xe]
      %v983 = vld [vmem:[%s285 + $0x10] sm:$0xf]
      %v984 = vld [vmem:[%s285 + $0x14] sm:$0x1]
      %v985 = vld [vmem:[%s285 + $0x18] sm:$0xe]
      %v986 = vld [vmem:[%s285 + $0x1c] sm:$0xf]
      %v987 = vld [vmem:[%s285 + $0x20] sm:$0x1]
      %v988 = vld [vmem:[%s285 + $0x24] sm:$0xe]
      %v989 = vld [vmem:[%s285 + $0x28] sm:$0xf]
      %v990 = vld [vmem:[%s285 + $0x2c] sm:$0x1]
      %v991 = vld [vmem:[%s285 + $0x30] sm:$0xe]
      %v992 = vld [vmem:[%s285 + $0x34] sm:$0xf]
      %v993 = vld [vmem:[%s285 + $0x38] sm:$0x1]
      %v994 = vld [vmem:[%s285 + $0x3c] sm:$0xe]
      %v995 = vld [vmem:[%s285 + $0x40] sm:$0xf]
      %v996 = vld [vmem:[%s285 + $0x44] sm:$0x1]
      %v997 = vld [vmem:[%s285 + $0x48] sm:$0xe]
      %v998 = vld [vmem:[%s285 + $0x4c] sm:$0xf]
      %v999 = vld [vmem:[%s285 + $0x50] sm:$0x1]
      %v1000 = vld [vmem:[%s285 + $0x54] sm:$0xe]
      %v1001 = vld [vmem:[%s285 + $0x58] sm:$0xf]
      %v1002 = vld [vmem:[%s285 + $0x5c] sm:$0x1]
      %v1003 = vld [vmem:[%s285 + $0x60] sm:$0xe]
      %v1004 = vld [vmem:[%s285 + $0x64] sm:$0xf]
      %v1005 = vld [vmem:[%s285 + $0x68] sm:$0x1]
      %v1006 = vld [vmem:[%s285 + $0x6c] sm:$0xe]
      %v1007 = vld [vmem:[%s285 + $0x70] sm:$0xf]
      %v1008 = vld [vmem:[%s285 + $0x74] sm:$0x1]
      %v1009 = vld [vmem:[%s285 + $0x78] sm:$0xe]
      %v1010 = vld [vmem:[%s285 + $0x7c] sm:$0xf]
      %v1011 = vld [vmem:[%s285 + $0x80] sm:$0x1]
      %v1012 = vld [vmem:[%s285 + $0x84] sm:$0xe]
      %v1013 = vld [vmem:[%s285 + $0x88] sm:$0xf]
      %v1014 = vld [vmem:[%s285 + $0x8c] sm:$0x1]
      %v1015 = vld [vmem:[%s285 + $0x90] sm:$0xe]
      %v1016 = vld [vmem:[%s285 + $0x94] sm:$0xf]
      %v1017 = vld [vmem:[%s285 + $0x98] sm:$0x1]
      %v1018 = vld [vmem:[%s285 + $0x9c] sm:$0xe]
      %v1019 = vld [vmem:[%s285 + $0xa0] sm:$0xf]
      %v1020 = vld [vmem:[%s285 + $0xa4] sm:$0x1]
      %v1021 = vld [vmem:[%s285 + $0xa8] sm:$0xe]
      %v1022 = vld [vmem:[%s285 + $0xac] sm:$0xf]
      %v1023 = vld [vmem:[%s285 + $0xb0] sm:$0x1]
      %v1024 = vld [vmem:[%s285 + $0xb4] sm:$0xe]
      %v1025 = vld [vmem:[%s285 + $0xb8] sm:$0xf]
      %v1026 = vld [vmem:[%s285 + $0xbc] sm:$0x1]
      %vm1075 = vcmask 1042432
      %vm1076 = vcmask 1046532
      %vm1077 = vmor %vm1075, %vm1076
      %v1078 = vrot.slane %v979, 5
      %v1079 = vrot.slane %v1078, 4
      %v1080 = vrot.slane %v980, 5
      %v1081 = vsel %vm1077, %v1079, %v1080
      %v1082 = vrot.slane %v1080, 4
      %v1083 = vrot.slane %v981, 5
      %v1084 = vsel %vm1077, %v1082, %v1083
      %v1085 = vrot.slane %v982, 5
      %v1086 = vrot.slane %v1085, 4
      %v1087 = vrot.slane %v983, 5
      %v1088 = vsel %vm1077, %v1086, %v1087
      %v1089 = vrot.slane %v1087, 4
      %v1090 = vrot.slane %v984, 5
      %v1091 = vsel %vm1077, %v1089, %v1090
      %v1092 = vrot.slane %v985, 5
      %v1093 = vrot.slane %v1092, 4
      %v1094 = vrot.slane %v986, 5
      %v1095 = vsel %vm1077, %v1093, %v1094
      %v1096 = vrot.slane %v1094, 4
      %v1097 = vrot.slane %v987, 5
      %v1098 = vsel %vm1077, %v1096, %v1097
      %v1099 = vrot.slane %v988, 5
      %v1100 = vrot.slane %v1099, 4
      %v1101 = vrot.slane %v989, 5
      %v1102 = vsel %vm1077, %v1100, %v1101
      %v1103 = vrot.slane %v1101, 4
      %v1104 = vrot.slane %v990, 5
      %v1105 = vsel %vm1077, %v1103, %v1104
      %v1106 = vrot.slane %v991, 5
      %v1107 = vrot.slane %v1106, 4
      %v1108 = vrot.slane %v992, 5
      %v1109 = vsel %vm1077, %v1107, %v1108
      %v1110 = vrot.slane %v1108, 4
      %v1111 = vrot.slane %v993, 5
      %v1112 = vsel %vm1077, %v1110, %v1111
      %v1113 = vrot.slane %v994, 5
      %v1114 = vrot.slane %v1113, 4
      %v1115 = vrot.slane %v995, 5
      %v1116 = vsel %vm1077, %v1114, %v1115
      %v1117 = vrot.slane %v1115, 4
      %v1118 = vrot.slane %v996, 5
      %v1119 = vsel %vm1077, %v1117, %v1118
      %v1120 = vrot.slane %v997, 5
      %v1121 = vrot.slane %v1120, 4
      %v1122 = vrot.slane %v998, 5
      %v1123 = vsel %vm1077, %v1121, %v1122
      %v1124 = vrot.slane %v1122, 4
      %v1125 = vrot.slane %v999, 5
      %v1126 = vsel %vm1077, %v1124, %v1125
      %v1127 = vrot.slane %v1000, 5
      %v1128 = vrot.slane %v1127, 4
      %v1129 = vrot.slane %v1001, 5
      %v1130 = vsel %vm1077, %v1128, %v1129
      %v1131 = vrot.slane %v1129, 4
      %v1132 = vrot.slane %v1002, 5
      %v1133 = vsel %vm1077, %v1131, %v1132
      %v1134 = vrot.slane %v1003, 5
      %v1135 = vrot.slane %v1134, 4
      %v1136 = vrot.slane %v1004, 5
      %v1137 = vsel %vm1077, %v1135, %v1136
      %v1138 = vrot.slane %v1136, 4
      %v1139 = vrot.slane %v1005, 5
      %v1140 = vsel %vm1077, %v1138, %v1139
      %v1141 = vrot.slane %v1006, 5
      %v1142 = vrot.slane %v1141, 4
      %v1143 = vrot.slane %v1007, 5
      %v1144 = vsel %vm1077, %v1142, %v1143
      %v1145 = vrot.slane %v1143, 4
      %v1146 = vrot.slane %v1008, 5
      %v1147 = vsel %vm1077, %v1145, %v1146
      %v1148 = vrot.slane %v1009, 5
      %v1149 = vrot.slane %v1148, 4
      %v1150 = vrot.slane %v1010, 5
      %v1151 = vsel %vm1077, %v1149, %v1150
      %v1152 = vrot.slane %v1150, 4
      %v1153 = vrot.slane %v1011, 5
      %v1154 = vsel %vm1077, %v1152, %v1153
      %v1155 = vrot.slane %v1012, 5
      %v1156 = vrot.slane %v1155, 4
      %v1157 = vrot.slane %v1013, 5
      %v1158 = vsel %vm1077, %v1156, %v1157
      %v1159 = vrot.slane %v1157, 4
      %v1160 = vrot.slane %v1014, 5
      %v1161 = vsel %vm1077, %v1159, %v1160
      %v1162 = vrot.slane %v1015, 5
      %v1163 = vrot.slane %v1162, 4
      %v1164 = vrot.slane %v1016, 5
      %v1165 = vsel %vm1077, %v1163, %v1164
      %v1166 = vrot.slane %v1164, 4
      %v1167 = vrot.slane %v1017, 5
      %v1168 = vsel %vm1077, %v1166, %v1167
      %v1169 = vrot.slane %v1018, 5
      %v1170 = vrot.slane %v1169, 4
      %v1171 = vrot.slane %v1019, 5
      %v1172 = vsel %vm1077, %v1170, %v1171
      %v1173 = vrot.slane %v1171, 4
      %v1174 = vrot.slane %v1020, 5
      %v1175 = vsel %vm1077, %v1173, %v1174
      %v1176 = vrot.slane %v1021, 5
      %v1177 = vrot.slane %v1176, 4
      %v1178 = vrot.slane %v1022, 5
      %v1179 = vsel %vm1077, %v1177, %v1178
      %v1180 = vrot.slane %v1178, 4
      %v1181 = vrot.slane %v1023, 5
      %v1182 = vsel %vm1077, %v1180, %v1181
      %v1183 = vrot.slane %v1024, 5
      %v1184 = vrot.slane %v1183, 4
      %v1185 = vrot.slane %v1025, 5
      %v1186 = vsel %vm1077, %v1184, %v1185
      %v1187 = vrot.slane %v1185, 4
      %v1188 = vrot.slane %v1026, 5
      %v1189 = vsel %vm1077, %v1187, %v1188
      %v1190 = vunpack.c.l.b16 %v1081
      %v1191 = vunpack.c.l.b16 %v1084
      %v1192 = vunpack.c.l.b16 %v1088
      %v1193 = vunpack.c.l.b16 %v1091
      %v1194 = vunpack.c.l.b16 %v1095
      %v1195 = vunpack.c.l.b16 %v1098
      %v1196 = vunpack.c.l.b16 %v1102
      %v1197 = vunpack.c.l.b16 %v1105
      %v1198 = vunpack.c.l.b16 %v1109
      %v1199 = vunpack.c.l.b16 %v1112
      %v1200 = vunpack.c.l.b16 %v1116
      %v1201 = vunpack.c.l.b16 %v1119
      %v1202 = vunpack.c.l.b16 %v1123
      %v1203 = vunpack.c.l.b16 %v1126
      %v1204 = vunpack.c.l.b16 %v1130
      %v1205 = vunpack.c.l.b16 %v1133
      %v1206 = vunpack.c.l.b16 %v1137
      %v1207 = vunpack.c.l.b16 %v1140
      %v1208 = vunpack.c.l.b16 %v1144
      %v1209 = vunpack.c.l.b16 %v1147
      %v1210 = vunpack.c.l.b16 %v1151
      %v1211 = vunpack.c.l.b16 %v1154
      %v1212 = vunpack.c.l.b16 %v1158
      %v1213 = vunpack.c.l.b16 %v1161
      %v1214 = vunpack.c.l.b16 %v1165
      %v1215 = vunpack.c.l.b16 %v1168
      %v1216 = vunpack.c.l.b16 %v1172
      %v1217 = vunpack.c.l.b16 %v1175
      %v1218 = vunpack.c.l.b16 %v1179
      %v1219 = vunpack.c.l.b16 %v1182
      %v1220 = vunpack.c.l.b16 %v1186
      %v1221 = vunpack.c.l.b16 %v1189
      %v1222 = vpack.c.b16 %v1191, %v1190
      %v1223 = vpack.c.b16 %v1193, %v1192
      %v1224 = vpack.c.b16 %v1195, %v1194
      %v1225 = vpack.c.b16 %v1197, %v1196
      %v1226 = vpack.c.b16 %v1199, %v1198
      %v1227 = vpack.c.b16 %v1201, %v1200
      %v1228 = vpack.c.b16 %v1203, %v1202
      %v1229 = vpack.c.b16 %v1205, %v1204
      %v1230 = vpack.c.b16 %v1207, %v1206
      %v1231 = vpack.c.b16 %v1209, %v1208
      %v1232 = vpack.c.b16 %v1211, %v1210
      %v1233 = vpack.c.b16 %v1213, %v1212
      %v1234 = vpack.c.b16 %v1215, %v1214
      %v1235 = vpack.c.b16 %v1217, %v1216
      %v1236 = vpack.c.b16 %v1219, %v1218
      %v1237 = vpack.c.b16 %v1221, %v1220
      %1238 = vrot.lane.b32.xlu0 %v1222, 16
      %v1239 = vpop.permute.xlu0 %1238
      %1240 = vrot.lane.b32.xlu0 %v1223, 16
      %v1241 = vpop.permute.xlu0 %1240
      %1242 = vrot.lane.b32.xlu0 %v1224, 16
      %v1243 = vpop.permute.xlu0 %1242
      %1244 = vrot.lane.b32.xlu0 %v1225, 16
      %v1245 = vpop.permute.xlu0 %1244
      %1246 = vrot.lane.b32.xlu0 %v1226, 16
      %v1247 = vpop.permute.xlu0 %1246
      %1248 = vrot.lane.b32.xlu0 %v1227, 16
      %v1249 = vpop.permute.xlu0 %1248
      %1250 = vrot.lane.b32.xlu0 %v1228, 16
      %v1251 = vpop.permute.xlu0 %1250
      %1252 = vrot.lane.b32.xlu0 %v1229, 16
      %v1253 = vpop.permute.xlu0 %1252
      %1254 = vrot.lane.b32.xlu0 %v1230, 16
      %v1255 = vpop.permute.xlu0 %1254
      %1256 = vrot.lane.b32.xlu0 %v1231, 16
      %v1257 = vpop.permute.xlu0 %1256
      %1258 = vrot.lane.b32.xlu0 %v1232, 16
      %v1259 = vpop.permute.xlu0 %1258
      %1260 = vrot.lane.b32.xlu0 %v1233, 16
      %v1261 = vpop.permute.xlu0 %1260
      %1262 = vrot.lane.b32.xlu0 %v1234, 16
      %v1263 = vpop.permute.xlu0 %1262
      %1264 = vrot.lane.b32.xlu0 %v1235, 16
      %v1265 = vpop.permute.xlu0 %1264
      %1266 = vrot.lane.b32.xlu0 %v1236, 16
      %v1267 = vpop.permute.xlu0 %1266
      %1268 = vrot.lane.b32.xlu0 %v1237, 16
      %v1269 = vpop.permute.xlu0 %1268
      %vm1286 = vcmask 195712
      %1287 = vst.msk [vmem:[#allocation2] sm:$0xff] %vm1286, %v1239
      %1288 = vst.msk [vmem:[#allocation2 + $0x8] sm:$0xff] %vm1286, %v1241
      %1289 = vst.msk [vmem:[#allocation2 + $0x10] sm:$0xff] %vm1286, %v1243
      %1290 = vst.msk [vmem:[#allocation2 + $0x18] sm:$0xff] %vm1286, %v1245
      %1291 = vst.msk [vmem:[#allocation2 + $0x20] sm:$0xff] %vm1286, %v1247
      %1292 = vst.msk [vmem:[#allocation2 + $0x28] sm:$0xff] %vm1286, %v1249
      %1293 = vst.msk [vmem:[#allocation2 + $0x30] sm:$0xff] %vm1286, %v1251
      %1294 = vst.msk [vmem:[#allocation2 + $0x38] sm:$0xff] %vm1286, %v1253
      %1295 = vst.msk [vmem:[#allocation2 + $0x40] sm:$0xff] %vm1286, %v1255
      %1296 = vst.msk [vmem:[#allocation2 + $0x48] sm:$0xff] %vm1286, %v1257
      %1297 = vst.msk [vmem:[#allocation2 + $0x50] sm:$0xff] %vm1286, %v1259
      %1298 = vst.msk [vmem:[#allocation2 + $0x58] sm:$0xff] %vm1286, %v1261
      %1299 = vst.msk [vmem:[#allocation2 + $0x60] sm:$0xff] %vm1286, %v1263
      %1300 = vst.msk [vmem:[#allocation2 + $0x68] sm:$0xff] %vm1286, %v1265
      %1301 = vst.msk [vmem:[#allocation2 + $0x70] sm:$0xff] %vm1286, %v1267
      %1302 = vst.msk [vmem:[#allocation2 + $0x78] sm:$0xff] %vm1286, %v1269
      %s1303 = sadd.s32 %s282, 1
      %s1304 = smul.u32 %s1303, 3
      %s1305 = smul.addr %s1304, 4
      %s1306 = scalar_lea.vmem %s257, %s1305
      %v1307 = vld [vmem:[%s1306] sm:$0xf]
      %v1308 = vld [vmem:[%s1306 + $0x4] sm:$0xf]
      %v1309 = vld [vmem:[%s1306 + $0xc] sm:$0xf]
      %v1310 = vld [vmem:[%s1306 + $0x10] sm:$0xf]
      %v1311 = vld [vmem:[%s1306 + $0x18] sm:$0xf]
      %v1312 = vld [vmem:[%s1306 + $0x1c] sm:$0xf]
      %v1313 = vld [vmem:[%s1306 + $0x24] sm:$0xf]
      %v1314 = vld [vmem:[%s1306 + $0x28] sm:$0xf]
      %v1315 = vld [vmem:[%s1306 + $0x30] sm:$0xf]
      %v1316 = vld [vmem:[%s1306 + $0x34] sm:$0xf]
      %v1317 = vld [vmem:[%s1306 + $0x3c] sm:$0xf]
      %v1318 = vld [vmem:[%s1306 + $0x40] sm:$0xf]
      %v1319 = vld [vmem:[%s1306 + $0x48] sm:$0xf]
      %v1320 = vld [vmem:[%s1306 + $0x4c] sm:$0xf]
      %v1321 = vld [vmem:[%s1306 + $0x54] sm:$0xf]
      %v1322 = vld [vmem:[%s1306 + $0x58] sm:$0xf]
      %v1323 = vld [vmem:[%s1306 + $0x60] sm:$0xf]
      %v1324 = vld [vmem:[%s1306 + $0x64] sm:$0xf]
      %v1325 = vld [vmem:[%s1306 + $0x6c] sm:$0xf]
      %v1326 = vld [vmem:[%s1306 + $0x70] sm:$0xf]
      %v1327 = vld [vmem:[%s1306 + $0x78] sm:$0xf]
      %v1328 = vld [vmem:[%s1306 + $0x7c] sm:$0xf]
      %v1329 = vld [vmem:[%s1306 + $0x84] sm:$0xf]
      %v1330 = vld [vmem:[%s1306 + $0x88] sm:$0xf]
      %v1331 = vld [vmem:[%s1306 + $0x90] sm:$0xf]
      %v1332 = vld [vmem:[%s1306 + $0x94] sm:$0xf]
      %v1333 = vld [vmem:[%s1306 + $0x9c] sm:$0xf]
      %v1334 = vld [vmem:[%s1306 + $0xa0] sm:$0xf]
      %v1335 = vld [vmem:[%s1306 + $0xa8] sm:$0xf]
      %v1336 = vld [vmem:[%s1306 + $0xac] sm:$0xf]
      %v1337 = vld [vmem:[%s1306 + $0xb4] sm:$0xf]
      %v1338 = vld [vmem:[%s1306 + $0xb8] sm:$0xf]
      %v1371 = vunpack.c.l.b16 %v1307
      %v1372 = vunpack.c.l.b16 %v1308
      %v1373 = vunpack.c.l.b16 %v1309
      %v1374 = vunpack.c.l.b16 %v1310
      %v1375 = vunpack.c.l.b16 %v1311
      %v1376 = vunpack.c.l.b16 %v1312
      %v1377 = vunpack.c.l.b16 %v1313
      %v1378 = vunpack.c.l.b16 %v1314
      %v1379 = vunpack.c.l.b16 %v1315
      %v1380 = vunpack.c.l.b16 %v1316
      %v1381 = vunpack.c.l.b16 %v1317
      %v1382 = vunpack.c.l.b16 %v1318
      %v1383 = vunpack.c.l.b16 %v1319
      %v1384 = vunpack.c.l.b16 %v1320
      %v1385 = vunpack.c.l.b16 %v1321
      %v1386 = vunpack.c.l.b16 %v1322
      %v1387 = vunpack.c.l.b16 %v1323
      %v1388 = vunpack.c.l.b16 %v1324
      %v1389 = vunpack.c.l.b16 %v1325
      %v1390 = vunpack.c.l.b16 %v1326
      %v1391 = vunpack.c.l.b16 %v1327
      %v1392 = vunpack.c.l.b16 %v1328
      %v1393 = vunpack.c.l.b16 %v1329
      %v1394 = vunpack.c.l.b16 %v1330
      %v1395 = vunpack.c.l.b16 %v1331
      %v1396 = vunpack.c.l.b16 %v1332
      %v1397 = vunpack.c.l.b16 %v1333
      %v1398 = vunpack.c.l.b16 %v1334
      %v1399 = vunpack.c.l.b16 %v1335
      %v1400 = vunpack.c.l.b16 %v1336
      %v1401 = vunpack.c.l.b16 %v1337
      %v1402 = vunpack.c.l.b16 %v1338
      %v1403 = vpack.c.b16 %v1372, %v1371
      %v1404 = vpack.c.b16 %v1374, %v1373
      %v1405 = vpack.c.b16 %v1376, %v1375
      %v1406 = vpack.c.b16 %v1378, %v1377
      %v1407 = vpack.c.b16 %v1380, %v1379
      %v1408 = vpack.c.b16 %v1382, %v1381
      %v1409 = vpack.c.b16 %v1384, %v1383
      %v1410 = vpack.c.b16 %v1386, %v1385
      %v1411 = vpack.c.b16 %v1388, %v1387
      %v1412 = vpack.c.b16 %v1390, %v1389
      %v1413 = vpack.c.b16 %v1392, %v1391
      %v1414 = vpack.c.b16 %v1394, %v1393
      %v1415 = vpack.c.b16 %v1396, %v1395
      %v1416 = vpack.c.b16 %v1398, %v1397
      %v1417 = vpack.c.b16 %v1400, %v1399
      %v1418 = vpack.c.b16 %v1402, %v1401
      %1419 = vrot.lane.b32.xlu0 %v1403, 24
      %v1420 = vpop.permute.xlu0 %1419
      %1421 = vrot.lane.b32.xlu0 %v1404, 24
      %v1422 = vpop.permute.xlu0 %1421
      %1423 = vrot.lane.b32.xlu0 %v1405, 24
      %v1424 = vpop.permute.xlu0 %1423
      %1425 = vrot.lane.b32.xlu0 %v1406, 24
      %v1426 = vpop.permute.xlu0 %1425
      %1427 = vrot.lane.b32.xlu0 %v1407, 24
      %v1428 = vpop.permute.xlu0 %1427
      %1429 = vrot.lane.b32.xlu0 %v1408, 24
      %v1430 = vpop.permute.xlu0 %1429
      %1431 = vrot.lane.b32.xlu0 %v1409, 24
      %v1432 = vpop.permute.xlu0 %1431
      %1433 = vrot.lane.b32.xlu0 %v1410, 24
      %v1434 = vpop.permute.xlu0 %1433
      %1435 = vrot.lane.b32.xlu0 %v1411, 24
      %v1436 = vpop.permute.xlu0 %1435
      %1437 = vrot.lane.b32.xlu0 %v1412, 24
      %v1438 = vpop.permute.xlu0 %1437
      %1439 = vrot.lane.b32.xlu0 %v1413, 24
      %v1440 = vpop.permute.xlu0 %1439
      %1441 = vrot.lane.b32.xlu0 %v1414, 24
      %v1442 = vpop.permute.xlu0 %1441
      %1443 = vrot.lane.b32.xlu0 %v1415, 24
      %v1444 = vpop.permute.xlu0 %1443
      %1445 = vrot.lane.b32.xlu0 %v1416, 24
      %v1446 = vpop.permute.xlu0 %1445
      %1447 = vrot.lane.b32.xlu0 %v1417, 24
      %v1448 = vpop.permute.xlu0 %1447
      %1449 = vrot.lane.b32.xlu0 %v1418, 24
      %v1450 = vpop.permute.xlu0 %1449
      %vm1467 = vcmask 261312
      %1468 = vst.msk [vmem:[#allocation2] sm:$0xff] %vm1467, %v1420
      %1469 = vst.msk [vmem:[#allocation2 + $0x8] sm:$0xff] %vm1467, %v1422
      %1470 = vst.msk [vmem:[#allocation2 + $0x10] sm:$0xff] %vm1467, %v1424
      %1471 = vst.msk [vmem:[#allocation2 + $0x18] sm:$0xff] %vm1467, %v1426
      %1472 = vst.msk [vmem:[#allocation2 + $0x20] sm:$0xff] %vm1467, %v1428
      %1473 = vst.msk [vmem:[#allocation2 + $0x28] sm:$0xff] %vm1467, %v1430
      %1474 = vst.msk [vmem:[#allocation2 + $0x30] sm:$0xff] %vm1467, %v1432
      %1475 = vst.msk [vmem:[#allocation2 + $0x38] sm:$0xff] %vm1467, %v1434
      %1476 = vst.msk [vmem:[#allocation2 + $0x40] sm:$0xff] %vm1467, %v1436
      %1477 = vst.msk [vmem:[#allocation2 + $0x48] sm:$0xff] %vm1467, %v1438
      %1478 = vst.msk [vmem:[#allocation2 + $0x50] sm:$0xff] %vm1467, %v1440
      %1479 = vst.msk [vmem:[#allocation2 + $0x58] sm:$0xff] %vm1467, %v1442
      %1480 = vst.msk [vmem:[#allocation2 + $0x60] sm:$0xff] %vm1467, %v1444
      %1481 = vst.msk [vmem:[#allocation2 + $0x68] sm:$0xff] %vm1467, %v1446
      %1482 = vst.msk [vmem:[#allocation2 + $0x70] sm:$0xff] %vm1467, %v1448
      %1483 = vst.msk [vmem:[#allocation2 + $0x78] sm:$0xff] %vm1467, %v1450
      %v1484 = vld [vmem:[%s1306] sm:$0xf]
      %v1485 = vld [vmem:[%s1306 + $0x4] sm:$0xf]
      %v1486 = vld [vmem:[%s1306 + $0x8] sm:$0x1]
      %v1487 = vld [vmem:[%s1306 + $0xc] sm:$0xf]
      %v1488 = vld [vmem:[%s1306 + $0x10] sm:$0xf]
      %v1489 = vld [vmem:[%s1306 + $0x14] sm:$0x1]
      %v1490 = vld [vmem:[%s1306 + $0x18] sm:$0xf]
      %v1491 = vld [vmem:[%s1306 + $0x1c] sm:$0xf]
      %v1492 = vld [vmem:[%s1306 + $0x20] sm:$0x1]
      %v1493 = vld [vmem:[%s1306 + $0x24] sm:$0xf]
      %v1494 = vld [vmem:[%s1306 + $0x28] sm:$0xf]
      %v1495 = vld [vmem:[%s1306 + $0x2c] sm:$0x1]
      %v1496 = vld [vmem:[%s1306 + $0x30] sm:$0xf]
      %v1497 = vld [vmem:[%s1306 + $0x34] sm:$0xf]
      %v1498 = vld [vmem:[%s1306 + $0x38] sm:$0x1]
      %v1499 = vld [vmem:[%s1306 + $0x3c] sm:$0xf]
      %v1500 = vld [vmem:[%s1306 + $0x40] sm:$0xf]
      %v1501 = vld [vmem:[%s1306 + $0x44] sm:$0x1]
      %v1502 = vld [vmem:[%s1306 + $0x48] sm:$0xf]
      %v1503 = vld [vmem:[%s1306 + $0x4c] sm:$0xf]
      %v1504 = vld [vmem:[%s1306 + $0x50] sm:$0x1]
      %v1505 = vld [vmem:[%s1306 + $0x54] sm:$0xf]
      %v1506 = vld [vmem:[%s1306 + $0x58] sm:$0xf]
      %v1507 = vld [vmem:[%s1306 + $0x5c] sm:$0x1]
      %v1508 = vld [vmem:[%s1306 + $0x60] sm:$0xf]
      %v1509 = vld [vmem:[%s1306 + $0x64] sm:$0xf]
      %v1510 = vld [vmem:[%s1306 + $0x68] sm:$0x1]
      %v1511 = vld [vmem:[%s1306 + $0x6c] sm:$0xf]
      %v1512 = vld [vmem:[%s1306 + $0x70] sm:$0xf]
      %v1513 = vld [vmem:[%s1306 + $0x74] sm:$0x1]
      %v1514 = vld [vmem:[%s1306 + $0x78] sm:$0xf]
      %v1515 = vld [vmem:[%s1306 + $0x7c] sm:$0xf]
      %v1516 = vld [vmem:[%s1306 + $0x80] sm:$0x1]
      %v1517 = vld [vmem:[%s1306 + $0x84] sm:$0xf]
      %v1518 = vld [vmem:[%s1306 + $0x88] sm:$0xf]
      %v1519 = vld [vmem:[%s1306 + $0x8c] sm:$0x1]
      %v1520 = vld [vmem:[%s1306 + $0x90] sm:$0xf]
      %v1521 = vld [vmem:[%s1306 + $0x94] sm:$0xf]
      %v1522 = vld [vmem:[%s1306 + $0x98] sm:$0x1]
      %v1523 = vld [vmem:[%s1306 + $0x9c] sm:$0xf]
      %v1524 = vld [vmem:[%s1306 + $0xa0] sm:$0xf]
      %v1525 = vld [vmem:[%s1306 + $0xa4] sm:$0x1]
      %v1526 = vld [vmem:[%s1306 + $0xa8] sm:$0xf]
      %v1527 = vld [vmem:[%s1306 + $0xac] sm:$0xf]
      %v1528 = vld [vmem:[%s1306 + $0xb0] sm:$0x1]
      %v1529 = vld [vmem:[%s1306 + $0xb4] sm:$0xf]
      %v1530 = vld [vmem:[%s1306 + $0xb8] sm:$0xf]
      %v1531 = vld [vmem:[%s1306 + $0xbc] sm:$0x1]
      %v1533 = vshrl.u32 %v1484, 16
      %v1535 = vrot.slane %v1533, 4
      %v1536 = vshll.u32 %v1484, 16
      %v1538 = vrot.slane %v1536, 5
      %v1539 = vor.u32 %v1535, %v1538
      %v1540 = vrot.slane %v1539, 4
      %v1542 = vshll.u32 %v1485, 16
      %v1544 = vrot.slane %v1542, 5
      %v1545 = vsel %vm481, %v1540, %v1544
      %v1546 = vshrl.u32 %v1485, 16
      %v1548 = vrot.slane %v1546, 4
      %v1549 = vor.u32 %v1548, %v1544
      %v1550 = vrot.slane %v1549, 4
      %v1552 = vshll.u32 %v1486, 16
      %v1554 = vrot.slane %v1552, 5
      %v1555 = vsel %vm481, %v1550, %v1554
      %v1557 = vshrl.u32 %v1487, 16
      %v1559 = vrot.slane %v1557, 4
      %v1560 = vshll.u32 %v1487, 16
      %v1562 = vrot.slane %v1560, 5
      %v1563 = vor.u32 %v1559, %v1562
      %v1564 = vrot.slane %v1563, 4
      %v1566 = vshll.u32 %v1488, 16
      %v1568 = vrot.slane %v1566, 5
      %v1569 = vsel %vm481, %v1564, %v1568
      %v1570 = vshrl.u32 %v1488, 16
      %v1572 = vrot.slane %v1570, 4
      %v1573 = vor.u32 %v1572, %v1568
      %v1574 = vrot.slane %v1573, 4
      %v1576 = vshll.u32 %v1489, 16
      %v1578 = vrot.slane %v1576, 5
      %v1579 = vsel %vm481, %v1574, %v1578
      %v1581 = vshrl.u32 %v1490, 16
      %v1583 = vrot.slane %v1581, 4
      %v1584 = vshll.u32 %v1490, 16
      %v1586 = vrot.slane %v1584, 5
      %v1587 = vor.u32 %v1583, %v1586
      %v1588 = vrot.slane %v1587, 4
      %v1590 = vshll.u32 %v1491, 16
      %v1592 = vrot.slane %v1590, 5
      %v1593 = vsel %vm481, %v1588, %v1592
      %v1594 = vshrl.u32 %v1491, 16
      %v1596 = vrot.slane %v1594, 4
      %v1597 = vor.u32 %v1596, %v1592
      %v1598 = vrot.slane %v1597, 4
      %v1600 = vshll.u32 %v1492, 16
      %v1602 = vrot.slane %v1600, 5
      %v1603 = vsel %vm481, %v1598, %v1602
      %v1605 = vshrl.u32 %v1493, 16
      %v1607 = vrot.slane %v1605, 4
      %v1608 = vshll.u32 %v1493, 16
      %v1610 = vrot.slane %v1608, 5
      %v1611 = vor.u32 %v1607, %v1610
      %v1612 = vrot.slane %v1611, 4
      %v1614 = vshll.u32 %v1494, 16
      %v1616 = vrot.slane %v1614, 5
      %v1617 = vsel %vm481, %v1612, %v1616
      %v1618 = vshrl.u32 %v1494, 16
      %v1620 = vrot.slane %v1618, 4
      %v1621 = vor.u32 %v1620, %v1616
      %v1622 = vrot.slane %v1621, 4
      %v1624 = vshll.u32 %v1495, 16
      %v1626 = vrot.slane %v1624, 5
      %v1627 = vsel %vm481, %v1622, %v1626
      %v1629 = vshrl.u32 %v1496, 16
      %v1631 = vrot.slane %v1629, 4
      %v1632 = vshll.u32 %v1496, 16
      %v1634 = vrot.slane %v1632, 5
      %v1635 = vor.u32 %v1631, %v1634
      %v1636 = vrot.slane %v1635, 4
      %v1638 = vshll.u32 %v1497, 16
      %v1640 = vrot.slane %v1638, 5
      %v1641 = vsel %vm481, %v1636, %v1640
      %v1642 = vshrl.u32 %v1497, 16
      %v1644 = vrot.slane %v1642, 4
      %v1645 = vor.u32 %v1644, %v1640
      %v1646 = vrot.slane %v1645, 4
      %v1648 = vshll.u32 %v1498, 16
      %v1650 = vrot.slane %v1648, 5
      %v1651 = vsel %vm481, %v1646, %v1650
      %v1653 = vshrl.u32 %v1499, 16
      %v1655 = vrot.slane %v1653, 4
      %v1656 = vshll.u32 %v1499, 16
      %v1658 = vrot.slane %v1656, 5
      %v1659 = vor.u32 %v1655, %v1658
      %v1660 = vrot.slane %v1659, 4
      %v1662 = vshll.u32 %v1500, 16
      %v1664 = vrot.slane %v1662, 5
      %v1665 = vsel %vm481, %v1660, %v1664
      %v1666 = vshrl.u32 %v1500, 16
      %v1668 = vrot.slane %v1666, 4
      %v1669 = vor.u32 %v1668, %v1664
      %v1670 = vrot.slane %v1669, 4
      %v1672 = vshll.u32 %v1501, 16
      %v1674 = vrot.slane %v1672, 5
      %v1675 = vsel %vm481, %v1670, %v1674
      %v1677 = vshrl.u32 %v1502, 16
      %v1679 = vrot.slane %v1677, 4
      %v1680 = vshll.u32 %v1502, 16
      %v1682 = vrot.slane %v1680, 5
      %v1683 = vor.u32 %v1679, %v1682
      %v1684 = vrot.slane %v1683, 4
      %v1686 = vshll.u32 %v1503, 16
      %v1688 = vrot.slane %v1686, 5
      %v1689 = vsel %vm481, %v1684, %v1688
      %v1690 = vshrl.u32 %v1503, 16
      %v1692 = vrot.slane %v1690, 4
      %v1693 = vor.u32 %v1692, %v1688
      %v1694 = vrot.slane %v1693, 4
      %v1696 = vshll.u32 %v1504, 16
      %v1698 = vrot.slane %v1696, 5
      %v1699 = vsel %vm481, %v1694, %v1698
      %v1701 = vshrl.u32 %v1505, 16
      %v1703 = vrot.slane %v1701, 4
      %v1704 = vshll.u32 %v1505, 16
      %v1706 = vrot.slane %v1704, 5
      %v1707 = vor.u32 %v1703, %v1706
      %v1708 = vrot.slane %v1707, 4
      %v1710 = vshll.u32 %v1506, 16
      %v1712 = vrot.slane %v1710, 5
      %v1713 = vsel %vm481, %v1708, %v1712
      %v1714 = vshrl.u32 %v1506, 16
      %v1716 = vrot.slane %v1714, 4
      %v1717 = vor.u32 %v1716, %v1712
      %v1718 = vrot.slane %v1717, 4
      %v1720 = vshll.u32 %v1507, 16
      %v1722 = vrot.slane %v1720, 5
      %v1723 = vsel %vm481, %v1718, %v1722
      %v1725 = vshrl.u32 %v1508, 16
      %v1727 = vrot.slane %v1725, 4
      %v1728 = vshll.u32 %v1508, 16
      %v1730 = vrot.slane %v1728, 5
      %v1731 = vor.u32 %v1727, %v1730
      %v1732 = vrot.slane %v1731, 4
      %v1734 = vshll.u32 %v1509, 16
      %v1736 = vrot.slane %v1734, 5
      %v1737 = vsel %vm481, %v1732, %v1736
      %v1738 = vshrl.u32 %v1509, 16
      %v1740 = vrot.slane %v1738, 4
      %v1741 = vor.u32 %v1740, %v1736
      %v1742 = vrot.slane %v1741, 4
      %v1744 = vshll.u32 %v1510, 16
      %v1746 = vrot.slane %v1744, 5
      %v1747 = vsel %vm481, %v1742, %v1746
      %v1749 = vshrl.u32 %v1511, 16
      %v1751 = vrot.slane %v1749, 4
      %v1752 = vshll.u32 %v1511, 16
      %v1754 = vrot.slane %v1752, 5
      %v1755 = vor.u32 %v1751, %v1754
      %v1756 = vrot.slane %v1755, 4
      %v1758 = vshll.u32 %v1512, 16
      %v1760 = vrot.slane %v1758, 5
      %v1761 = vsel %vm481, %v1756, %v1760
      %v1762 = vshrl.u32 %v1512, 16
      %v1764 = vrot.slane %v1762, 4
      %v1765 = vor.u32 %v1764, %v1760
      %v1766 = vrot.slane %v1765, 4
      %v1768 = vshll.u32 %v1513, 16
      %v1770 = vrot.slane %v1768, 5
      %v1771 = vsel %vm481, %v1766, %v1770
      %v1773 = vshrl.u32 %v1514, 16
      %v1775 = vrot.slane %v1773, 4
      %v1776 = vshll.u32 %v1514, 16
      %v1778 = vrot.slane %v1776, 5
      %v1779 = vor.u32 %v1775, %v1778
      %v1780 = vrot.slane %v1779, 4
      %v1782 = vshll.u32 %v1515, 16
      %v1784 = vrot.slane %v1782, 5
      %v1785 = vsel %vm481, %v1780, %v1784
      %v1786 = vshrl.u32 %v1515, 16
      %v1788 = vrot.slane %v1786, 4
      %v1789 = vor.u32 %v1788, %v1784
      %v1790 = vrot.slane %v1789, 4
      %v1792 = vshll.u32 %v1516, 16
      %v1794 = vrot.slane %v1792, 5
      %v1795 = vsel %vm481, %v1790, %v1794
      %v1797 = vshrl.u32 %v1517, 16
      %v1799 = vrot.slane %v1797, 4
      %v1800 = vshll.u32 %v1517, 16
      %v1802 = vrot.slane %v1800, 5
      %v1803 = vor.u32 %v1799, %v1802
      %v1804 = vrot.slane %v1803, 4
      %v1806 = vshll.u32 %v1518, 16
      %v1808 = vrot.slane %v1806, 5
      %v1809 = vsel %vm481, %v1804, %v1808
      %v1810 = vshrl.u32 %v1518, 16
      %v1812 = vrot.slane %v1810, 4
      %v1813 = vor.u32 %v1812, %v1808
      %v1814 = vrot.slane %v1813, 4
      %v1816 = vshll.u32 %v1519, 16
      %v1818 = vrot.slane %v1816, 5
      %v1819 = vsel %vm481, %v1814, %v1818
      %v1821 = vshrl.u32 %v1520, 16
      %v1823 = vrot.slane %v1821, 4
      %v1824 = vshll.u32 %v1520, 16
      %v1826 = vrot.slane %v1824, 5
      %v1827 = vor.u32 %v1823, %v1826
      %v1828 = vrot.slane %v1827, 4
      %v1830 = vshll.u32 %v1521, 16
      %v1832 = vrot.slane %v1830, 5
      %v1833 = vsel %vm481, %v1828, %v1832
      %v1834 = vshrl.u32 %v1521, 16
      %v1836 = vrot.slane %v1834, 4
      %v1837 = vor.u32 %v1836, %v1832
      %v1838 = vrot.slane %v1837, 4
      %v1840 = vshll.u32 %v1522, 16
      %v1842 = vrot.slane %v1840, 5
      %v1843 = vsel %vm481, %v1838, %v1842
      %v1845 = vshrl.u32 %v1523, 16
      %v1847 = vrot.slane %v1845, 4
      %v1848 = vshll.u32 %v1523, 16
      %v1850 = vrot.slane %v1848, 5
      %v1851 = vor.u32 %v1847, %v1850
      %v1852 = vrot.slane %v1851, 4
      %v1854 = vshll.u32 %v1524, 16
      %v1856 = vrot.slane %v1854, 5
      %v1857 = vsel %vm481, %v1852, %v1856
      %v1858 = vshrl.u32 %v1524, 16
      %v1860 = vrot.slane %v1858, 4
      %v1861 = vor.u32 %v1860, %v1856
      %v1862 = vrot.slane %v1861, 4
      %v1864 = vshll.u32 %v1525, 16
      %v1866 = vrot.slane %v1864, 5
      %v1867 = vsel %vm481, %v1862, %v1866
      %v1869 = vshrl.u32 %v1526, 16
      %v1871 = vrot.slane %v1869, 4
      %v1872 = vshll.u32 %v1526, 16
      %v1874 = vrot.slane %v1872, 5
      %v1875 = vor.u32 %v1871, %v1874
      %v1876 = vrot.slane %v1875, 4
      %v1878 = vshll.u32 %v1527, 16
      %v1880 = vrot.slane %v1878, 5
      %v1881 = vsel %vm481, %v1876, %v1880
      %v1882 = vshrl.u32 %v1527, 16
      %v1884 = vrot.slane %v1882, 4
      %v1885 = vor.u32 %v1884, %v1880
      %v1886 = vrot.slane %v1885, 4
      %v1888 = vshll.u32 %v1528, 16
      %v1890 = vrot.slane %v1888, 5
      %v1891 = vsel %vm481, %v1886, %v1890
      %v1893 = vshrl.u32 %v1529, 16
      %v1895 = vrot.slane %v1893, 4
      %v1896 = vshll.u32 %v1529, 16
      %v1898 = vrot.slane %v1896, 5
      %v1899 = vor.u32 %v1895, %v1898
      %v1900 = vrot.slane %v1899, 4
      %v1902 = vshll.u32 %v1530, 16
      %v1904 = vrot.slane %v1902, 5
      %v1905 = vsel %vm481, %v1900, %v1904
      %v1906 = vshrl.u32 %v1530, 16
      %v1908 = vrot.slane %v1906, 4
      %v1909 = vor.u32 %v1908, %v1904
      %v1910 = vrot.slane %v1909, 4
      %v1912 = vshll.u32 %v1531, 16
      %v1914 = vrot.slane %v1912, 5
      %v1915 = vsel %vm481, %v1910, %v1914
      %v1916 = vunpack.c.l.b16 %v1545
      %v1917 = vunpack.c.l.b16 %v1555
      %v1918 = vunpack.c.l.b16 %v1569
      %v1919 = vunpack.c.l.b16 %v1579
      %v1920 = vunpack.c.l.b16 %v1593
      %v1921 = vunpack.c.l.b16 %v1603
      %v1922 = vunpack.c.l.b16 %v1617
      %v1923 = vunpack.c.l.b16 %v1627
      %v1924 = vunpack.c.l.b16 %v1641
      %v1925 = vunpack.c.l.b16 %v1651
      %v1926 = vunpack.c.l.b16 %v1665
      %v1927 = vunpack.c.l.b16 %v1675
      %v1928 = vunpack.c.l.b16 %v1689
      %v1929 = vunpack.c.l.b16 %v1699
      %v1930 = vunpack.c.l.b16 %v1713
      %v1931 = vunpack.c.l.b16 %v1723
      %v1932 = vunpack.c.l.b16 %v1737
      %v1933 = vunpack.c.l.b16 %v1747
      %v1934 = vunpack.c.l.b16 %v1761
      %v1935 = vunpack.c.l.b16 %v1771
      %v1936 = vunpack.c.l.b16 %v1785
      %v1937 = vunpack.c.l.b16 %v1795
      %v1938 = vunpack.c.l.b16 %v1809
      %v1939 = vunpack.c.l.b16 %v1819
      %v1940 = vunpack.c.l.b16 %v1833
      %v1941 = vunpack.c.l.b16 %v1843
      %v1942 = vunpack.c.l.b16 %v1857
      %v1943 = vunpack.c.l.b16 %v1867
      %v1944 = vunpack.c.l.b16 %v1881
      %v1945 = vunpack.c.l.b16 %v1891
      %v1946 = vunpack.c.l.b16 %v1905
      %v1947 = vunpack.c.l.b16 %v1915
      %v1948 = vpack.c.b16 %v1917, %v1916
      %v1949 = vpack.c.b16 %v1919, %v1918
      %v1950 = vpack.c.b16 %v1921, %v1920
      %v1951 = vpack.c.b16 %v1923, %v1922
      %v1952 = vpack.c.b16 %v1925, %v1924
      %v1953 = vpack.c.b16 %v1927, %v1926
      %v1954 = vpack.c.b16 %v1929, %v1928
      %v1955 = vpack.c.b16 %v1931, %v1930
      %v1956 = vpack.c.b16 %v1933, %v1932
      %v1957 = vpack.c.b16 %v1935, %v1934
      %v1958 = vpack.c.b16 %v1937, %v1936
      %v1959 = vpack.c.b16 %v1939, %v1938
      %v1960 = vpack.c.b16 %v1941, %v1940
      %v1961 = vpack.c.b16 %v1943, %v1942
      %v1962 = vpack.c.b16 %v1945, %v1944
      %v1963 = vpack.c.b16 %v1947, %v1946
      %1964 = vrot.lane.b32.xlu0 %v1948, 32
      %v1965 = vpop.permute.xlu0 %1964
      %1966 = vrot.lane.b32.xlu0 %v1949, 32
      %v1967 = vpop.permute.xlu0 %1966
      %1968 = vrot.lane.b32.xlu0 %v1950, 32
      %v1969 = vpop.permute.xlu0 %1968
      %1970 = vrot.lane.b32.xlu0 %v1951, 32
      %v1971 = vpop.permute.xlu0 %1970
      %1972 = vrot.lane.b32.xlu0 %v1952, 32
      %v1973 = vpop.permute.xlu0 %1972
      %1974 = vrot.lane.b32.xlu0 %v1953, 32
      %v1975 = vpop.permute.xlu0 %1974
      %1976 = vrot.lane.b32.xlu0 %v1954, 32
      %v1977 = vpop.permute.xlu0 %1976
      %1978 = vrot.lane.b32.xlu0 %v1955, 32
      %v1979 = vpop.permute.xlu0 %1978
      %1980 = vrot.lane.b32.xlu0 %v1956, 32
      %v1981 = vpop.permute.xlu0 %1980
      %1982 = vrot.lane.b32.xlu0 %v1957, 32
      %v1983 = vpop.permute.xlu0 %1982
      %1984 = vrot.lane.b32.xlu0 %v1958, 32
      %v1985 = vpop.permute.xlu0 %1984
      %1986 = vrot.lane.b32.xlu0 %v1959, 32
      %v1987 = vpop.permute.xlu0 %1986
      %1988 = vrot.lane.b32.xlu0 %v1960, 32
      %v1989 = vpop.permute.xlu0 %1988
      %1990 = vrot.lane.b32.xlu0 %v1961, 32
      %v1991 = vpop.permute.xlu0 %1990
      %1992 = vrot.lane.b32.xlu0 %v1962, 32
      %v1993 = vpop.permute.xlu0 %1992
      %1994 = vrot.lane.b32.xlu0 %v1963, 32
      %v1995 = vpop.permute.xlu0 %1994
      %vm2012 = vcmask 326912
      %2013 = vst.msk [vmem:[#allocation2] sm:$0xff] %vm2012, %v1965
      %2014 = vst.msk [vmem:[#allocation2 + $0x8] sm:$0xff] %vm2012, %v1967
      %2015 = vst.msk [vmem:[#allocation2 + $0x10] sm:$0xff] %vm2012, %v1969
      %2016 = vst.msk [vmem:[#allocation2 + $0x18] sm:$0xff] %vm2012, %v1971
      %2017 = vst.msk [vmem:[#allocation2 + $0x20] sm:$0xff] %vm2012, %v1973
      %2018 = vst.msk [vmem:[#allocation2 + $0x28] sm:$0xff] %vm2012, %v1975
      %2019 = vst.msk [vmem:[#allocation2 + $0x30] sm:$0xff] %vm2012, %v1977
      %2020 = vst.msk [vmem:[#allocation2 + $0x38] sm:$0xff] %vm2012, %v1979
      %2021 = vst.msk [vmem:[#allocation2 + $0x40] sm:$0xff] %vm2012, %v1981
      %2022 = vst.msk [vmem:[#allocation2 + $0x48] sm:$0xff] %vm2012, %v1983
      %2023 = vst.msk [vmem:[#allocation2 + $0x50] sm:$0xff] %vm2012, %v1985
      %2024 = vst.msk [vmem:[#allocation2 + $0x58] sm:$0xff] %vm2012, %v1987
      %2025 = vst.msk [vmem:[#allocation2 + $0x60] sm:$0xff] %vm2012, %v1989
      %2026 = vst.msk [vmem:[#allocation2 + $0x68] sm:$0xff] %vm2012, %v1991
      %2027 = vst.msk [vmem:[#allocation2 + $0x70] sm:$0xff] %vm2012, %v1993
      %2028 = vst.msk [vmem:[#allocation2 + $0x78] sm:$0xff] %vm2012, %v1995
      %v2029 = vld [vmem:[%s1306] sm:$0xe]
      %v2030 = vld [vmem:[%s1306 + $0x4] sm:$0xf]
      %v2031 = vld [vmem:[%s1306 + $0x8] sm:$0x1]
      %v2032 = vld [vmem:[%s1306 + $0xc] sm:$0xe]
      %v2033 = vld [vmem:[%s1306 + $0x10] sm:$0xf]
      %v2034 = vld [vmem:[%s1306 + $0x14] sm:$0x1]
      %v2035 = vld [vmem:[%s1306 + $0x18] sm:$0xe]
      %v2036 = vld [vmem:[%s1306 + $0x1c] sm:$0xf]
      %v2037 = vld [vmem:[%s1306 + $0x20] sm:$0x1]
      %v2038 = vld [vmem:[%s1306 + $0x24] sm:$0xe]
      %v2039 = vld [vmem:[%s1306 + $0x28] sm:$0xf]
      %v2040 = vld [vmem:[%s1306 + $0x2c] sm:$0x1]
      %v2041 = vld [vmem:[%s1306 + $0x30] sm:$0xe]
      %v2042 = vld [vmem:[%s1306 + $0x34] sm:$0xf]
      %v2043 = vld [vmem:[%s1306 + $0x38] sm:$0x1]
      %v2044 = vld [vmem:[%s1306 + $0x3c] sm:$0xe]
      %v2045 = vld [vmem:[%s1306 + $0x40] sm:$0xf]
      %v2046 = vld [vmem:[%s1306 + $0x44] sm:$0x1]
      %v2047 = vld [vmem:[%s1306 + $0x48] sm:$0xe]
      %v2048 = vld [vmem:[%s1306 + $0x4c] sm:$0xf]
      %v2049 = vld [vmem:[%s1306 + $0x50] sm:$0x1]
      %v2050 = vld [vmem:[%s1306 + $0x54] sm:$0xe]
      %v2051 = vld [vmem:[%s1306 + $0x58] sm:$0xf]
      %v2052 = vld [vmem:[%s1306 + $0x5c] sm:$0x1]
      %v2053 = vld [vmem:[%s1306 + $0x60] sm:$0xe]
      %v2054 = vld [vmem:[%s1306 + $0x64] sm:$0xf]
      %v2055 = vld [vmem:[%s1306 + $0x68] sm:$0x1]
      %v2056 = vld [vmem:[%s1306 + $0x6c] sm:$0xe]
      %v2057 = vld [vmem:[%s1306 + $0x70] sm:$0xf]
      %v2058 = vld [vmem:[%s1306 + $0x74] sm:$0x1]
      %v2059 = vld [vmem:[%s1306 + $0x78] sm:$0xe]
      %v2060 = vld [vmem:[%s1306 + $0x7c] sm:$0xf]
      %v2061 = vld [vmem:[%s1306 + $0x80] sm:$0x1]
      %v2062 = vld [vmem:[%s1306 + $0x84] sm:$0xe]
      %v2063 = vld [vmem:[%s1306 + $0x88] sm:$0xf]
      %v2064 = vld [vmem:[%s1306 + $0x8c] sm:$0x1]
      %v2065 = vld [vmem:[%s1306 + $0x90] sm:$0xe]
      %v2066 = vld [vmem:[%s1306 + $0x94] sm:$0xf]
      %v2067 = vld [vmem:[%s1306 + $0x98] sm:$0x1]
      %v2068 = vld [vmem:[%s1306 + $0x9c] sm:$0xe]
      %v2069 = vld [vmem:[%s1306 + $0xa0] sm:$0xf]
      %v2070 = vld [vmem:[%s1306 + $0xa4] sm:$0x1]
      %v2071 = vld [vmem:[%s1306 + $0xa8] sm:$0xe]
      %v2072 = vld [vmem:[%s1306 + $0xac] sm:$0xf]
      %v2073 = vld [vmem:[%s1306 + $0xb0] sm:$0x1]
      %v2074 = vld [vmem:[%s1306 + $0xb4] sm:$0xe]
      %v2075 = vld [vmem:[%s1306 + $0xb8] sm:$0xf]
      %v2076 = vld [vmem:[%s1306 + $0xbc] sm:$0x1]
      %v2125 = vrot.slane %v2029, 5
      %v2126 = vrot.slane %v2125, 4
      %v2127 = vrot.slane %v2030, 5
      %v2128 = vsel %vm1077, %v2126, %v2127
      %v2129 = vrot.slane %v2127, 4
      %v2130 = vrot.slane %v2031, 5
      %v2131 = vsel %vm1077, %v2129, %v2130
      %v2132 = vrot.slane %v2032, 5
      %v2133 = vrot.slane %v2132, 4
      %v2134 = vrot.slane %v2033, 5
      %v2135 = vsel %vm1077, %v2133, %v2134
      %v2136 = vrot.slane %v2134, 4
      %v2137 = vrot.slane %v2034, 5
      %v2138 = vsel %vm1077, %v2136, %v2137
      %v2139 = vrot.slane %v2035, 5
      %v2140 = vrot.slane %v2139, 4
      %v2141 = vrot.slane %v2036, 5
      %v2142 = vsel %vm1077, %v2140, %v2141
      %v2143 = vrot.slane %v2141, 4
      %v2144 = vrot.slane %v2037, 5
      %v2145 = vsel %vm1077, %v2143, %v2144
      %v2146 = vrot.slane %v2038, 5
      %v2147 = vrot.slane %v2146, 4
      %v2148 = vrot.slane %v2039, 5
      %v2149 = vsel %vm1077, %v2147, %v2148
      %v2150 = vrot.slane %v2148, 4
      %v2151 = vrot.slane %v2040, 5
      %v2152 = vsel %vm1077, %v2150, %v2151
      %v2153 = vrot.slane %v2041, 5
      %v2154 = vrot.slane %v2153, 4
      %v2155 = vrot.slane %v2042, 5
      %v2156 = vsel %vm1077, %v2154, %v2155
      %v2157 = vrot.slane %v2155, 4
      %v2158 = vrot.slane %v2043, 5
      %v2159 = vsel %vm1077, %v2157, %v2158
      %v2160 = vrot.slane %v2044, 5
      %v2161 = vrot.slane %v2160, 4
      %v2162 = vrot.slane %v2045, 5
      %v2163 = vsel %vm1077, %v2161, %v2162
      %v2164 = vrot.slane %v2162, 4
      %v2165 = vrot.slane %v2046, 5
      %v2166 = vsel %vm1077, %v2164, %v2165
      %v2167 = vrot.slane %v2047, 5
      %v2168 = vrot.slane %v2167, 4
      %v2169 = vrot.slane %v2048, 5
      %v2170 = vsel %vm1077, %v2168, %v2169
      %v2171 = vrot.slane %v2169, 4
      %v2172 = vrot.slane %v2049, 5
      %v2173 = vsel %vm1077, %v2171, %v2172
      %v2174 = vrot.slane %v2050, 5
      %v2175 = vrot.slane %v2174, 4
      %v2176 = vrot.slane %v2051, 5
      %v2177 = vsel %vm1077, %v2175, %v2176
      %v2178 = vrot.slane %v2176, 4
      %v2179 = vrot.slane %v2052, 5
      %v2180 = vsel %vm1077, %v2178, %v2179
      %v2181 = vrot.slane %v2053, 5
      %v2182 = vrot.slane %v2181, 4
      %v2183 = vrot.slane %v2054, 5
      %v2184 = vsel %vm1077, %v2182, %v2183
      %v2185 = vrot.slane %v2183, 4
      %v2186 = vrot.slane %v2055, 5
      %v2187 = vsel %vm1077, %v2185, %v2186
      %v2188 = vrot.slane %v2056, 5
      %v2189 = vrot.slane %v2188, 4
      %v2190 = vrot.slane %v2057, 5
      %v2191 = vsel %vm1077, %v2189, %v2190
      %v2192 = vrot.slane %v2190, 4
      %v2193 = vrot.slane %v2058, 5
      %v2194 = vsel %vm1077, %v2192, %v2193
      %v2195 = vrot.slane %v2059, 5
      %v2196 = vrot.slane %v2195, 4
      %v2197 = vrot.slane %v2060, 5
      %v2198 = vsel %vm1077, %v2196, %v2197
      %v2199 = vrot.slane %v2197, 4
      %v2200 = vrot.slane %v2061, 5
      %v2201 = vsel %vm1077, %v2199, %v2200
      %v2202 = vrot.slane %v2062, 5
      %v2203 = vrot.slane %v2202, 4
      %v2204 = vrot.slane %v2063, 5
      %v2205 = vsel %vm1077, %v2203, %v2204
      %v2206 = vrot.slane %v2204, 4
      %v2207 = vrot.slane %v2064, 5
      %v2208 = vsel %vm1077, %v2206, %v2207
      %v2209 = vrot.slane %v2065, 5
      %v2210 = vrot.slane %v2209, 4
      %v2211 = vrot.slane %v2066, 5
      %v2212 = vsel %vm1077, %v2210, %v2211
      %v2213 = vrot.slane %v2211, 4
      %v2214 = vrot.slane %v2067, 5
      %v2215 = vsel %vm1077, %v2213, %v2214
      %v2216 = vrot.slane %v2068, 5
      %v2217 = vrot.slane %v2216, 4
      %v2218 = vrot.slane %v2069, 5
      %v2219 = vsel %vm1077, %v2217, %v2218
      %v2220 = vrot.slane %v2218, 4
      %v2221 = vrot.slane %v2070, 5
      %v2222 = vsel %vm1077, %v2220, %v2221
      %v2223 = vrot.slane %v2071, 5
      %v2224 = vrot.slane %v2223, 4
      %v2225 = vrot.slane %v2072, 5
      %v2226 = vsel %vm1077, %v2224, %v2225
      %v2227 = vrot.slane %v2225, 4
      %v2228 = vrot.slane %v2073, 5
      %v2229 = vsel %vm1077, %v2227, %v2228
      %v2230 = vrot.slane %v2074, 5
      %v2231 = vrot.slane %v2230, 4
      %v2232 = vrot.slane %v2075, 5
      %v2233 = vsel %vm1077, %v2231, %v2232
      %v2234 = vrot.slane %v2232, 4
      %v2235 = vrot.slane %v2076, 5
      %v2236 = vsel %vm1077, %v2234, %v2235
      %v2237 = vunpack.c.l.b16 %v2128
      %v2238 = vunpack.c.l.b16 %v2131
      %v2239 = vunpack.c.l.b16 %v2135
      %v2240 = vunpack.c.l.b16 %v2138
      %v2241 = vunpack.c.l.b16 %v2142
      %v2242 = vunpack.c.l.b16 %v2145
      %v2243 = vunpack.c.l.b16 %v2149
      %v2244 = vunpack.c.l.b16 %v2152
      %v2245 = vunpack.c.l.b16 %v2156
      %v2246 = vunpack.c.l.b16 %v2159
      %v2247 = vunpack.c.l.b16 %v2163
      %v2248 = vunpack.c.l.b16 %v2166
      %v2249 = vunpack.c.l.b16 %v2170
      %v2250 = vunpack.c.l.b16 %v2173
      %v2251 = vunpack.c.l.b16 %v2177
      %v2252 = vunpack.c.l.b16 %v2180
      %v2253 = vunpack.c.l.b16 %v2184
      %v2254 = vunpack.c.l.b16 %v2187
      %v2255 = vunpack.c.l.b16 %v2191
      %v2256 = vunpack.c.l.b16 %v2194
      %v2257 = vunpack.c.l.b16 %v2198
      %v2258 = vunpack.c.l.b16 %v2201
      %v2259 = vunpack.c.l.b16 %v2205
      %v2260 = vunpack.c.l.b16 %v2208
      %v2261 = vunpack.c.l.b16 %v2212
      %v2262 = vunpack.c.l.b16 %v2215
      %v2263 = vunpack.c.l.b16 %v2219
      %v2264 = vunpack.c.l.b16 %v2222
      %v2265 = vunpack.c.l.b16 %v2226
      %v2266 = vunpack.c.l.b16 %v2229
      %v2267 = vunpack.c.l.b16 %v2233
      %v2268 = vunpack.c.l.b16 %v2236
      %v2269 = vpack.c.b16 %v2238, %v2237
      %v2270 = vpack.c.b16 %v2240, %v2239
      %v2271 = vpack.c.b16 %v2242, %v2241
      %v2272 = vpack.c.b16 %v2244, %v2243
      %v2273 = vpack.c.b16 %v2246, %v2245
      %v2274 = vpack.c.b16 %v2248, %v2247
      %v2275 = vpack.c.b16 %v2250, %v2249
      %v2276 = vpack.c.b16 %v2252, %v2251
      %v2277 = vpack.c.b16 %v2254, %v2253
      %v2278 = vpack.c.b16 %v2256, %v2255
      %v2279 = vpack.c.b16 %v2258, %v2257
      %v2280 = vpack.c.b16 %v2260, %v2259
      %v2281 = vpack.c.b16 %v2262, %v2261
      %v2282 = vpack.c.b16 %v2264, %v2263
      %v2283 = vpack.c.b16 %v2266, %v2265
      %v2284 = vpack.c.b16 %v2268, %v2267
      %2285 = vrot.lane.b32.xlu0 %v2269, 40
      %v2286 = vpop.permute.xlu0 %2285
      %2287 = vrot.lane.b32.xlu0 %v2270, 40
      %v2288 = vpop.permute.xlu0 %2287
      %2289 = vrot.lane.b32.xlu0 %v2271, 40
      %v2290 = vpop.permute.xlu0 %2289
      %2291 = vrot.lane.b32.xlu0 %v2272, 40
      %v2292 = vpop.permute.xlu0 %2291
      %2293 = vrot.lane.b32.xlu0 %v2273, 40
      %v2294 = vpop.permute.xlu0 %2293
      %2295 = vrot.lane.b32.xlu0 %v2274, 40
      %v2296 = vpop.permute.xlu0 %2295
      %2297 = vrot.lane.b32.xlu0 %v2275, 40
      %v2298 = vpop.permute.xlu0 %2297
      %2299 = vrot.lane.b32.xlu0 %v2276, 40
      %v2300 = vpop.permute.xlu0 %2299
      %2301 = vrot.lane.b32.xlu0 %v2277, 40
      %v2302 = vpop.permute.xlu0 %2301
      %2303 = vrot.lane.b32.xlu0 %v2278, 40
      %v2304 = vpop.permute.xlu0 %2303
      %2305 = vrot.lane.b32.xlu0 %v2279, 40
      %v2306 = vpop.permute.xlu0 %2305
      %2307 = vrot.lane.b32.xlu0 %v2280, 40
      %v2308 = vpop.permute.xlu0 %2307
      %2309 = vrot.lane.b32.xlu0 %v2281, 40
      %v2310 = vpop.permute.xlu0 %2309
      %2311 = vrot.lane.b32.xlu0 %v2282, 40
      %v2312 = vpop.permute.xlu0 %2311
      %2313 = vrot.lane.b32.xlu0 %v2283, 40
      %v2314 = vpop.permute.xlu0 %2313
      %2315 = vrot.lane.b32.xlu0 %v2284, 40
      %v2316 = vpop.permute.xlu0 %2315
      %vm2333 = vcmask 392512
      %2334 = vst.msk [vmem:[#allocation2] sm:$0xff] %vm2333, %v2286
      %2335 = vst.msk [vmem:[#allocation2 + $0x8] sm:$0xff] %vm2333, %v2288
      %2336 = vst.msk [vmem:[#allocation2 + $0x10] sm:$0xff] %vm2333, %v2290
      %2337 = vst.msk [vmem:[#allocation2 + $0x18] sm:$0xff] %vm2333, %v2292
      %2338 = vst.msk [vmem:[#allocation2 + $0x20] sm:$0xff] %vm2333, %v2294
      %2339 = vst.msk [vmem:[#allocation2 + $0x28] sm:$0xff] %vm2333, %v2296
      %2340 = vst.msk [vmem:[#allocation2 + $0x30] sm:$0xff] %vm2333, %v2298
      %2341 = vst.msk [vmem:[#allocation2 + $0x38] sm:$0xff] %vm2333, %v2300
      %2342 = vst.msk [vmem:[#allocation2 + $0x40] sm:$0xff] %vm2333, %v2302
      %2343 = vst.msk [vmem:[#allocation2 + $0x48] sm:$0xff] %vm2333, %v2304
      %2344 = vst.msk [vmem:[#allocation2 + $0x50] sm:$0xff] %vm2333, %v2306
      %2345 = vst.msk [vmem:[#allocation2 + $0x58] sm:$0xff] %vm2333, %v2308
      %2346 = vst.msk [vmem:[#allocation2 + $0x60] sm:$0xff] %vm2333, %v2310
      %2347 = vst.msk [vmem:[#allocation2 + $0x68] sm:$0xff] %vm2333, %v2312
      %2348 = vst.msk [vmem:[#allocation2 + $0x70] sm:$0xff] %vm2333, %v2314
      %2349 = vst.msk [vmem:[#allocation2 + $0x78] sm:$0xff] %vm2333, %v2316
      %s2350 = sadd.s32 %s282, 2
      %s2351 = smul.u32 %s2350, 3
      %s2352 = smul.addr %s2351, 4
      %s2353 = scalar_lea.vmem %s257, %s2352
      %v2354 = vld [vmem:[%s2353] sm:$0xf]
      %v2355 = vld [vmem:[%s2353 + $0x4] sm:$0xf]
      %v2356 = vld [vmem:[%s2353 + $0xc] sm:$0xf]
      %v2357 = vld [vmem:[%s2353 + $0x10] sm:$0xf]
      %v2358 = vld [vmem:[%s2353 + $0x18] sm:$0xf]
      %v2359 = vld [vmem:[%s2353 + $0x1c] sm:$0xf]
      %v2360 = vld [vmem:[%s2353 + $0x24] sm:$0xf]
      %v2361 = vld [vmem:[%s2353 + $0x28] sm:$0xf]
      %v2362 = vld [vmem:[%s2353 + $0x30] sm:$0xf]
      %v2363 = vld [vmem:[%s2353 + $0x34] sm:$0xf]
      %v2364 = vld [vmem:[%s2353 + $0x3c] sm:$0xf]
      %v2365 = vld [vmem:[%s2353 + $0x40] sm:$0xf]
      %v2366 = vld [vmem:[%s2353 + $0x48] sm:$0xf]
      %v2367 = vld [vmem:[%s2353 + $0x4c] sm:$0xf]
      %v2368 = vld [vmem:[%s2353 + $0x54] sm:$0xf]
      %v2369 = vld [vmem:[%s2353 + $0x58] sm:$0xf]
      %v2370 = vld [vmem:[%s2353 + $0x60] sm:$0xf]
      %v2371 = vld [vmem:[%s2353 + $0x64] sm:$0xf]
      %v2372 = vld [vmem:[%s2353 + $0x6c] sm:$0xf]
      %v2373 = vld [vmem:[%s2353 + $0x70] sm:$0xf]
      %v2374 = vld [vmem:[%s2353 + $0x78] sm:$0xf]
      %v2375 = vld [vmem:[%s2353 + $0x7c] sm:$0xf]
      %v2376 = vld [vmem:[%s2353 + $0x84] sm:$0xf]
      %v2377 = vld [vmem:[%s2353 + $0x88] sm:$0xf]
      %v2378 = vld [vmem:[%s2353 + $0x90] sm:$0xf]
      %v2379 = vld [vmem:[%s2353 + $0x94] sm:$0xf]
      %v2380 = vld [vmem:[%s2353 + $0x9c] sm:$0xf]
      %v2381 = vld [vmem:[%s2353 + $0xa0] sm:$0xf]
      %v2382 = vld [vmem:[%s2353 + $0xa8] sm:$0xf]
      %v2383 = vld [vmem:[%s2353 + $0xac] sm:$0xf]
      %v2384 = vld [vmem:[%s2353 + $0xb4] sm:$0xf]
      %v2385 = vld [vmem:[%s2353 + $0xb8] sm:$0xf]
      %v2418 = vunpack.c.l.b16 %v2354
      %v2419 = vunpack.c.l.b16 %v2355
      %v2420 = vunpack.c.l.b16 %v2356
      %v2421 = vunpack.c.l.b16 %v2357
      %v2422 = vunpack.c.l.b16 %v2358
      %v2423 = vunpack.c.l.b16 %v2359
      %v2424 = vunpack.c.l.b16 %v2360
      %v2425 = vunpack.c.l.b16 %v2361
      %v2426 = vunpack.c.l.b16 %v2362
      %v2427 = vunpack.c.l.b16 %v2363
      %v2428 = vunpack.c.l.b16 %v2364
      %v2429 = vunpack.c.l.b16 %v2365
      %v2430 = vunpack.c.l.b16 %v2366
      %v2431 = vunpack.c.l.b16 %v2367
      %v2432 = vunpack.c.l.b16 %v2368
      %v2433 = vunpack.c.l.b16 %v2369
      %v2434 = vunpack.c.l.b16 %v2370
      %v2435 = vunpack.c.l.b16 %v2371
      %v2436 = vunpack.c.l.b16 %v2372
      %v2437 = vunpack.c.l.b16 %v2373
      %v2438 = vunpack.c.l.b16 %v2374
      %v2439 = vunpack.c.l.b16 %v2375
      %v2440 = vunpack.c.l.b16 %v2376
      %v2441 = vunpack.c.l.b16 %v2377
      %v2442 = vunpack.c.l.b16 %v2378
      %v2443 = vunpack.c.l.b16 %v2379
      %v2444 = vunpack.c.l.b16 %v2380
      %v2445 = vunpack.c.l.b16 %v2381
      %v2446 = vunpack.c.l.b16 %v2382
      %v2447 = vunpack.c.l.b16 %v2383
      %v2448 = vunpack.c.l.b16 %v2384
      %v2449 = vunpack.c.l.b16 %v2385
      %v2450 = vpack.c.b16 %v2419, %v2418
      %v2451 = vpack.c.b16 %v2421, %v2420
      %v2452 = vpack.c.b16 %v2423, %v2422
      %v2453 = vpack.c.b16 %v2425, %v2424
      %v2454 = vpack.c.b16 %v2427, %v2426
      %v2455 = vpack.c.b16 %v2429, %v2428
      %v2456 = vpack.c.b16 %v2431, %v2430
      %v2457 = vpack.c.b16 %v2433, %v2432
      %v2458 = vpack.c.b16 %v2435, %v2434
      %v2459 = vpack.c.b16 %v2437, %v2436
      %v2460 = vpack.c.b16 %v2439, %v2438
      %v2461 = vpack.c.b16 %v2441, %v2440
      %v2462 = vpack.c.b16 %v2443, %v2442
      %v2463 = vpack.c.b16 %v2445, %v2444
      %v2464 = vpack.c.b16 %v2447, %v2446
      %v2465 = vpack.c.b16 %v2449, %v2448
      %2466 = vrot.lane.b32.xlu0 %v2450, 48
      %v2467 = vpop.permute.xlu0 %2466
      %2468 = vrot.lane.b32.xlu0 %v2451, 48
      %v2469 = vpop.permute.xlu0 %2468
      %2470 = vrot.lane.b32.xlu0 %v2452, 48
      %v2471 = vpop.permute.xlu0 %2470
      %2472 = vrot.lane.b32.xlu0 %v2453, 48
      %v2473 = vpop.permute.xlu0 %2472
      %2474 = vrot.lane.b32.xlu0 %v2454, 48
      %v2475 = vpop.permute.xlu0 %2474
      %2476 = vrot.lane.b32.xlu0 %v2455, 48
      %v2477 = vpop.permute.xlu0 %2476
      %2478 = vrot.lane.b32.xlu0 %v2456, 48
      %v2479 = vpop.permute.xlu0 %2478
      %2480 = vrot.lane.b32.xlu0 %v2457, 48
      %v2481 = vpop.permute.xlu0 %2480
      %2482 = vrot.lane.b32.xlu0 %v2458, 48
      %v2483 = vpop.permute.xlu0 %2482
      %2484 = vrot.lane.b32.xlu0 %v2459, 48
      %v2485 = vpop.permute.xlu0 %2484
      %2486 = vrot.lane.b32.xlu0 %v2460, 48
      %v2487 = vpop.permute.xlu0 %2486
      %2488 = vrot.lane.b32.xlu0 %v2461, 48
      %v2489 = vpop.permute.xlu0 %2488
      %2490 = vrot.lane.b32.xlu0 %v2462, 48
      %v2491 = vpop.permute.xlu0 %2490
      %2492 = vrot.lane.b32.xlu0 %v2463, 48
      %v2493 = vpop.permute.xlu0 %2492
      %2494 = vrot.lane.b32.xlu0 %v2464, 48
      %v2495 = vpop.permute.xlu0 %2494
      %2496 = vrot.lane.b32.xlu0 %v2465, 48
      %v2497 = vpop.permute.xlu0 %2496
      %vm2514 = vcmask 458112
      %2515 = vst.msk [vmem:[#allocation2] sm:$0xff] %vm2514, %v2467
      %2516 = vst.msk [vmem:[#allocation2 + $0x8] sm:$0xff] %vm2514, %v2469
      %2517 = vst.msk [vmem:[#allocation2 + $0x10] sm:$0xff] %vm2514, %v2471
      %2518 = vst.msk [vmem:[#allocation2 + $0x18] sm:$0xff] %vm2514, %v2473
      %2519 = vst.msk [vmem:[#allocation2 + $0x20] sm:$0xff] %vm2514, %v2475
      %2520 = vst.msk [vmem:[#allocation2 + $0x28] sm:$0xff] %vm2514, %v2477
      %2521 = vst.msk [vmem:[#allocation2 + $0x30] sm:$0xff] %vm2514, %v2479
      %2522 = vst.msk [vmem:[#allocation2 + $0x38] sm:$0xff] %vm2514, %v2481
      %2523 = vst.msk [vmem:[#allocation2 + $0x40] sm:$0xff] %vm2514, %v2483
      %2524 = vst.msk [vmem:[#allocation2 + $0x48] sm:$0xff] %vm2514, %v2485
      %2525 = vst.msk [vmem:[#allocation2 + $0x50] sm:$0xff] %vm2514, %v2487
      %2526 = vst.msk [vmem:[#allocation2 + $0x58] sm:$0xff] %vm2514, %v2489
      %2527 = vst.msk [vmem:[#allocation2 + $0x60] sm:$0xff] %vm2514, %v2491
      %2528 = vst.msk [vmem:[#allocation2 + $0x68] sm:$0xff] %vm2514, %v2493
      %2529 = vst.msk [vmem:[#allocation2 + $0x70] sm:$0xff] %vm2514, %v2495
      %2530 = vst.msk [vmem:[#allocation2 + $0x78] sm:$0xff] %vm2514, %v2497
      %v2531 = vld [vmem:[%s2353] sm:$0xf]
      %v2532 = vld [vmem:[%s2353 + $0x4] sm:$0xf]
      %v2533 = vld [vmem:[%s2353 + $0x8] sm:$0x1]
      %v2534 = vld [vmem:[%s2353 + $0xc] sm:$0xf]
      %v2535 = vld [vmem:[%s2353 + $0x10] sm:$0xf]
      %v2536 = vld [vmem:[%s2353 + $0x14] sm:$0x1]
      %v2537 = vld [vmem:[%s2353 + $0x18] sm:$0xf]
      %v2538 = vld [vmem:[%s2353 + $0x1c] sm:$0xf]
      %v2539 = vld [vmem:[%s2353 + $0x20] sm:$0x1]
      %v2540 = vld [vmem:[%s2353 + $0x24] sm:$0xf]
      %v2541 = vld [vmem:[%s2353 + $0x28] sm:$0xf]
      %v2542 = vld [vmem:[%s2353 + $0x2c] sm:$0x1]
      %v2543 = vld [vmem:[%s2353 + $0x30] sm:$0xf]
      %v2544 = vld [vmem:[%s2353 + $0x34] sm:$0xf]
      %v2545 = vld [vmem:[%s2353 + $0x38] sm:$0x1]
      %v2546 = vld [vmem:[%s2353 + $0x3c] sm:$0xf]
      %v2547 = vld [vmem:[%s2353 + $0x40] sm:$0xf]
      %v2548 = vld [vmem:[%s2353 + $0x44] sm:$0x1]
      %v2549 = vld [vmem:[%s2353 + $0x48] sm:$0xf]
      %v2550 = vld [vmem:[%s2353 + $0x4c] sm:$0xf]
      %v2551 = vld [vmem:[%s2353 + $0x50] sm:$0x1]
      %v2552 = vld [vmem:[%s2353 + $0x54] sm:$0xf]
      %v2553 = vld [vmem:[%s2353 + $0x58] sm:$0xf]
      %v2554 = vld [vmem:[%s2353 + $0x5c] sm:$0x1]
      %v2555 = vld [vmem:[%s2353 + $0x60] sm:$0xf]
      %v2556 = vld [vmem:[%s2353 + $0x64] sm:$0xf]
      %v2557 = vld [vmem:[%s2353 + $0x68] sm:$0x1]
      %v2558 = vld [vmem:[%s2353 + $0x6c] sm:$0xf]
      %v2559 = vld [vmem:[%s2353 + $0x70] sm:$0xf]
      %v2560 = vld [vmem:[%s2353 + $0x74] sm:$0x1]
      %v2561 = vld [vmem:[%s2353 + $0x78] sm:$0xf]
      %v2562 = vld [vmem:[%s2353 + $0x7c] sm:$0xf]
      %v2563 = vld [vmem:[%s2353 + $0x80] sm:$0x1]
      %v2564 = vld [vmem:[%s2353 + $0x84] sm:$0xf]
      %v2565 = vld [vmem:[%s2353 + $0x88] sm:$0xf]
      %v2566 = vld [vmem:[%s2353 + $0x8c] sm:$0x1]
      %v2567 = vld [vmem:[%s2353 + $0x90] sm:$0xf]
      %v2568 = vld [vmem:[%s2353 + $0x94] sm:$0xf]
      %v2569 = vld [vmem:[%s2353 + $0x98] sm:$0x1]
      %v2570 = vld [vmem:[%s2353 + $0x9c] sm:$0xf]
      %v2571 = vld [vmem:[%s2353 + $0xa0] sm:$0xf]
      %v2572 = vld [vmem:[%s2353 + $0xa4] sm:$0x1]
      %v2573 = vld [vmem:[%s2353 + $0xa8] sm:$0xf]
      %v2574 = vld [vmem:[%s2353 + $0xac] sm:$0xf]
      %v2575 = vld [vmem:[%s2353 + $0xb0] sm:$0x1]
      %v2576 = vld [vmem:[%s2353 + $0xb4] sm:$0xf]
      %v2577 = vld [vmem:[%s2353 + $0xb8] sm:$0xf]
      %v2578 = vld [vmem:[%s2353 + $0xbc] sm:$0x1]
      %v2580 = vshrl.u32 %v2531, 16
      %v2582 = vrot.slane %v2580, 4
      %v2583 = vshll.u32 %v2531, 16
      %v2585 = vrot.slane %v2583, 5
      %v2586 = vor.u32 %v2582, %v2585
      %v2587 = vrot.slane %v2586, 4
      %v2589 = vshll.u32 %v2532, 16
      %v2591 = vrot.slane %v2589, 5
      %v2592 = vsel %vm481, %v2587, %v2591
      %v2593 = vshrl.u32 %v2532, 16
      %v2595 = vrot.slane %v2593, 4
      %v2596 = vor.u32 %v2595, %v2591
      %v2597 = vrot.slane %v2596, 4
      %v2599 = vshll.u32 %v2533, 16
      %v2601 = vrot.slane %v2599, 5
      %v2602 = vsel %vm481, %v2597, %v2601
      %v2604 = vshrl.u32 %v2534, 16
      %v2606 = vrot.slane %v2604, 4
      %v2607 = vshll.u32 %v2534, 16
      %v2609 = vrot.slane %v2607, 5
      %v2610 = vor.u32 %v2606, %v2609
      %v2611 = vrot.slane %v2610, 4
      %v2613 = vshll.u32 %v2535, 16
      %v2615 = vrot.slane %v2613, 5
      %v2616 = vsel %vm481, %v2611, %v2615
      %v2617 = vshrl.u32 %v2535, 16
      %v2619 = vrot.slane %v2617, 4
      %v2620 = vor.u32 %v2619, %v2615
      %v2621 = vrot.slane %v2620, 4
      %v2623 = vshll.u32 %v2536, 16
      %v2625 = vrot.slane %v2623, 5
      %v2626 = vsel %vm481, %v2621, %v2625
      %v2628 = vshrl.u32 %v2537, 16
      %v2630 = vrot.slane %v2628, 4
      %v2631 = vshll.u32 %v2537, 16
      %v2633 = vrot.slane %v2631, 5
      %v2634 = vor.u32 %v2630, %v2633
      %v2635 = vrot.slane %v2634, 4
      %v2637 = vshll.u32 %v2538, 16
      %v2639 = vrot.slane %v2637, 5
      %v2640 = vsel %vm481, %v2635, %v2639
      %v2641 = vshrl.u32 %v2538, 16
      %v2643 = vrot.slane %v2641, 4
      %v2644 = vor.u32 %v2643, %v2639
      %v2645 = vrot.slane %v2644, 4
      %v2647 = vshll.u32 %v2539, 16
      %v2649 = vrot.slane %v2647, 5
      %v2650 = vsel %vm481, %v2645, %v2649
      %v2652 = vshrl.u32 %v2540, 16
      %v2654 = vrot.slane %v2652, 4
      %v2655 = vshll.u32 %v2540, 16
      %v2657 = vrot.slane %v2655, 5
      %v2658 = vor.u32 %v2654, %v2657
      %v2659 = vrot.slane %v2658, 4
      %v2661 = vshll.u32 %v2541, 16
      %v2663 = vrot.slane %v2661, 5
      %v2664 = vsel %vm481, %v2659, %v2663
      %v2665 = vshrl.u32 %v2541, 16
      %v2667 = vrot.slane %v2665, 4
      %v2668 = vor.u32 %v2667, %v2663
      %v2669 = vrot.slane %v2668, 4
      %v2671 = vshll.u32 %v2542, 16
      %v2673 = vrot.slane %v2671, 5
      %v2674 = vsel %vm481, %v2669, %v2673
      %v2676 = vshrl.u32 %v2543, 16
      %v2678 = vrot.slane %v2676, 4
      %v2679 = vshll.u32 %v2543, 16
      %v2681 = vrot.slane %v2679, 5
      %v2682 = vor.u32 %v2678, %v2681
      %v2683 = vrot.slane %v2682, 4
      %v2685 = vshll.u32 %v2544, 16
      %v2687 = vrot.slane %v2685, 5
      %v2688 = vsel %vm481, %v2683, %v2687
      %v2689 = vshrl.u32 %v2544, 16
      %v2691 = vrot.slane %v2689, 4
      %v2692 = vor.u32 %v2691, %v2687
      %v2693 = vrot.slane %v2692, 4
      %v2695 = vshll.u32 %v2545, 16
      %v2697 = vrot.slane %v2695, 5
      %v2698 = vsel %vm481, %v2693, %v2697
      %v2700 = vshrl.u32 %v2546, 16
      %v2702 = vrot.slane %v2700, 4
      %v2703 = vshll.u32 %v2546, 16
      %v2705 = vrot.slane %v2703, 5
      %v2706 = vor.u32 %v2702, %v2705
      %v2707 = vrot.slane %v2706, 4
      %v2709 = vshll.u32 %v2547, 16
      %v2711 = vrot.slane %v2709, 5
      %v2712 = vsel %vm481, %v2707, %v2711
      %v2713 = vshrl.u32 %v2547, 16
      %v2715 = vrot.slane %v2713, 4
      %v2716 = vor.u32 %v2715, %v2711
      %v2717 = vrot.slane %v2716, 4
      %v2719 = vshll.u32 %v2548, 16
      %v2721 = vrot.slane %v2719, 5
      %v2722 = vsel %vm481, %v2717, %v2721
      %v2724 = vshrl.u32 %v2549, 16
      %v2726 = vrot.slane %v2724, 4
      %v2727 = vshll.u32 %v2549, 16
      %v2729 = vrot.slane %v2727, 5
      %v2730 = vor.u32 %v2726, %v2729
      %v2731 = vrot.slane %v2730, 4
      %v2733 = vshll.u32 %v2550, 16
      %v2735 = vrot.slane %v2733, 5
      %v2736 = vsel %vm481, %v2731, %v2735
      %v2737 = vshrl.u32 %v2550, 16
      %v2739 = vrot.slane %v2737, 4
      %v2740 = vor.u32 %v2739, %v2735
      %v2741 = vrot.slane %v2740, 4
      %v2743 = vshll.u32 %v2551, 16
      %v2745 = vrot.slane %v2743, 5
      %v2746 = vsel %vm481, %v2741, %v2745
      %v2748 = vshrl.u32 %v2552, 16
      %v2750 = vrot.slane %v2748, 4
      %v2751 = vshll.u32 %v2552, 16
      %v2753 = vrot.slane %v2751, 5
      %v2754 = vor.u32 %v2750, %v2753
      %v2755 = vrot.slane %v2754, 4
      %v2757 = vshll.u32 %v2553, 16
      %v2759 = vrot.slane %v2757, 5
      %v2760 = vsel %vm481, %v2755, %v2759
      %v2761 = vshrl.u32 %v2553, 16
      %v2763 = vrot.slane %v2761, 4
      %v2764 = vor.u32 %v2763, %v2759
      %v2765 = vrot.slane %v2764, 4
      %v2767 = vshll.u32 %v2554, 16
      %v2769 = vrot.slane %v2767, 5
      %v2770 = vsel %vm481, %v2765, %v2769
      %v2772 = vshrl.u32 %v2555, 16
      %v2774 = vrot.slane %v2772, 4
      %v2775 = vshll.u32 %v2555, 16
      %v2777 = vrot.slane %v2775, 5
      %v2778 = vor.u32 %v2774, %v2777
      %v2779 = vrot.slane %v2778, 4
      %v2781 = vshll.u32 %v2556, 16
      %v2783 = vrot.slane %v2781, 5
      %v2784 = vsel %vm481, %v2779, %v2783
      %v2785 = vshrl.u32 %v2556, 16
      %v2787 = vrot.slane %v2785, 4
      %v2788 = vor.u32 %v2787, %v2783
      %v2789 = vrot.slane %v2788, 4
      %v2791 = vshll.u32 %v2557, 16
      %v2793 = vrot.slane %v2791, 5
      %v2794 = vsel %vm481, %v2789, %v2793
      %v2796 = vshrl.u32 %v2558, 16
      %v2798 = vrot.slane %v2796, 4
      %v2799 = vshll.u32 %v2558, 16
      %v2801 = vrot.slane %v2799, 5
      %v2802 = vor.u32 %v2798, %v2801
      %v2803 = vrot.slane %v2802, 4
      %v2805 = vshll.u32 %v2559, 16
      %v2807 = vrot.slane %v2805, 5
      %v2808 = vsel %vm481, %v2803, %v2807
      %v2809 = vshrl.u32 %v2559, 16
      %v2811 = vrot.slane %v2809, 4
      %v2812 = vor.u32 %v2811, %v2807
      %v2813 = vrot.slane %v2812, 4
      %v2815 = vshll.u32 %v2560, 16
      %v2817 = vrot.slane %v2815, 5
      %v2818 = vsel %vm481, %v2813, %v2817
      %v2820 = vshrl.u32 %v2561, 16
      %v2822 = vrot.slane %v2820, 4
      %v2823 = vshll.u32 %v2561, 16
      %v2825 = vrot.slane %v2823, 5
      %v2826 = vor.u32 %v2822, %v2825
      %v2827 = vrot.slane %v2826, 4
      %v2829 = vshll.u32 %v2562, 16
      %v2831 = vrot.slane %v2829, 5
      %v2832 = vsel %vm481, %v2827, %v2831
      %v2833 = vshrl.u32 %v2562, 16
      %v2835 = vrot.slane %v2833, 4
      %v2836 = vor.u32 %v2835, %v2831
      %v2837 = vrot.slane %v2836, 4
      %v2839 = vshll.u32 %v2563, 16
      %v2841 = vrot.slane %v2839, 5
      %v2842 = vsel %vm481, %v2837, %v2841
      %v2844 = vshrl.u32 %v2564, 16
      %v2846 = vrot.slane %v2844, 4
      %v2847 = vshll.u32 %v2564, 16
      %v2849 = vrot.slane %v2847, 5
      %v2850 = vor.u32 %v2846, %v2849
      %v2851 = vrot.slane %v2850, 4
      %v2853 = vshll.u32 %v2565, 16
      %v2855 = vrot.slane %v2853, 5
      %v2856 = vsel %vm481, %v2851, %v2855
      %v2857 = vshrl.u32 %v2565, 16
      %v2859 = vrot.slane %v2857, 4
      %v2860 = vor.u32 %v2859, %v2855
      %v2861 = vrot.slane %v2860, 4
      %v2863 = vshll.u32 %v2566, 16
      %v2865 = vrot.slane %v2863, 5
      %v2866 = vsel %vm481, %v2861, %v2865
      %v2868 = vshrl.u32 %v2567, 16
      %v2870 = vrot.slane %v2868, 4
      %v2871 = vshll.u32 %v2567, 16
      %v2873 = vrot.slane %v2871, 5
      %v2874 = vor.u32 %v2870, %v2873
      %v2875 = vrot.slane %v2874, 4
      %v2877 = vshll.u32 %v2568, 16
      %v2879 = vrot.slane %v2877, 5
      %v2880 = vsel %vm481, %v2875, %v2879
      %v2881 = vshrl.u32 %v2568, 16
      %v2883 = vrot.slane %v2881, 4
      %v2884 = vor.u32 %v2883, %v2879
      %v2885 = vrot.slane %v2884, 4
      %v2887 = vshll.u32 %v2569, 16
      %v2889 = vrot.slane %v2887, 5
      %v2890 = vsel %vm481, %v2885, %v2889
      %v2892 = vshrl.u32 %v2570, 16
      %v2894 = vrot.slane %v2892, 4
      %v2895 = vshll.u32 %v2570, 16
      %v2897 = vrot.slane %v2895, 5
      %v2898 = vor.u32 %v2894, %v2897
      %v2899 = vrot.slane %v2898, 4
      %v2901 = vshll.u32 %v2571, 16
      %v2903 = vrot.slane %v2901, 5
      %v2904 = vsel %vm481, %v2899, %v2903
      %v2905 = vshrl.u32 %v2571, 16
      %v2907 = vrot.slane %v2905, 4
      %v2908 = vor.u32 %v2907, %v2903
      %v2909 = vrot.slane %v2908, 4
      %v2911 = vshll.u32 %v2572, 16
      %v2913 = vrot.slane %v2911, 5
      %v2914 = vsel %vm481, %v2909, %v2913
      %v2916 = vshrl.u32 %v2573, 16
      %v2918 = vrot.slane %v2916, 4
      %v2919 = vshll.u32 %v2573, 16
      %v2921 = vrot.slane %v2919, 5
      %v2922 = vor.u32 %v2918, %v2921
      %v2923 = vrot.slane %v2922, 4
      %v2925 = vshll.u32 %v2574, 16
      %v2927 = vrot.slane %v2925, 5
      %v2928 = vsel %vm481, %v2923, %v2927
      %v2929 = vshrl.u32 %v2574, 16
      %v2931 = vrot.slane %v2929, 4
      %v2932 = vor.u32 %v2931, %v2927
      %v2933 = vrot.slane %v2932, 4
      %v2935 = vshll.u32 %v2575, 16
      %v2937 = vrot.slane %v2935, 5
      %v2938 = vsel %vm481, %v2933, %v2937
      %v2940 = vshrl.u32 %v2576, 16
      %v2942 = vrot.slane %v2940, 4
      %v2943 = vshll.u32 %v2576, 16
      %v2945 = vrot.slane %v2943, 5
      %v2946 = vor.u32 %v2942, %v2945
      %v2947 = vrot.slane %v2946, 4
      %v2949 = vshll.u32 %v2577, 16
      %v2951 = vrot.slane %v2949, 5
      %v2952 = vsel %vm481, %v2947, %v2951
      %v2953 = vshrl.u32 %v2577, 16
      %v2955 = vrot.slane %v2953, 4
      %v2956 = vor.u32 %v2955, %v2951
      %v2957 = vrot.slane %v2956, 4
      %v2959 = vshll.u32 %v2578, 16
      %v2961 = vrot.slane %v2959, 5
      %v2962 = vsel %vm481, %v2957, %v2961
      %v2963 = vunpack.c.l.b16 %v2592
      %v2964 = vunpack.c.l.b16 %v2602
      %v2965 = vunpack.c.l.b16 %v2616
      %v2966 = vunpack.c.l.b16 %v2626
      %v2967 = vunpack.c.l.b16 %v2640
      %v2968 = vunpack.c.l.b16 %v2650
      %v2969 = vunpack.c.l.b16 %v2664
      %v2970 = vunpack.c.l.b16 %v2674
      %v2971 = vunpack.c.l.b16 %v2688
      %v2972 = vunpack.c.l.b16 %v2698
      %v2973 = vunpack.c.l.b16 %v2712
      %v2974 = vunpack.c.l.b16 %v2722
      %v2975 = vunpack.c.l.b16 %v2736
      %v2976 = vunpack.c.l.b16 %v2746
      %v2977 = vunpack.c.l.b16 %v2760
      %v2978 = vunpack.c.l.b16 %v2770
      %v2979 = vunpack.c.l.b16 %v2784
      %v2980 = vunpack.c.l.b16 %v2794
      %v2981 = vunpack.c.l.b16 %v2808
      %v2982 = vunpack.c.l.b16 %v2818
      %v2983 = vunpack.c.l.b16 %v2832
      %v2984 = vunpack.c.l.b16 %v2842
      %v2985 = vunpack.c.l.b16 %v2856
      %v2986 = vunpack.c.l.b16 %v2866
      %v2987 = vunpack.c.l.b16 %v2880
      %v2988 = vunpack.c.l.b16 %v2890
      %v2989 = vunpack.c.l.b16 %v2904
      %v2990 = vunpack.c.l.b16 %v2914
      %v2991 = vunpack.c.l.b16 %v2928
      %v2992 = vunpack.c.l.b16 %v2938
      %v2993 = vunpack.c.l.b16 %v2952
      %v2994 = vunpack.c.l.b16 %v2962
      %v2995 = vpack.c.b16 %v2964, %v2963
      %v2996 = vpack.c.b16 %v2966, %v2965
      %v2997 = vpack.c.b16 %v2968, %v2967
      %v2998 = vpack.c.b16 %v2970, %v2969
      %v2999 = vpack.c.b16 %v2972, %v2971
      %v3000 = vpack.c.b16 %v2974, %v2973
      %v3001 = vpack.c.b16 %v2976, %v2975
      %v3002 = vpack.c.b16 %v2978, %v2977
      %v3003 = vpack.c.b16 %v2980, %v2979
      %v3004 = vpack.c.b16 %v2982, %v2981
      %v3005 = vpack.c.b16 %v2984, %v2983
      %v3006 = vpack.c.b16 %v2986, %v2985
      %v3007 = vpack.c.b16 %v2988, %v2987
      %v3008 = vpack.c.b16 %v2990, %v2989
      %v3009 = vpack.c.b16 %v2992, %v2991
      %v3010 = vpack.c.b16 %v2994, %v2993
      %3011 = vrot.lane.b32.xlu0 %v2995, 56
      %v3012 = vpop.permute.xlu0 %3011
      %3013 = vrot.lane.b32.xlu0 %v2996, 56
      %v3014 = vpop.permute.xlu0 %3013
      %3015 = vrot.lane.b32.xlu0 %v2997, 56
      %v3016 = vpop.permute.xlu0 %3015
      %3017 = vrot.lane.b32.xlu0 %v2998, 56
      %v3018 = vpop.permute.xlu0 %3017
      %3019 = vrot.lane.b32.xlu0 %v2999, 56
      %v3020 = vpop.permute.xlu0 %3019
      %3021 = vrot.lane.b32.xlu0 %v3000, 56
      %v3022 = vpop.permute.xlu0 %3021
      %3023 = vrot.lane.b32.xlu0 %v3001, 56
      %v3024 = vpop.permute.xlu0 %3023
      %3025 = vrot.lane.b32.xlu0 %v3002, 56
      %v3026 = vpop.permute.xlu0 %3025
      %3027 = vrot.lane.b32.xlu0 %v3003, 56
      %v3028 = vpop.permute.xlu0 %3027
      %3029 = vrot.lane.b32.xlu0 %v3004, 56
      %v3030 = vpop.permute.xlu0 %3029
      %3031 = vrot.lane.b32.xlu0 %v3005, 56
      %v3032 = vpop.permute.xlu0 %3031
      %3033 = vrot.lane.b32.xlu0 %v3006, 56
      %v3034 = vpop.permute.xlu0 %3033
      %3035 = vrot.lane.b32.xlu0 %v3007, 56
      %v3036 = vpop.permute.xlu0 %3035
      %3037 = vrot.lane.b32.xlu0 %v3008, 56
      %v3038 = vpop.permute.xlu0 %3037
      %3039 = vrot.lane.b32.xlu0 %v3009, 56
      %v3040 = vpop.permute.xlu0 %3039
      %3041 = vrot.lane.b32.xlu0 %v3010, 56
      %v3042 = vpop.permute.xlu0 %3041
      %vm3059 = vcmask 523712
      %3060 = vst.msk [vmem:[#allocation2] sm:$0xff] %vm3059, %v3012
      %3061 = vst.msk [vmem:[#allocation2 + $0x8] sm:$0xff] %vm3059, %v3014
      %3062 = vst.msk [vmem:[#allocation2 + $0x10] sm:$0xff] %vm3059, %v3016
      %3063 = vst.msk [vmem:[#allocation2 + $0x18] sm:$0xff] %vm3059, %v3018
      %3064 = vst.msk [vmem:[#allocation2 + $0x20] sm:$0xff] %vm3059, %v3020
      %3065 = vst.msk [vmem:[#allocation2 + $0x28] sm:$0xff] %vm3059, %v3022
      %3066 = vst.msk [vmem:[#allocation2 + $0x30] sm:$0xff] %vm3059, %v3024
      %3067 = vst.msk [vmem:[#allocation2 + $0x38] sm:$0xff] %vm3059, %v3026
      %3068 = vst.msk [vmem:[#allocation2 + $0x40] sm:$0xff] %vm3059, %v3028
      %3069 = vst.msk [vmem:[#allocation2 + $0x48] sm:$0xff] %vm3059, %v3030
      %3070 = vst.msk [vmem:[#allocation2 + $0x50] sm:$0xff] %vm3059, %v3032
      %3071 = vst.msk [vmem:[#allocation2 + $0x58] sm:$0xff] %vm3059, %v3034
      %3072 = vst.msk [vmem:[#allocation2 + $0x60] sm:$0xff] %vm3059, %v3036
      %3073 = vst.msk [vmem:[#allocation2 + $0x68] sm:$0xff] %vm3059, %v3038
      %3074 = vst.msk [vmem:[#allocation2 + $0x70] sm:$0xff] %vm3059, %v3040
      %3075 = vst.msk [vmem:[#allocation2 + $0x78] sm:$0xff] %vm3059, %v3042
      %v3076 = vld [vmem:[%s2353] sm:$0xe]
      %v3077 = vld [vmem:[%s2353 + $0x4] sm:$0xf]
      %v3078 = vld [vmem:[%s2353 + $0x8] sm:$0x1]
      %v3079 = vld [vmem:[%s2353 + $0xc] sm:$0xe]
      %v3080 = vld [vmem:[%s2353 + $0x10] sm:$0xf]
      %v3081 = vld [vmem:[%s2353 + $0x14] sm:$0x1]
      %v3082 = vld [vmem:[%s2353 + $0x18] sm:$0xe]
      %v3083 = vld [vmem:[%s2353 + $0x1c] sm:$0xf]
      %v3084 = vld [vmem:[%s2353 + $0x20] sm:$0x1]
      %v3085 = vld [vmem:[%s2353 + $0x24] sm:$0xe]
      %v3086 = vld [vmem:[%s2353 + $0x28] sm:$0xf]
      %v3087 = vld [vmem:[%s2353 + $0x2c] sm:$0x1]
      %v3088 = vld [vmem:[%s2353 + $0x30] sm:$0xe]
      %v3089 = vld [vmem:[%s2353 + $0x34] sm:$0xf]
      %v3090 = vld [vmem:[%s2353 + $0x38] sm:$0x1]
      %v3091 = vld [vmem:[%s2353 + $0x3c] sm:$0xe]
      %v3092 = vld [vmem:[%s2353 + $0x40] sm:$0xf]
      %v3093 = vld [vmem:[%s2353 + $0x44] sm:$0x1]
      %v3094 = vld [vmem:[%s2353 + $0x48] sm:$0xe]
      %v3095 = vld [vmem:[%s2353 + $0x4c] sm:$0xf]
      %v3096 = vld [vmem:[%s2353 + $0x50] sm:$0x1]
      %v3097 = vld [vmem:[%s2353 + $0x54] sm:$0xe]
      %v3098 = vld [vmem:[%s2353 + $0x58] sm:$0xf]
      %v3099 = vld [vmem:[%s2353 + $0x5c] sm:$0x1]
      %v3100 = vld [vmem:[%s2353 + $0x60] sm:$0xe]
      %v3101 = vld [vmem:[%s2353 + $0x64] sm:$0xf]
      %v3102 = vld [vmem:[%s2353 + $0x68] sm:$0x1]
      %v3103 = vld [vmem:[%s2353 + $0x6c] sm:$0xe]
      %v3104 = vld [vmem:[%s2353 + $0x70] sm:$0xf]
      %v3105 = vld [vmem:[%s2353 + $0x74] sm:$0x1]
      %v3106 = vld [vmem:[%s2353 + $0x78] sm:$0xe]
      %v3107 = vld [vmem:[%s2353 + $0x7c] sm:$0xf]
      %v3108 = vld [vmem:[%s2353 + $0x80] sm:$0x1]
      %v3109 = vld [vmem:[%s2353 + $0x84] sm:$0xe]
      %v3110 = vld [vmem:[%s2353 + $0x88] sm:$0xf]
      %v3111 = vld [vmem:[%s2353 + $0x8c] sm:$0x1]
      %v3112 = vld [vmem:[%s2353 + $0x90] sm:$0xe]
      %v3113 = vld [vmem:[%s2353 + $0x94] sm:$0xf]
      %v3114 = vld [vmem:[%s2353 + $0x98] sm:$0x1]
      %v3115 = vld [vmem:[%s2353 + $0x9c] sm:$0xe]
      %v3116 = vld [vmem:[%s2353 + $0xa0] sm:$0xf]
      %v3117 = vld [vmem:[%s2353 + $0xa4] sm:$0x1]
      %v3118 = vld [vmem:[%s2353 + $0xa8] sm:$0xe]
      %v3119 = vld [vmem:[%s2353 + $0xac] sm:$0xf]
      %v3120 = vld [vmem:[%s2353 + $0xb0] sm:$0x1]
      %v3121 = vld [vmem:[%s2353 + $0xb4] sm:$0xe]
      %v3122 = vld [vmem:[%s2353 + $0xb8] sm:$0xf]
      %v3123 = vld [vmem:[%s2353 + $0xbc] sm:$0x1]
      %v3172 = vrot.slane %v3076, 5
      %v3173 = vrot.slane %v3172, 4
      %v3174 = vrot.slane %v3077, 5
      %v3175 = vsel %vm1077, %v3173, %v3174
      %v3176 = vrot.slane %v3174, 4
      %v3177 = vrot.slane %v3078, 5
      %v3178 = vsel %vm1077, %v3176, %v3177
      %v3179 = vrot.slane %v3079, 5
      %v3180 = vrot.slane %v3179, 4
      %v3181 = vrot.slane %v3080, 5
      %v3182 = vsel %vm1077, %v3180, %v3181
      %v3183 = vrot.slane %v3181, 4
      %v3184 = vrot.slane %v3081, 5
      %v3185 = vsel %vm1077, %v3183, %v3184
      %v3186 = vrot.slane %v3082, 5
      %v3187 = vrot.slane %v3186, 4
      %v3188 = vrot.slane %v3083, 5
      %v3189 = vsel %vm1077, %v3187, %v3188
      %v3190 = vrot.slane %v3188, 4
      %v3191 = vrot.slane %v3084, 5
      %v3192 = vsel %vm1077, %v3190, %v3191
      %v3193 = vrot.slane %v3085, 5
      %v3194 = vrot.slane %v3193, 4
      %v3195 = vrot.slane %v3086, 5
      %v3196 = vsel %vm1077, %v3194, %v3195
      %v3197 = vrot.slane %v3195, 4
      %v3198 = vrot.slane %v3087, 5
      %v3199 = vsel %vm1077, %v3197, %v3198
      %v3200 = vrot.slane %v3088, 5
      %v3201 = vrot.slane %v3200, 4
      %v3202 = vrot.slane %v3089, 5
      %v3203 = vsel %vm1077, %v3201, %v3202
      %v3204 = vrot.slane %v3202, 4
      %v3205 = vrot.slane %v3090, 5
      %v3206 = vsel %vm1077, %v3204, %v3205
      %v3207 = vrot.slane %v3091, 5
      %v3208 = vrot.slane %v3207, 4
      %v3209 = vrot.slane %v3092, 5
      %v3210 = vsel %vm1077, %v3208, %v3209
      %v3211 = vrot.slane %v3209, 4
      %v3212 = vrot.slane %v3093, 5
      %v3213 = vsel %vm1077, %v3211, %v3212
      %v3214 = vrot.slane %v3094, 5
      %v3215 = vrot.slane %v3214, 4
      %v3216 = vrot.slane %v3095, 5
      %v3217 = vsel %vm1077, %v3215, %v3216
      %v3218 = vrot.slane %v3216, 4
      %v3219 = vrot.slane %v3096, 5
      %v3220 = vsel %vm1077, %v3218, %v3219
      %v3221 = vrot.slane %v3097, 5
      %v3222 = vrot.slane %v3221, 4
      %v3223 = vrot.slane %v3098, 5
      %v3224 = vsel %vm1077, %v3222, %v3223
      %v3225 = vrot.slane %v3223, 4
      %v3226 = vrot.slane %v3099, 5
      %v3227 = vsel %vm1077, %v3225, %v3226
      %v3228 = vrot.slane %v3100, 5
      %v3229 = vrot.slane %v3228, 4
      %v3230 = vrot.slane %v3101, 5
      %v3231 = vsel %vm1077, %v3229, %v3230
      %v3232 = vrot.slane %v3230, 4
      %v3233 = vrot.slane %v3102, 5
      %v3234 = vsel %vm1077, %v3232, %v3233
      %v3235 = vrot.slane %v3103, 5
      %v3236 = vrot.slane %v3235, 4
      %v3237 = vrot.slane %v3104, 5
      %v3238 = vsel %vm1077, %v3236, %v3237
      %v3239 = vrot.slane %v3237, 4
      %v3240 = vrot.slane %v3105, 5
      %v3241 = vsel %vm1077, %v3239, %v3240
      %v3242 = vrot.slane %v3106, 5
      %v3243 = vrot.slane %v3242, 4
      %v3244 = vrot.slane %v3107, 5
      %v3245 = vsel %vm1077, %v3243, %v3244
      %v3246 = vrot.slane %v3244, 4
      %v3247 = vrot.slane %v3108, 5
      %v3248 = vsel %vm1077, %v3246, %v3247
      %v3249 = vrot.slane %v3109, 5
      %v3250 = vrot.slane %v3249, 4
      %v3251 = vrot.slane %v3110, 5
      %v3252 = vsel %vm1077, %v3250, %v3251
      %v3253 = vrot.slane %v3251, 4
      %v3254 = vrot.slane %v3111, 5
      %v3255 = vsel %vm1077, %v3253, %v3254
      %v3256 = vrot.slane %v3112, 5
      %v3257 = vrot.slane %v3256, 4
      %v3258 = vrot.slane %v3113, 5
      %v3259 = vsel %vm1077, %v3257, %v3258
      %v3260 = vrot.slane %v3258, 4
      %v3261 = vrot.slane %v3114, 5
      %v3262 = vsel %vm1077, %v3260, %v3261
      %v3263 = vrot.slane %v3115, 5
      %v3264 = vrot.slane %v3263, 4
      %v3265 = vrot.slane %v3116, 5
      %v3266 = vsel %vm1077, %v3264, %v3265
      %v3267 = vrot.slane %v3265, 4
      %v3268 = vrot.slane %v3117, 5
      %v3269 = vsel %vm1077, %v3267, %v3268
      %v3270 = vrot.slane %v3118, 5
      %v3271 = vrot.slane %v3270, 4
      %v3272 = vrot.slane %v3119, 5
      %v3273 = vsel %vm1077, %v3271, %v3272
      %v3274 = vrot.slane %v3272, 4
      %v3275 = vrot.slane %v3120, 5
      %v3276 = vsel %vm1077, %v3274, %v3275
      %v3277 = vrot.slane %v3121, 5
      %v3278 = vrot.slane %v3277, 4
      %v3279 = vrot.slane %v3122, 5
      %v3280 = vsel %vm1077, %v3278, %v3279
      %v3281 = vrot.slane %v3279, 4
      %v3282 = vrot.slane %v3123, 5
      %v3283 = vsel %vm1077, %v3281, %v3282
      %v3284 = vunpack.c.l.b16 %v3175
      %v3285 = vunpack.c.l.b16 %v3178
      %v3286 = vunpack.c.l.b16 %v3182
      %v3287 = vunpack.c.l.b16 %v3185
      %v3288 = vunpack.c.l.b16 %v3189
      %v3289 = vunpack.c.l.b16 %v3192
      %v3290 = vunpack.c.l.b16 %v3196
      %v3291 = vunpack.c.l.b16 %v3199
      %v3292 = vunpack.c.l.b16 %v3203
      %v3293 = vunpack.c.l.b16 %v3206
      %v3294 = vunpack.c.l.b16 %v3210
      %v3295 = vunpack.c.l.b16 %v3213
      %v3296 = vunpack.c.l.b16 %v3217
      %v3297 = vunpack.c.l.b16 %v3220
      %v3298 = vunpack.c.l.b16 %v3224
      %v3299 = vunpack.c.l.b16 %v3227
      %v3300 = vunpack.c.l.b16 %v3231
      %v3301 = vunpack.c.l.b16 %v3234
      %v3302 = vunpack.c.l.b16 %v3238
      %v3303 = vunpack.c.l.b16 %v3241
      %v3304 = vunpack.c.l.b16 %v3245
      %v3305 = vunpack.c.l.b16 %v3248
      %v3306 = vunpack.c.l.b16 %v3252
      %v3307 = vunpack.c.l.b16 %v3255
      %v3308 = vunpack.c.l.b16 %v3259
      %v3309 = vunpack.c.l.b16 %v3262
      %v3310 = vunpack.c.l.b16 %v3266
      %v3311 = vunpack.c.l.b16 %v3269
      %v3312 = vunpack.c.l.b16 %v3273
      %v3313 = vunpack.c.l.b16 %v3276
      %v3314 = vunpack.c.l.b16 %v3280
      %v3315 = vunpack.c.l.b16 %v3283
      %v3316 = vpack.c.b16 %v3285, %v3284
      %v3317 = vpack.c.b16 %v3287, %v3286
      %v3318 = vpack.c.b16 %v3289, %v3288
      %v3319 = vpack.c.b16 %v3291, %v3290
      %v3320 = vpack.c.b16 %v3293, %v3292
      %v3321 = vpack.c.b16 %v3295, %v3294
      %v3322 = vpack.c.b16 %v3297, %v3296
      %v3323 = vpack.c.b16 %v3299, %v3298
      %v3324 = vpack.c.b16 %v3301, %v3300
      %v3325 = vpack.c.b16 %v3303, %v3302
      %v3326 = vpack.c.b16 %v3305, %v3304
      %v3327 = vpack.c.b16 %v3307, %v3306
      %v3328 = vpack.c.b16 %v3309, %v3308
      %v3329 = vpack.c.b16 %v3311, %v3310
      %v3330 = vpack.c.b16 %v3313, %v3312
      %v3331 = vpack.c.b16 %v3315, %v3314
      %3332 = vrot.lane.b32.xlu0 %v3316, 64
      %v3333 = vpop.permute.xlu0 %3332
      %3334 = vrot.lane.b32.xlu0 %v3317, 64
      %v3335 = vpop.permute.xlu0 %3334
      %3336 = vrot.lane.b32.xlu0 %v3318, 64
      %v3337 = vpop.permute.xlu0 %3336
      %3338 = vrot.lane.b32.xlu0 %v3319, 64
      %v3339 = vpop.permute.xlu0 %3338
      %3340 = vrot.lane.b32.xlu0 %v3320, 64
      %v3341 = vpop.permute.xlu0 %3340
      %3342 = vrot.lane.b32.xlu0 %v3321, 64
      %v3343 = vpop.permute.xlu0 %3342
      %3344 = vrot.lane.b32.xlu0 %v3322, 64
      %v3345 = vpop.permute.xlu0 %3344
      %3346 = vrot.lane.b32.xlu0 %v3323, 64
      %v3347 = vpop.permute.xlu0 %3346
      %3348 = vrot.lane.b32.xlu0 %v3324, 64
      %v3349 = vpop.permute.xlu0 %3348
      %3350 = vrot.lane.b32.xlu0 %v3325, 64
      %v3351 = vpop.permute.xlu0 %3350
      %3352 = vrot.lane.b32.xlu0 %v3326, 64
      %v3353 = vpop.permute.xlu0 %3352
      %3354 = vrot.lane.b32.xlu0 %v3327, 64
      %v3355 = vpop.permute.xlu0 %3354
      %3356 = vrot.lane.b32.xlu0 %v3328, 64
      %v3357 = vpop.permute.xlu0 %3356
      %3358 = vrot.lane.b32.xlu0 %v3329, 64
      %v3359 = vpop.permute.xlu0 %3358
      %3360 = vrot.lane.b32.xlu0 %v3330, 64
      %v3361 = vpop.permute.xlu0 %3360
      %3362 = vrot.lane.b32.xlu0 %v3331, 64
      %v3363 = vpop.permute.xlu0 %3362
      %vm3380 = vcmask 589312
      %3381 = vst.msk [vmem:[#allocation2] sm:$0xff] %vm3380, %v3333
      %3382 = vst.msk [vmem:[#allocation2 + $0x8] sm:$0xff] %vm3380, %v3335
      %3383 = vst.msk [vmem:[#allocation2 + $0x10] sm:$0xff] %vm3380, %v3337
      %3384 = vst.msk [vmem:[#allocation2 + $0x18] sm:$0xff] %vm3380, %v3339
      %3385 = vst.msk [vmem:[#allocation2 + $0x20] sm:$0xff] %vm3380, %v3341
      %3386 = vst.msk [vmem:[#allocation2 + $0x28] sm:$0xff] %vm3380, %v3343
      %3387 = vst.msk [vmem:[#allocation2 + $0x30] sm:$0xff] %vm3380, %v3345
      %3388 = vst.msk [vmem:[#allocation2 + $0x38] sm:$0xff] %vm3380, %v3347
      %3389 = vst.msk [vmem:[#allocation2 + $0x40] sm:$0xff] %vm3380, %v3349
      %3390 = vst.msk [vmem:[#allocation2 + $0x48] sm:$0xff] %vm3380, %v3351
      %3391 = vst.msk [vmem:[#allocation2 + $0x50] sm:$0xff] %vm3380, %v3353
      %3392 = vst.msk [vmem:[#allocation2 + $0x58] sm:$0xff] %vm3380, %v3355
      %3393 = vst.msk [vmem:[#allocation2 + $0x60] sm:$0xff] %vm3380, %v3357
      %3394 = vst.msk [vmem:[#allocation2 + $0x68] sm:$0xff] %vm3380, %v3359
      %3395 = vst.msk [vmem:[#allocation2 + $0x70] sm:$0xff] %vm3380, %v3361
      %3396 = vst.msk [vmem:[#allocation2 + $0x78] sm:$0xff] %vm3380, %v3363
      %v3397 = vld [vmem:[#allocation2] sm:$0xff]
      %v3398 = vld [vmem:[#allocation2 + $0x8] sm:$0xff]
      %v3399 = vld [vmem:[#allocation2 + $0x10] sm:$0xff]
      %v3400 = vld [vmem:[#allocation2 + $0x18] sm:$0xff]
      %v3401 = vld [vmem:[#allocation2 + $0x20] sm:$0xff]
      %v3402 = vld [vmem:[#allocation2 + $0x28] sm:$0xff]
      %v3403 = vld [vmem:[#allocation2 + $0x30] sm:$0xff]
      %v3404 = vld [vmem:[#allocation2 + $0x38] sm:$0xff]
      %v3405 = vld [vmem:[#allocation2 + $0x40] sm:$0xff]
      %v3406 = vld [vmem:[#allocation2 + $0x48] sm:$0xff]
      %v3407 = vld [vmem:[#allocation2 + $0x50] sm:$0xff]
      %v3408 = vld [vmem:[#allocation2 + $0x58] sm:$0xff]
      %v3409 = vld [vmem:[#allocation2 + $0x60] sm:$0xff]
      %v3410 = vld [vmem:[#allocation2 + $0x68] sm:$0xff]
      %v3411 = vld [vmem:[#allocation2 + $0x70] sm:$0xff]
      %v3412 = vld [vmem:[#allocation2 + $0x78] sm:$0xff]
      %v3413 = vld [vmem:[%s261] sm:$0xf]
      %v3414 = vld [vmem:[%s261 + $0x4] sm:$0xf]
      %v3415 = vld [vmem:[%s261 + $0x8] sm:$0xf]
      %v3416 = vld [vmem:[%s261 + $0xc] sm:$0xf]
      %v3417 = vld [vmem:[%s261 + $0x10] sm:$0xf]
      %v3418 = vld [vmem:[%s261 + $0x14] sm:$0xf]
      %v3419 = vld [vmem:[%s261 + $0x18] sm:$0xf]
      %v3420 = vld [vmem:[%s261 + $0x1c] sm:$0xf]
      %v3421 = vld [vmem:[%s261 + $0x20] sm:$0xf]
      %v3431 = vunpack.c.l.b16 %v3413
      %v3432 = vunpack.c.l.b16 %v3414
      %v3433 = vunpack.c.l.b16 %v3415
      %v3434 = vunpack.c.l.b16 %v3416
      %v3435 = vunpack.c.l.b16 %v3417
      %v3436 = vunpack.c.l.b16 %v3418
      %v3437 = vunpack.c.l.b16 %v3419
      %v3438 = vunpack.c.l.b16 %v3420
      %v3439 = vunpack.c.l.b16 %v3421
      %v3440 = vpack.c.b16 %v3432, %v3431
      %v3441 = vpack.c.b16 %v3434, %v3433
      %v3442 = vpack.c.b16 %v3436, %v3435
      %v3443 = vpack.c.b16 %v3438, %v3437
      %v3444 = vpack.c.b16 %v3439, %v3439
      %vm3449 = vcmask 588800
      %v3451 = vsel %vm3449, %v3397, 0
      %v3454 = vsel %vm3449, %v3398, 0
      %v3457 = vsel %vm3449, %v3399, 0
      %v3460 = vsel %vm3449, %v3400, 0
      %v3463 = vsel %vm3449, %v3401, 0
      %v3466 = vsel %vm3449, %v3402, 0
      %v3469 = vsel %vm3449, %v3403, 0
      %v3472 = vsel %vm3449, %v3404, 0
      %v3475 = vsel %vm3449, %v3405, 0
      %v3478 = vsel %vm3449, %v3406, 0
      %v3481 = vsel %vm3449, %v3407, 0
      %v3484 = vsel %vm3449, %v3408, 0
      %v3487 = vsel %vm3449, %v3409, 0
      %v3490 = vsel %vm3449, %v3410, 0
      %v3493 = vsel %vm3449, %v3411, 0
      %v3496 = vsel %vm3449, %v3412, 0
      %vm3498 = vcmask 1043456
      %v3500 = vsel %vm3498, %v3444, 0
      %3502 = vmatprep.subr.bf16.mxu0 0
      %3503 = vmatpush1.bf16.msra.mxu0 %v3440
      %3504 = vmatprep.subr.bf16.mxu0 0
      %3505 = vmatpush1.bf16.msra.mxu0 %v3441
      %3506 = vmatprep.subr.bf16.mxu0 0
      %3507 = vmatpush1.bf16.msra.mxu0 %v3442
      %3508 = vmatprep.subr.bf16.mxu0 0
      %3509 = vmatpush1.bf16.msra.mxu0 %v3443
      %3510 = vmatprep.subr.bf16.mxu0 0
      %3511 = vmatpush1.bf16.msra.mxu0 %v3500
      %3512 = vmatprep.subr.bf16.mxu0 0
      %3513 = vmatpush1.bf16.msra.mxu0 0
      %3514 = vmatprep.subr.bf16.mxu0 0
      %3515 = vmatpush1.bf16.msra.mxu0 0
      %3516 = vmatprep.subr.bf16.mxu0 0
      %3517 = vmatpush1.bf16.msra.mxu0 0
      %3518 = vmatprep.subr.bf16.mxu0 0
      %3519 = vmatpush1.bf16.msra.mxu0 0
      %3520 = vmatprep.subr.bf16.mxu0 0
      %3521 = vmatpush1.bf16.msra.mxu0 0
      %3522 = vmatprep.subr.bf16.mxu0 0
      %3523 = vmatpush1.bf16.msra.mxu0 0
      %3524 = vmatprep.subr.bf16.mxu0 0
      %3525 = vmatpush1.bf16.msra.mxu0 0
      %3526 = vmatprep.subr.bf16.mxu0 0
      %3527 = vmatpush1.bf16.msra.mxu0 0
      %3528 = vmatprep.subr.bf16.mxu0 0
      %3529 = vmatpush1.bf16.msra.mxu0 0
      %3530 = vmatprep.subr.bf16.mxu0 0
      %3531 = vmatpush1.bf16.msra.mxu0 0
      %3532 = vmatprep.subr.bf16.mxu0 0
      %3533 = vmatpush1.bf16.msra.mxu0 0
      %3534 = vmatprep.mubr.bf16.mxu0 0
      %3535 = vmatmul.mubr.bf16.gmra.mrb[0].mxu0 %v3451
      %v3536 = vpop.f32.mrb[0].mxu0
      %v3537 = vadd.f32 0.0, %v3536
      %v3538 = vpop.f32.mrb[0].mxu0
      %v3539 = vpop.f32.mrb[0].mxu0
      %v3540 = vadd.f32 0.0, %v3539
      %v3541 = vpop.f32.mrb[0].mxu0
      %3542 = vmatprep.mubr.bf16.mxu0 0
      %3543 = vmatmul.mubr.bf16.gmra.mrb[0].mxu0 %v3454
      %v3544 = vpop.f32.mrb[0].mxu0
      %v3545 = vadd.f32 0.0, %v3544
      %v3546 = vpop.f32.mrb[0].mxu0
      %v3547 = vpop.f32.mrb[0].mxu0
      %v3548 = vadd.f32 0.0, %v3547
      %v3549 = vpop.f32.mrb[0].mxu0
      %3550 = vmatprep.mubr.bf16.mxu0 0
      %3551 = vmatmul.mubr.bf16.gmra.mrb[0].mxu0 %v3457
      %v3552 = vpop.f32.mrb[0].mxu0
      %v3553 = vadd.f32 0.0, %v3552
      %v3554 = vpop.f32.mrb[0].mxu0
      %v3555 = vpop.f32.mrb[0].mxu0
      %v3556 = vadd.f32 0.0, %v3555
      %v3557 = vpop.f32.mrb[0].mxu0
      %3558 = vmatprep.mubr.bf16.mxu0 0
      %3559 = vmatmul.mubr.bf16.gmra.mrb[0].mxu0 %v3460
      %v3560 = vpop.f32.mrb[0].mxu0
      %v3561 = vadd.f32 0.0, %v3560
      %v3562 = vpop.f32.mrb[0].mxu0
      %v3563 = vpop.f32.mrb[0].mxu0
      %v3564 = vadd.f32 0.0, %v3563
      %v3565 = vpop.f32.mrb[0].mxu0
      %3566 = vmatprep.mubr.bf16.mxu0 0
      %3567 = vmatmul.mubr.bf16.gmra.mrb[0].mxu0 %v3463
      %v3568 = vpop.f32.mrb[0].mxu0
      %v3569 = vadd.f32 0.0, %v3568
      %v3570 = vpop.f32.mrb[0].mxu0
      %v3571 = vpop.f32.mrb[0].mxu0
      %v3572 = vadd.f32 0.0, %v3571
      %v3573 = vpop.f32.mrb[0].mxu0
      %3574 = vmatprep.mubr.bf16.mxu0 0
      %3575 = vmatmul.mubr.bf16.gmra.mrb[0].mxu0 %v3466
      %v3576 = vpop.f32.mrb[0].mxu0
      %v3577 = vadd.f32 0.0, %v3576
      %v3578 = vpop.f32.mrb[0].mxu0
      %v3579 = vpop.f32.mrb[0].mxu0
      %v3580 = vadd.f32 0.0, %v3579
      %v3581 = vpop.f32.mrb[0].mxu0
      %3582 = vmatprep.mubr.bf16.mxu0 0
      %3583 = vmatmul.mubr.bf16.gmra.mrb[0].mxu0 %v3469
      %v3584 = vpop.f32.mrb[0].mxu0
      %v3585 = vadd.f32 0.0, %v3584
      %v3586 = vpop.f32.mrb[0].mxu0
      %v3587 = vpop.f32.mrb[0].mxu0
      %v3588 = vadd.f32 0.0, %v3587
      %v3589 = vpop.f32.mrb[0].mxu0
      %3590 = vmatprep.mubr.bf16.mxu0 0
      %3591 = vmatmul.mubr.bf16.gmra.mrb[0].mxu0 %v3472
      %v3592 = vpop.f32.mrb[0].mxu0
      %v3593 = vadd.f32 0.0, %v3592
      %v3594 = vpop.f32.mrb[0].mxu0
      %v3595 = vpop.f32.mrb[0].mxu0
      %v3596 = vadd.f32 0.0, %v3595
      %v3597 = vpop.f32.mrb[0].mxu0
      %3598 = vmatprep.mubr.bf16.mxu0 0
      %3599 = vmatmul.mubr.bf16.gmra.mrb[0].mxu0 %v3475
      %v3600 = vpop.f32.mrb[0].mxu0
      %v3601 = vadd.f32 0.0, %v3600
      %v3602 = vpop.f32.mrb[0].mxu0
      %v3603 = vpop.f32.mrb[0].mxu0
      %v3604 = vadd.f32 0.0, %v3603
      %v3605 = vpop.f32.mrb[0].mxu0
      %3606 = vmatprep.mubr.bf16.mxu0 0
      %3607 = vmatmul.mubr.bf16.gmra.mrb[0].mxu0 %v3478
      %v3608 = vpop.f32.mrb[0].mxu0
      %v3609 = vadd.f32 0.0, %v3608
      %v3610 = vpop.f32.mrb[0].mxu0
      %v3611 = vpop.f32.mrb[0].mxu0
      %v3612 = vadd.f32 0.0, %v3611
      %v3613 = vpop.f32.mrb[0].mxu0
      %3614 = vmatprep.mubr.bf16.mxu0 0
      %3615 = vmatmul.mubr.bf16.gmra.mrb[0].mxu0 %v3481
      %v3616 = vpop.f32.mrb[0].mxu0
      %v3617 = vadd.f32 0.0, %v3616
      %v3618 = vpop.f32.mrb[0].mxu0
      %v3619 = vpop.f32.mrb[0].mxu0
      %v3620 = vadd.f32 0.0, %v3619
      %v3621 = vpop.f32.mrb[0].mxu0
      %3622 = vmatprep.mubr.bf16.mxu0 0
      %3623 = vmatmul.mubr.bf16.gmra.mrb[0].mxu0 %v3484
      %v3624 = vpop.f32.mrb[0].mxu0
      %v3625 = vadd.f32 0.0, %v3624
      %v3626 = vpop.f32.mrb[0].mxu0
      %v3627 = vpop.f32.mrb[0].mxu0
      %v3628 = vadd.f32 0.0, %v3627
      %v3629 = vpop.f32.mrb[0].mxu0
      %3630 = vmatprep.mubr.bf16.mxu0 0
      %3631 = vmatmul.mubr.bf16.gmra.mrb[0].mxu0 %v3487
      %v3632 = vpop.f32.mrb[0].mxu0
      %v3633 = vadd.f32 0.0, %v3632
      %v3634 = vpop.f32.mrb[0].mxu0
      %v3635 = vpop.f32.mrb[0].mxu0
      %v3636 = vadd.f32 0.0, %v3635
      %v3637 = vpop.f32.mrb[0].mxu0
      %3638 = vmatprep.mubr.bf16.mxu0 0
      %3639 = vmatmul.mubr.bf16.gmra.mrb[0].mxu0 %v3490
      %v3640 = vpop.f32.mrb[0].mxu0
      %v3641 = vadd.f32 0.0, %v3640
      %v3642 = vpop.f32.mrb[0].mxu0
      %v3643 = vpop.f32.mrb[0].mxu0
      %v3644 = vadd.f32 0.0, %v3643
      %v3645 = vpop.f32.mrb[0].mxu0
      %3646 = vmatprep.mubr.bf16.mxu0 0
      %3647 = vmatmul.mubr.bf16.gmra.mrb[0].mxu0 %v3493
      %v3648 = vpop.f32.mrb[0].mxu0
      %v3649 = vadd.f32 0.0, %v3648
      %v3650 = vpop.f32.mrb[0].mxu0
      %v3651 = vpop.f32.mrb[0].mxu0
      %v3652 = vadd.f32 0.0, %v3651
      %v3653 = vpop.f32.mrb[0].mxu0
      %3654 = vmatprep.mubr.bf16.mxu0 0
      %3655 = vmatmul.mubr.bf16.gmra.mrb[0].mxu0 %v3496
      %v3656 = vpop.f32.mrb[0].mxu0
      %v3657 = vadd.f32 0.0, %v3656
      %v3658 = vpop.f32.mrb[0].mxu0
      %v3659 = vpop.f32.mrb[0].mxu0
      %v3660 = vadd.f32 0.0, %v3659
      %v3661 = vpop.f32.mrb[0].mxu0
      %3662 = vdwg.mxu0
      %v3663 = vld [vmem:[%s264] sm:$0x1]
      %v3665 = vlaneseq
      %v3666 = vshrl.u32 %v3665, 7
      %v3667 = vsub.s32 0, %v3666
      %v3668 = vrot.slane %v3663, %v3667
      %v3670 = vmul.f32 %v3537, %v3668
      %v3671 = vmul.f32 %v3540, %v3668
      %v3672 = vmul.f32 %v3545, %v3668
      %v3673 = vmul.f32 %v3548, %v3668
      %v3674 = vmul.f32 %v3553, %v3668
      %v3675 = vmul.f32 %v3556, %v3668
      %v3676 = vmul.f32 %v3561, %v3668
      %v3677 = vmul.f32 %v3564, %v3668
      %v3678 = vmul.f32 %v3569, %v3668
      %v3679 = vmul.f32 %v3572, %v3668
      %v3680 = vmul.f32 %v3577, %v3668
      %v3681 = vmul.f32 %v3580, %v3668
      %v3682 = vmul.f32 %v3585, %v3668
      %v3683 = vmul.f32 %v3588, %v3668
      %v3684 = vmul.f32 %v3593, %v3668
      %v3685 = vmul.f32 %v3596, %v3668
      %v3686 = vmul.f32 %v3601, %v3668
      %v3687 = vmul.f32 %v3604, %v3668
      %v3688 = vmul.f32 %v3609, %v3668
      %v3689 = vmul.f32 %v3612, %v3668
      %v3690 = vmul.f32 %v3617, %v3668
      %v3691 = vmul.f32 %v3620, %v3668
      %v3692 = vmul.f32 %v3625, %v3668
      %v3693 = vmul.f32 %v3628, %v3668
      %v3694 = vmul.f32 %v3633, %v3668
      %v3695 = vmul.f32 %v3636, %v3668
      %v3696 = vmul.f32 %v3641, %v3668
      %v3697 = vmul.f32 %v3644, %v3668
      %v3698 = vmul.f32 %v3649, %v3668
      %v3699 = vmul.f32 %v3652, %v3668
      %v3700 = vmul.f32 %v3657, %v3668
      %v3701 = vmul.f32 %v3660, %v3668
      %v3702 = vld [vmem:[%s267] sm:$0x1]
      %v3704 = vlaneseq
      %v3705 = vshrl.u32 %v3704, 7
      %v3706 = vsub.s32 0, %v3705
      %v3707 = vrot.slane %v3702, %v3706
      %v3709 = vadd.f32 %v3670, %v3707
      %v3710 = vadd.f32 %v3671, %v3707
      %v3711 = vadd.f32 %v3672, %v3707
      %v3712 = vadd.f32 %v3673, %v3707
      %v3713 = vadd.f32 %v3674, %v3707
      %v3714 = vadd.f32 %v3675, %v3707
      %v3715 = vadd.f32 %v3676, %v3707
      %v3716 = vadd.f32 %v3677, %v3707
      %v3717 = vadd.f32 %v3678, %v3707
      %v3718 = vadd.f32 %v3679, %v3707
      %v3719 = vadd.f32 %v3680, %v3707
      %v3720 = vadd.f32 %v3681, %v3707
      %v3721 = vadd.f32 %v3682, %v3707
      %v3722 = vadd.f32 %v3683, %v3707
      %v3723 = vadd.f32 %v3684, %v3707
      %v3724 = vadd.f32 %v3685, %v3707
      %v3725 = vadd.f32 %v3686, %v3707
      %v3726 = vadd.f32 %v3687, %v3707
      %v3727 = vadd.f32 %v3688, %v3707
      %v3728 = vadd.f32 %v3689, %v3707
      %v3729 = vadd.f32 %v3690, %v3707
      %v3730 = vadd.f32 %v3691, %v3707
      %v3731 = vadd.f32 %v3692, %v3707
      %v3732 = vadd.f32 %v3693, %v3707
      %v3733 = vadd.f32 %v3694, %v3707
      %v3734 = vadd.f32 %v3695, %v3707
      %v3735 = vadd.f32 %v3696, %v3707
      %v3736 = vadd.f32 %v3697, %v3707
      %v3737 = vadd.f32 %v3698, %v3707
      %v3738 = vadd.f32 %v3699, %v3707
      %v3739 = vadd.f32 %v3700, %v3707
      %v3740 = vadd.f32 %v3701, %v3707
      %v3741 = vmax.f32 %v3709, 0.0
      %v3742 = vmax.f32 %v3710, 0.0
      %v3743 = vmax.f32 %v3711, 0.0
      %v3744 = vmax.f32 %v3712, 0.0
      %v3745 = vmax.f32 %v3713, 0.0
      %v3746 = vmax.f32 %v3714, 0.0
      %v3747 = vmax.f32 %v3715, 0.0
      %v3748 = vmax.f32 %v3716, 0.0
      %v3749 = vmax.f32 %v3717, 0.0
      %v3750 = vmax.f32 %v3718, 0.0
      %v3751 = vmax.f32 %v3719, 0.0
      %v3752 = vmax.f32 %v3720, 0.0
      %v3753 = vmax.f32 %v3721, 0.0
      %v3754 = vmax.f32 %v3722, 0.0
      %v3755 = vmax.f32 %v3723, 0.0
      %v3756 = vmax.f32 %v3724, 0.0
      %v3757 = vmax.f32 %v3725, 0.0
      %v3758 = vmax.f32 %v3726, 0.0
      %v3759 = vmax.f32 %v3727, 0.0
      %v3760 = vmax.f32 %v3728, 0.0
      %v3761 = vmax.f32 %v3729, 0.0
      %v3762 = vmax.f32 %v3730, 0.0
      %v3763 = vmax.f32 %v3731, 0.0
      %v3764 = vmax.f32 %v3732, 0.0
      %v3765 = vmax.f32 %v3733, 0.0
      %v3766 = vmax.f32 %v3734, 0.0
      %v3767 = vmax.f32 %v3735, 0.0
      %v3768 = vmax.f32 %v3736, 0.0
      %v3769 = vmax.f32 %v3737, 0.0
      %v3770 = vmax.f32 %v3738, 0.0
      %v3771 = vmax.f32 %v3739, 0.0
      %v3772 = vmax.f32 %v3740, 0.0
      %3773 = vst [vmem:[%s279] sm:$0xff] %v3741
      %3774 = vst [vmem:[%s279 + $0x8] sm:$0xff] %v3742
      %3775 = vst [vmem:[%s279 + $0x10] sm:$0xff] %v3743
      %3776 = vst [vmem:[%s279 + $0x18] sm:$0xff] %v3744
      %3777 = vst [vmem:[%s279 + $0x20] sm:$0xff] %v3745
      %3778 = vst [vmem:[%s279 + $0x28] sm:$0xff] %v3746
      %3779 = vst [vmem:[%s279 + $0x30] sm:$0xff] %v3747
      %3780 = vst [vmem:[%s279 + $0x38] sm:$0xff] %v3748
      %3781 = vst [vmem:[%s279 + $0x40] sm:$0xff] %v3749
      %3782 = vst [vmem:[%s279 + $0x48] sm:$0xff] %v3750
      %3783 = vst [vmem:[%s279 + $0x50] sm:$0xff] %v3751
      %3784 = vst [vmem:[%s279 + $0x58] sm:$0xff] %v3752
      %3785 = vst [vmem:[%s279 + $0x60] sm:$0xff] %v3753
      %3786 = vst [vmem:[%s279 + $0x68] sm:$0xff] %v3754
      %3787 = vst [vmem:[%s279 + $0x70] sm:$0xff] %v3755
      %3788 = vst [vmem:[%s279 + $0x78] sm:$0xff] %v3756
      %3789 = vst [vmem:[%s279 + $0x80] sm:$0xff] %v3757
      %3790 = vst [vmem:[%s279 + $0x88] sm:$0xff] %v3758
      %3791 = vst [vmem:[%s279 + $0x90] sm:$0xff] %v3759
      %3792 = vst [vmem:[%s279 + $0x98] sm:$0xff] %v3760
      %3793 = vst [vmem:[%s279 + $0xa0] sm:$0xff] %v3761
      %3794 = vst [vmem:[%s279 + $0xa8] sm:$0xff] %v3762
      %3795 = vst [vmem:[%s279 + $0xb0] sm:$0xff] %v3763
      %3796 = vst [vmem:[%s279 + $0xb8] sm:$0xff] %v3764
      %3797 = vst [vmem:[%s279 + $0xc0] sm:$0xff] %v3765
      %3798 = vst [vmem:[%s279 + $0xc8] sm:$0xff] %v3766
      %3799 = vst [vmem:[%s279 + $0xd0] sm:$0xff] %v3767
      %3800 = vst [vmem:[%s279 + $0xd8] sm:$0xff] %v3768
      %3801 = vst [vmem:[%s279 + $0xe0] sm:$0xff] %v3769
      %3802 = vst [vmem:[%s279 + $0xe8] sm:$0xff] %v3770
      %3803 = vst [vmem:[%s279 + $0xf0] sm:$0xff] %v3771
      %3804 = vst [vmem:[%s279 + $0xf8] sm:$0xff] %v3772
      %s3805 = smul.u32 32, %s21
      %p3806 = scmp.lt.s32.totalorder %s20, 1
      %s3807 = scalar_select %p3806, %s20, 1
      %p3808 = scmp.lt.s32.totalorder %s3805, 31
      %s3809 = scalar_select %p3808, %s3805, 31
      %p3810 = scmp.lt.s32.totalorder %s22, 0
      %s3811 = scalar_select %p3810, %s22, 0
      %s3812 = sadd.s32 %s3811, %s3809
      %s3813 = smul.addr %s3807, 32
      %s3814 = sadd.s32 %s3812, %s3813
      %s3815 = smul.addr %s3814, 8
      %s3816 = scalar_lea.vmem %s4, %s3815
      // Predicated region
      $region37: #{conv2d_pallas.1} parent=35 // pred_check
        %p3817 = pneg %p160
      $region38: #{conv2d_pallas.1} parent=35 // pred_check_branch
        %3819 = sbr.rel (%p3817) target = $region40
      $region39: #{conv2d_pallas.1} parent=35 // pred_region
        %s3820 = smul.u32 32, %s21
      $region40: #{conv2d_pallas.1} parent=35 // pred_fallthru
        _
    $region36: #{conv2d_pallas.1} parent=5 // pred_fallthru
      _
    %p3821 = scmp.le.s32.totalorder 2, %s10
    // Predicated region
    $region41: #{conv2d_pallas.1} parent=5 // pred_check
      %p3822 = pneg %p3821
    $region42: #{conv2d_pallas.1} parent=5 // pred_check_branch
      %3824 = sbr.rel (%p3822) target = $region44
    $region43: #{conv2d_pallas.1} parent=5 // pred_region
      %s3825 = ssub.s32 %s10, 2
      // Predicated region
      $region45: #{conv2d_pallas.1} parent=43 // pred_check
        %p3826 = pneg %p166
      $region46: #{conv2d_pallas.1} parent=43 // pred_check_branch
        %3828 = sbr.rel (%p3826) target = $region48
      $region47: #{conv2d_pallas.1} parent=43 // pred_region
        %s3829 = smul.u32 32, %s24
        %p3830 = scmp.lt.s32.totalorder %s23, 1
        %s3831 = scalar_select %p3830, %s23, 1
        %p3832 = scmp.lt.s32.totalorder %s3829, 31
        %s3833 = scalar_select %p3832, %s3829, 31
        %p3834 = scmp.lt.s32.totalorder %s25, 0
        %s3835 = scalar_select %p3834, %s25, 0
        %s3836 = sadd.s32 %s3835, %s3833
        %s3837 = smul.addr %s3831, 32
        %s3838 = sadd.s32 %s3836, %s3837
        %s3839 = smul.addr %s3838, 8
        %s3840 = scalar_lea.vmem %s4, %s3839
      $region48: #{conv2d_pallas.1} parent=43 // pred_fallthru
        _
    $region44: #{conv2d_pallas.1} parent=5 // pred_fallthru
      _
  $region6: #{conv2d_pallas.1} parent=0 // loop_footer
    %s14 = sadd.s32 1, %s10
  $region7: #{conv2d_pallas.1} parent=0 // loop_footer_branch
    %9 = sbr.rel target = $region3
  $region8: #{conv2d_pallas.1} parent=0 // loop_exit
    _

</llo_original>
